<compile_context>
chip_gen: v7x
topology: tpu7x:2x2x1
jax: 0.10.0
libtpu: 0.0.40
codegen_flags: <defaults>
</compile_context>

<pallas_src>
import jax
import jax.numpy as jnp
from jax.experimental import pallas as pl
from jax.experimental.pallas import tpu as pltpu


# ---------------------------------------------------------------------------
# Kernel (feature-major: batch is the lane axis)
# ---------------------------------------------------------------------------
def resnet_kernel(xt_ref,          # (K, TB)  f32   packed [x; t], K = in_dim + time_dim
                  wint_ref,        # (H, K)   f32   W_in^T
                  bias_ref,        # (H, 1+2*NB) f32  cols: [b_in, b1_0, b2_0, ..., b1_{NB-1}, b2_{NB-1}]
                  w1t_ref,         # (NB, H, H) bf16  W1^T per block
                  w2t_ref,         # (NB, H, H) bf16  W2^T per block
                  wot_ref,         # (out_dim, H) bf16  W_out^T
                  bo_ref,          # (out_dim, 1) f32
                  o_ref):          # (out_dim, TB) f32
    f32 = jnp.float32
    bf16 = jnp.bfloat16

    def swish(z):                  # z f32; exp on EUP, approx reciprocal on EUP
        return z * pl.reciprocal(1.0 + jnp.exp(-z), approx=True)

    xt = xt_ref[...]               # (K, TB) f32
    wint = wint_ref[...]           # (H, K)  f32

    # Input projection: (W_in^T @ [x;t]) + b_in as K broadcast FMAs on the VPU
    # (K is tiny; avoids a K-padded MXU pass and any lane-sparse tensor).
    z = bias_ref[:, 0:1]                                   # (H, 1)
    for c in range(xt.shape[0]):                           # static unroll over K
        z = z + wint[:, c:c + 1] * xt[c:c + 1, :]          # (H,1)*(1,TB) -> (H,TB)
    h = swish(z)                                           # (H, TB) f32 residual stream

    # Residual blocks: bf16 MXU matmuls (weights as LHS so TB fills the wide
    # MXU axis), f32 accumulation, f32 residual add / epilogue.
    num_blocks = w1t_ref.shape[0]
    for i in range(num_blocks):                            # static unroll
        h16 = h.astype(bf16)
        z1 = jnp.dot(w1t_ref[i], h16,
                     preferred_element_type=f32) + bias_ref[:, 1 + 2 * i:2 + 2 * i]
        a1 = swish(z1).astype(bf16)
        z2 = jnp.dot(w2t_ref[i], a1,
                     preferred_element_type=f32) + bias_ref[:, 2 + 2 * i:3 + 2 * i]
        h = swish(h + z2)

    out = jnp.dot(wot_ref[...], h.astype(bf16),
                  preferred_element_type=f32) + bo_ref[...]
    o_ref[...] = out.astype(o_ref.dtype)


# ---------------------------------------------------------------------------
# Parameters (PyTorch nn.Linear-style init), stored (in_features, out_features)
# ---------------------------------------------------------------------------
def init_params(key, input_dim=2, output_dim=None, time_dim=1,
                hidden_dim=128, num_blocks=4):
    out_dim = output_dim if output_dim is not None else input_dim

    def linear(k, fan_in, fan_out):
        kw, kb = jax.random.split(k)
        bound = 1.0 / (fan_in ** 0.5)
        w = jax.random.uniform(kw, (fan_in, fan_out), jnp.float32, -bound, bound)
        b = jax.random.uniform(kb, (1, fan_out), jnp.float32, -bound, bound)
        return w, b

    keys = jax.random.split(key, 2 + 2 * num_blocks)
    w_in, b_in = linear(keys[0], input_dim + time_dim, hidden_dim)
    w1s, b1s, w2s, b2s = [], [], [], []
    for i in range(num_blocks):
        w1, b1 = linear(keys[1 + 2 * i], hidden_dim, hidden_dim)
        w2, b2 = linear(keys[2 + 2 * i], hidden_dim, hidden_dim)
        w1s.append(w1); b1s.append(b1); w2s.append(w2); b2s.append(b2)
    w_out, b_out = linear(keys[-1], hidden_dim, out_dim)

    return {
        "w_in": w_in, "b_in": b_in,
        "w1s": jnp.stack(w1s), "b1s": jnp.stack(b1s),
        "w2s": jnp.stack(w2s), "b2s": jnp.stack(b2s),
        "w_out": w_out, "b_out": b_out,
    }


# ---------------------------------------------------------------------------
# Shared input preparation (mirrors the PyTorch reshape / t.expand logic)
# ---------------------------------------------------------------------------
def _prepare_inputs(x, t, input_dim, time_dim):
    sz = x.shape
    x2 = x.reshape(-1, input_dim).astype(jnp.float32)
    n = x2.shape[0]
    if t is None:
        raise ValueError("t=None path not supported (input_proj expects "
                         "input_dim + time_dim features)")
    tf = jnp.asarray(t, jnp.float32).reshape(-1, time_dim)
    if tf.shape[0] == 1:
        t2 = jnp.broadcast_to(tf, (n, time_dim))
    elif tf.shape[0] == n:
        t2 = tf
    else:
        raise ValueError(f"t with {tf.shape[0]} rows cannot expand to {n} rows")
    return x2, t2, sz


def _round_up(v, m):
    return ((v + m - 1) // m) * m


# ---------------------------------------------------------------------------
# Pallas forward
# ---------------------------------------------------------------------------
def resnet_forward(x, t, params, *, input_dim=2, time_dim=1, tile_b=2048):
    x2, t2, sz = _prepare_inputs(x, t, input_dim, time_dim)
    n = x2.shape[0]

    hidden = params["w_in"].shape[1]
    out_dim = params["w_out"].shape[1]
    num_blocks = params["w1s"].shape[0]
    K = input_dim + time_dim
    nb2 = 1 + 2 * num_blocks

    # Feature-major packed input: one (K, N) DMA stream, batch on the lane axis.
    xt = jnp.concatenate([x2, t2], axis=1).T               # (K, n) f32

    # Batch tile = lane dim now -> multiple of 128.  Default 2048 (per-step
    # overhead amortized); when one tile would cover a >=512-row batch, split
    # into two steps so the "parallel" grid axis can feed both v7x TensorCores.
    n128 = _round_up(n, 128)
    tb = max(128, (min(int(tile_b), n128) // 128) * 128)
    if n128 // tb < 2 and n128 >= 512:
        tb = _round_up((n128 + 1) // 2, 128)
    n_pad = _round_up(n, tb)
    if n_pad != n:
        xt = jnp.pad(xt, ((0, 0), (0, n_pad - n)))
    grid = (n_pad // tb,)

    # Weight precision: input projection stays f32 (VPU FMAs); hidden / output
    # matmul weights go bf16 for the MXU fast path.  All weights transposed so
    # the kernel computes W^T @ h with h feature-major.
    wint = params["w_in"].T.astype(jnp.float32)            # (H, K)
    bias_cols = [params["b_in"].reshape(hidden)]
    for i in range(num_blocks):
        bias_cols.append(params["b1s"][i].reshape(hidden))
        bias_cols.append(params["b2s"][i].reshape(hidden))
    biases = jnp.stack(bias_cols, axis=1).astype(jnp.float32)   # (H, 1+2*NB)
    w1t = jnp.transpose(params["w1s"], (0, 2, 1)).astype(jnp.bfloat16)
    w2t = jnp.transpose(params["w2s"], (0, 2, 1)).astype(jnp.bfloat16)
    wot = params["w_out"].T.astype(jnp.bfloat16)            # (out_dim, H)
    bo = params["b_out"].reshape(out_dim, 1).astype(jnp.float32)

    in_specs = [
        pl.BlockSpec((K, tb), lambda i: (0, i)),                          # packed [x;t] tile
        pl.BlockSpec((hidden, K), lambda i: (0, 0)),                      # W_in^T  (resident)
        pl.BlockSpec((hidden, nb2), lambda i: (0, 0)),                    # biases  (resident)
        pl.BlockSpec((num_blocks, hidden, hidden), lambda i: (0, 0, 0)),  # W1^T    (resident)
        pl.BlockSpec((num_blocks, hidden, hidden), lambda i: (0, 0, 0)),  # W2^T    (resident)
        pl.BlockSpec((out_dim, hidden), lambda i: (0, 0)),                # W_out^T (resident)
        pl.BlockSpec((out_dim, 1), lambda i: (0, 0)),                     # b_out
    ]
    out_spec = pl.BlockSpec((out_dim, tb), lambda i: (0, i))

    # Advisory cost estimate for the XLA scheduler.
    flops = 2 * n_pad * (2 * num_blocks * hidden * hidden
                         + hidden * out_dim + K * hidden)
    transcendentals = n_pad * hidden * (1 + 2 * num_blocks)   # one exp per swish elem
    weight_bytes = (2 * num_blocks * hidden * hidden + out_dim * hidden) * 2 \
        + hidden * K * 4 + (hidden * nb2 + out_dim) * 4
    io_bytes = n_pad * (K + out_dim) * 4
    cost = pl.CostEstimate(flops=flops, transcendentals=transcendentals,
                           bytes_accessed=weight_bytes + io_bytes)

    out = pl.pallas_call(
        resnet_kernel,
        out_shape=jax.ShapeDtypeStruct((out_dim, n_pad), jnp.float32),
        grid=grid,
        in_specs=in_specs,
        out_specs=out_spec,
        compiler_params=pltpu.CompilerParams(
            dimension_semantics=("parallel",),        # megacore sharding on v7x
            vmem_limit_bytes=32 * 1024 * 1024,        # ample: lane-dense blocks are small
        ),
        cost_estimate=cost,
    )(xt, wint, biases, w1t, w2t, wot, bo)

    out = out[:, :n].T                                       # back to (n, out_dim)
    if out_dim == input_dim:
        return out.reshape(sz)
    return out.reshape(sz[0], out_dim)


# ---------------------------------------------------------------------------
# Pure-JAX reference (same precision policy: bf16 matmul operands, f32 acc,
# f32 residual stream; exact sigmoid — kernel uses an approx EUP reciprocal)
# ---------------------------------------------------------------------------
def reference_forward(x, t, params, *, input_dim=2, time_dim=1):
    x2, t2, sz = _prepare_inputs(x, t, input_dim, time_dim)
    out_dim = params["w_out"].shape[1]
    num_blocks = params["w1s"].shape[0]
    f32, bf16 = jnp.float32, jnp.bfloat16

    def swish(z):
        return z * (1.0 / (1.0 + jnp.exp(-z)))

    h_in = jnp.concatenate([x2, t2], axis=1)                              # (n, K)
    h = swish(h_in @ params["w_in"].astype(f32) + params["b_in"])

    w1s = params["w1s"].astype(bf16)
    w2s = params["w2s"].astype(bf16)
    for i in range(num_blocks):
        z1 = jnp.dot(h.astype(bf16), w1s[i],
                     preferred_element_type=f32) + params["b1s"][i]
        a1 = swish(z1).astype(bf16)
        z2 = jnp.dot(a1, w2s[i],
                     preferred_element_type=f32) + params["b2s"][i]
        h = swish(h + z2)

    out = jnp.dot(h.astype(bf16), params["w_out"].astype(bf16),
                  preferred_element_type=f32) + params["b_out"]
    if out_dim == input_dim:
        return out.reshape(sz)
    return out.reshape(sz[0], out_dim)


# ---------------------------------------------------------------------------
# Demo / self-test
# ---------------------------------------------------------------------------
if __name__ == "__main__":
    key = jax.random.PRNGKey(0)
    k_params, k_x, k_t = jax.random.split(key, 3)

    input_dim, time_dim, hidden_dim, num_blocks = 2, 1, 128, 4
    batch = 300          # not a multiple of the tile -> exercises lane padding

    params = init_params(k_params, input_dim=input_dim, time_dim=time_dim,
                         hidden_dim=hidden_dim, num_blocks=num_blocks)

    x = jax.random.normal(k_x, (batch, input_dim), jnp.float32)
    t = jax.random.normal(k_t, (batch,), jnp.float32)

    # Small tile to exercise a multi-step batch grid; production default is 2048.
    out = resnet_forward(x, t, params, input_dim=input_dim, time_dim=time_dim,
                         tile_b=256)
    out = jax.block_until_ready(out)

    ref = reference_forward(x, t, params, input_dim=input_dim, time_dim=time_dim)
    assert out.shape == x.shape, out.shape
    max_err = float(jnp.max(jnp.abs(out - ref)))
    # Tolerance covers bf16 matmul operands + the approx EUP reciprocal in swish.
    assert max_err < 5e-3, f"mismatch vs reference: max abs err {max_err}"

    print("KERNEL_OK")
</pallas_src>

<mosaic_0001>
module attributes {stable_mosaic.version = 11 : i64} {
  func.func @resnet_kernel(%arg0: i32, %arg1: memref<3x256xf32, #tpu.memory_space<vmem>>, %arg2: memref<128x3xf32, #tpu.memory_space<vmem>>, %arg3: memref<128x9xf32, #tpu.memory_space<vmem>>, %arg4: memref<4x128x128xbf16, #tpu.memory_space<vmem>>, %arg5: memref<4x128x128xbf16, #tpu.memory_space<vmem>>, %arg6: memref<2x128xbf16, #tpu.memory_space<vmem>>, %arg7: memref<2x1xf32, #tpu.memory_space<vmem>>, %arg8: memref<2x256xf32, #tpu.memory_space<vmem>>) attributes {dimension_semantics = [#tpu.dimension_semantics<parallel>], iteration_bounds = array<i64: 2>, scalar_prefetch = 0 : i64, scratch_operands = 0 : i64, tpu.core_type = #tpu.core_type<tc>, window_params = [{transform_indices = @transform_0, window_bounds = array<i64: 3, 256>}, {pipeline_mode = #tpu.pipeline_mode<synchronous>, transform_indices = @transform_1, window_bounds = array<i64: 128, 3>}, {pipeline_mode = #tpu.pipeline_mode<synchronous>, transform_indices = @transform_2, window_bounds = array<i64: 128, 9>}, {pipeline_mode = #tpu.pipeline_mode<synchronous>, transform_indices = @transform_3, window_bounds = array<i64: 4, 128, 128>}, {pipeline_mode = #tpu.pipeline_mode<synchronous>, transform_indices = @transform_4, window_bounds = array<i64: 4, 128, 128>}, {pipeline_mode = #tpu.pipeline_mode<synchronous>, transform_indices = @transform_5, window_bounds = array<i64: 2, 128>}, {pipeline_mode = #tpu.pipeline_mode<synchronous>, transform_indices = @transform_6, window_bounds = array<i64: 2, 1>}, {transform_indices = @transform_7, window_bounds = array<i64: 2, 256>}]} {
    %c0 = arith.constant 0 : index
    %c0_0 = arith.constant 0 : index
    %0 = vector.load %arg1[%c0, %c0_0] : memref<3x256xf32, #tpu.memory_space<vmem>>, vector<3x256xf32>
    %c0_1 = arith.constant 0 : index
    %c0_2 = arith.constant 0 : index
    %1 = vector.load %arg2[%c0_1, %c0_2] : memref<128x3xf32, #tpu.memory_space<vmem>>, vector<128x3xf32>
    %c0_3 = arith.constant 0 : index
    %c0_4 = arith.constant 0 : index
    %2 = vector.load %arg3[%c0_3, %c0_4] : memref<128x9xf32, #tpu.memory_space<vmem>>, vector<128x1xf32>
    %3 = vector.extract_strided_slice %1 {offsets = [0, 0], sizes = [128, 1], strides = [1, 1]} : vector<128x3xf32> to vector<128x1xf32>
    %4 = vector.extract_strided_slice %0 {offsets = [0, 0], sizes = [1, 256], strides = [1, 1]} : vector<3x256xf32> to vector<1x256xf32>
    %5 = vector.broadcast %3 : vector<128x1xf32> to vector<128x256xf32>
    %6 = vector.broadcast %4 : vector<1x256xf32> to vector<128x256xf32>
    %7 = arith.mulf %5, %6 : vector<128x256xf32>
    %8 = vector.broadcast %2 : vector<128x1xf32> to vector<128x256xf32>
    %9 = arith.addf %8, %7 : vector<128x256xf32>
    %10 = vector.extract_strided_slice %1 {offsets = [0, 1], sizes = [128, 1], strides = [1, 1]} : vector<128x3xf32> to vector<128x1xf32>
    %11 = vector.extract_strided_slice %0 {offsets = [1, 0], sizes = [1, 256], strides = [1, 1]} : vector<3x256xf32> to vector<1x256xf32>
    %12 = vector.broadcast %10 : vector<128x1xf32> to vector<128x256xf32>
    %13 = vector.broadcast %11 : vector<1x256xf32> to vector<128x256xf32>
    %14 = arith.mulf %12, %13 : vector<128x256xf32>
    %15 = arith.addf %9, %14 : vector<128x256xf32>
    %16 = vector.extract_strided_slice %1 {offsets = [0, 2], sizes = [128, 1], strides = [1, 1]} : vector<128x3xf32> to vector<128x1xf32>
    %17 = vector.extract_strided_slice %0 {offsets = [2, 0], sizes = [1, 256], strides = [1, 1]} : vector<3x256xf32> to vector<1x256xf32>
    %18 = vector.broadcast %16 : vector<128x1xf32> to vector<128x256xf32>
    %19 = vector.broadcast %17 : vector<1x256xf32> to vector<128x256xf32>
    %20 = arith.mulf %18, %19 : vector<128x256xf32>
    %21 = arith.addf %15, %20 : vector<128x256xf32>
    %cst = arith.constant 0.000000e+00 : f32
    %22 = vector.broadcast %cst : f32 to vector<128x256xf32>
    %23 = arith.subf %22, %21 : vector<128x256xf32>
    %24 = math.exp %23 : vector<128x256xf32>
    %cst_5 = arith.constant 1.000000e+00 : f32
    %25 = vector.broadcast %cst_5 : f32 to vector<128x256xf32>
    %26 = arith.addf %25, %24 : vector<128x256xf32>
    %27 = tpu.reciprocal %26 {approx = true} : vector<128x256xf32> -> vector<128x256xf32>
    %28 = arith.mulf %21, %27 : vector<128x256xf32>
    %29 = arith.truncf %28 : vector<128x256xf32> to vector<128x256xbf16>
    %c0_6 = arith.constant 0 : index
    %c0_7 = arith.constant 0 : index
    %c0_8 = arith.constant 0 : index
    %30 = vector.load %arg4[%c0_6, %c0_7, %c0_8] : memref<4x128x128xbf16, #tpu.memory_space<vmem>>, vector<1x128x128xbf16>
    %31 = vector.shape_cast %30 : vector<1x128x128xbf16> to vector<128x128xbf16>
    %cst_9 = arith.constant dense<0.000000e+00> : vector<128x256xf32>
    %32 = tpu.matmul %31, %29, %cst_9 {dimension_numbers = #tpu.dot_dimension_numbers<[1], [0], [0], [1], [0, 0, 1, 1], [], []>} : vector<128x128xbf16>, vector<128x256xbf16>, vector<128x256xf32> -> vector<128x256xf32>
    %c0_10 = arith.constant 0 : index
    %c1 = arith.constant 1 : index
    %33 = vector.load %arg3[%c0_10, %c1] : memref<128x9xf32, #tpu.memory_space<vmem>>, vector<128x1xf32>
    %34 = vector.broadcast %33 : vector<128x1xf32> to vector<128x256xf32>
    %35 = arith.addf %32, %34 : vector<128x256xf32>
    %cst_11 = arith.constant 0.000000e+00 : f32
    %36 = vector.broadcast %cst_11 : f32 to vector<128x256xf32>
    %37 = arith.subf %36, %35 : vector<128x256xf32>
    %38 = math.exp %37 : vector<128x256xf32>
    %cst_12 = arith.constant 1.000000e+00 : f32
    %39 = vector.broadcast %cst_12 : f32 to vector<128x256xf32>
    %40 = arith.addf %39, %38 : vector<128x256xf32>
    %41 = tpu.reciprocal %40 {approx = true} : vector<128x256xf32> -> vector<128x256xf32>
    %42 = arith.mulf %35, %41 : vector<128x256xf32>
    %43 = arith.truncf %42 : vector<128x256xf32> to vector<128x256xbf16>
    %c0_13 = arith.constant 0 : index
    %c0_14 = arith.constant 0 : index
    %c0_15 = arith.constant 0 : index
    %44 = vector.load %arg5[%c0_13, %c0_14, %c0_15] : memref<4x128x128xbf16, #tpu.memory_space<vmem>>, vector<1x128x128xbf16>
    %45 = vector.shape_cast %44 : vector<1x128x128xbf16> to vector<128x128xbf16>
    %cst_16 = arith.constant dense<0.000000e+00> : vector<128x256xf32>
    %46 = tpu.matmul %45, %43, %cst_16 {dimension_numbers = #tpu.dot_dimension_numbers<[1], [0], [0], [1], [0, 0, 1, 1], [], []>} : vector<128x128xbf16>, vector<128x256xbf16>, vector<128x256xf32> -> vector<128x256xf32>
    %c0_17 = arith.constant 0 : index
    %c2 = arith.constant 2 : index
    %47 = vector.load %arg3[%c0_17, %c2] : memref<128x9xf32, #tpu.memory_space<vmem>>, vector<128x1xf32>
    %48 = vector.broadcast %47 : vector<128x1xf32> to vector<128x256xf32>
    %49 = arith.addf %46, %48 : vector<128x256xf32>
    %50 = arith.addf %28, %49 : vector<128x256xf32>
    %cst_18 = arith.constant 0.000000e+00 : f32
    %51 = vector.broadcast %cst_18 : f32 to vector<128x256xf32>
    %52 = arith.subf %51, %50 : vector<128x256xf32>
    %53 = math.exp %52 : vector<128x256xf32>
    %cst_19 = arith.constant 1.000000e+00 : f32
    %54 = vector.broadcast %cst_19 : f32 to vector<128x256xf32>
    %55 = arith.addf %54, %53 : vector<128x256xf32>
    %56 = tpu.reciprocal %55 {approx = true} : vector<128x256xf32> -> vector<128x256xf32>
    %57 = arith.mulf %50, %56 : vector<128x256xf32>
    %58 = arith.truncf %57 : vector<128x256xf32> to vector<128x256xbf16>
    %c1_20 = arith.constant 1 : index
    %c0_21 = arith.constant 0 : index
    %c0_22 = arith.constant 0 : index
    %59 = vector.load %arg4[%c1_20, %c0_21, %c0_22] : memref<4x128x128xbf16, #tpu.memory_space<vmem>>, vector<1x128x128xbf16>
    %60 = vector.shape_cast %59 : vector<1x128x128xbf16> to vector<128x128xbf16>
    %cst_23 = arith.constant dense<0.000000e+00> : vector<128x256xf32>
    %61 = tpu.matmul %60, %58, %cst_23 {dimension_numbers = #tpu.dot_dimension_numbers<[1], [0], [0], [1], [0, 0, 1, 1], [], []>} : vector<128x128xbf16>, vector<128x256xbf16>, vector<128x256xf32> -> vector<128x256xf32>
    %c0_24 = arith.constant 0 : index
    %c3 = arith.constant 3 : index
    %62 = vector.load %arg3[%c0_24, %c3] : memref<128x9xf32, #tpu.memory_space<vmem>>, vector<128x1xf32>
    %63 = vector.broadcast %62 : vector<128x1xf32> to vector<128x256xf32>
    %64 = arith.addf %61, %63 : vector<128x256xf32>
    %cst_25 = arith.constant 0.000000e+00 : f32
    %65 = vector.broadcast %cst_25 : f32 to vector<128x256xf32>
    %66 = arith.subf %65, %64 : vector<128x256xf32>
    %67 = math.exp %66 : vector<128x256xf32>
    %cst_26 = arith.constant 1.000000e+00 : f32
    %68 = vector.broadcast %cst_26 : f32 to vector<128x256xf32>
    %69 = arith.addf %68, %67 : vector<128x256xf32>
    %70 = tpu.reciprocal %69 {approx = true} : vector<128x256xf32> -> vector<128x256xf32>
    %71 = arith.mulf %64, %70 : vector<128x256xf32>
    %72 = arith.truncf %71 : vector<128x256xf32> to vector<128x256xbf16>
    %c1_27 = arith.constant 1 : index
    %c0_28 = arith.constant 0 : index
    %c0_29 = arith.constant 0 : index
    %73 = vector.load %arg5[%c1_27, %c0_28, %c0_29] : memref<4x128x128xbf16, #tpu.memory_space<vmem>>, vector<1x128x128xbf16>
    %74 = vector.shape_cast %73 : vector<1x128x128xbf16> to vector<128x128xbf16>
    %cst_30 = arith.constant dense<0.000000e+00> : vector<128x256xf32>
    %75 = tpu.matmul %74, %72, %cst_30 {dimension_numbers = #tpu.dot_dimension_numbers<[1], [0], [0], [1], [0, 0, 1, 1], [], []>} : vector<128x128xbf16>, vector<128x256xbf16>, vector<128x256xf32> -> vector<128x256xf32>
    %c0_31 = arith.constant 0 : index
    %c4 = arith.constant 4 : index
    %76 = vector.load %arg3[%c0_31, %c4] : memref<128x9xf32, #tpu.memory_space<vmem>>, vector<128x1xf32>
    %77 = vector.broadcast %76 : vector<128x1xf32> to vector<128x256xf32>
    %78 = arith.addf %75, %77 : vector<128x256xf32>
    %79 = arith.addf %57, %78 : vector<128x256xf32>
    %cst_32 = arith.constant 0.000000e+00 : f32
    %80 = vector.broadcast %cst_32 : f32 to vector<128x256xf32>
    %81 = arith.subf %80, %79 : vector<128x256xf32>
    %82 = math.exp %81 : vector<128x256xf32>
    %cst_33 = arith.constant 1.000000e+00 : f32
    %83 = vector.broadcast %cst_33 : f32 to vector<128x256xf32>
    %84 = arith.addf %83, %82 : vector<128x256xf32>
    %85 = tpu.reciprocal %84 {approx = true} : vector<128x256xf32> -> vector<128x256xf32>
    %86 = arith.mulf %79, %85 : vector<128x256xf32>
    %87 = arith.truncf %86 : vector<128x256xf32> to vector<128x256xbf16>
    %c2_34 = arith.constant 2 : index
    %c0_35 = arith.constant 0 : index
    %c0_36 = arith.constant 0 : index
    %88 = vector.load %arg4[%c2_34, %c0_35, %c0_36] : memref<4x128x128xbf16, #tpu.memory_space<vmem>>, vector<1x128x128xbf16>
    %89 = vector.shape_cast %88 : vector<1x128x128xbf16> to vector<128x128xbf16>
    %cst_37 = arith.constant dense<0.000000e+00> : vector<128x256xf32>
    %90 = tpu.matmul %89, %87, %cst_37 {dimension_numbers = #tpu.dot_dimension_numbers<[1], [0], [0], [1], [0, 0, 1, 1], [], []>} : vector<128x128xbf16>, vector<128x256xbf16>, vector<128x256xf32> -> vector<128x256xf32>
    %c0_38 = arith.constant 0 : index
    %c5 = arith.constant 5 : index
    %91 = vector.load %arg3[%c0_38, %c5] : memref<128x9xf32, #tpu.memory_space<vmem>>, vector<128x1xf32>
    %92 = vector.broadcast %91 : vector<128x1xf32> to vector<128x256xf32>
    %93 = arith.addf %90, %92 : vector<128x256xf32>
    %cst_39 = arith.constant 0.000000e+00 : f32
    %94 = vector.broadcast %cst_39 : f32 to vector<128x256xf32>
    %95 = arith.subf %94, %93 : vector<128x256xf32>
    %96 = math.exp %95 : vector<128x256xf32>
    %cst_40 = arith.constant 1.000000e+00 : f32
    %97 = vector.broadcast %cst_40 : f32 to vector<128x256xf32>
    %98 = arith.addf %97, %96 : vector<128x256xf32>
    %99 = tpu.reciprocal %98 {approx = true} : vector<128x256xf32> -> vector<128x256xf32>
    %100 = arith.mulf %93, %99 : vector<128x256xf32>
    %101 = arith.truncf %100 : vector<128x256xf32> to vector<128x256xbf16>
    %c2_41 = arith.constant 2 : index
    %c0_42 = arith.constant 0 : index
    %c0_43 = arith.constant 0 : index
    %102 = vector.load %arg5[%c2_41, %c0_42, %c0_43] : memref<4x128x128xbf16, #tpu.memory_space<vmem>>, vector<1x128x128xbf16>
    %103 = vector.shape_cast %102 : vector<1x128x128xbf16> to vector<128x128xbf16>
    %cst_44 = arith.constant dense<0.000000e+00> : vector<128x256xf32>
    %104 = tpu.matmul %103, %101, %cst_44 {dimension_numbers = #tpu.dot_dimension_numbers<[1], [0], [0], [1], [0, 0, 1, 1], [], []>} : vector<128x128xbf16>, vector<128x256xbf16>, vector<128x256xf32> -> vector<128x256xf32>
    %c0_45 = arith.constant 0 : index
    %c6 = arith.constant 6 : index
    %105 = vector.load %arg3[%c0_45, %c6] : memref<128x9xf32, #tpu.memory_space<vmem>>, vector<128x1xf32>
    %106 = vector.broadcast %105 : vector<128x1xf32> to vector<128x256xf32>
    %107 = arith.addf %104, %106 : vector<128x256xf32>
    %108 = arith.addf %86, %107 : vector<128x256xf32>
    %cst_46 = arith.constant 0.000000e+00 : f32
    %109 = vector.broadcast %cst_46 : f32 to vector<128x256xf32>
    %110 = arith.subf %109, %108 : vector<128x256xf32>
    %111 = math.exp %110 : vector<128x256xf32>
    %cst_47 = arith.constant 1.000000e+00 : f32
    %112 = vector.broadcast %cst_47 : f32 to vector<128x256xf32>
    %113 = arith.addf %112, %111 : vector<128x256xf32>
    %114 = tpu.reciprocal %113 {approx = true} : vector<128x256xf32> -> vector<128x256xf32>
    %115 = arith.mulf %108, %114 : vector<128x256xf32>
    %116 = arith.truncf %115 : vector<128x256xf32> to vector<128x256xbf16>
    %c3_48 = arith.constant 3 : index
    %c0_49 = arith.constant 0 : index
    %c0_50 = arith.constant 0 : index
    %117 = vector.load %arg4[%c3_48, %c0_49, %c0_50] : memref<4x128x128xbf16, #tpu.memory_space<vmem>>, vector<1x128x128xbf16>
    %118 = vector.shape_cast %117 : vector<1x128x128xbf16> to vector<128x128xbf16>
    %cst_51 = arith.constant dense<0.000000e+00> : vector<128x256xf32>
    %119 = tpu.matmul %118, %116, %cst_51 {dimension_numbers = #tpu.dot_dimension_numbers<[1], [0], [0], [1], [0, 0, 1, 1], [], []>} : vector<128x128xbf16>, vector<128x256xbf16>, vector<128x256xf32> -> vector<128x256xf32>
    %c0_52 = arith.constant 0 : index
    %c7 = arith.constant 7 : index
    %120 = vector.load %arg3[%c0_52, %c7] : memref<128x9xf32, #tpu.memory_space<vmem>>, vector<128x1xf32>
    %121 = vector.broadcast %120 : vector<128x1xf32> to vector<128x256xf32>
    %122 = arith.addf %119, %121 : vector<128x256xf32>
    %cst_53 = arith.constant 0.000000e+00 : f32
    %123 = vector.broadcast %cst_53 : f32 to vector<128x256xf32>
    %124 = arith.subf %123, %122 : vector<128x256xf32>
    %125 = math.exp %124 : vector<128x256xf32>
    %cst_54 = arith.constant 1.000000e+00 : f32
    %126 = vector.broadcast %cst_54 : f32 to vector<128x256xf32>
    %127 = arith.addf %126, %125 : vector<128x256xf32>
    %128 = tpu.reciprocal %127 {approx = true} : vector<128x256xf32> -> vector<128x256xf32>
    %129 = arith.mulf %122, %128 : vector<128x256xf32>
    %130 = arith.truncf %129 : vector<128x256xf32> to vector<128x256xbf16>
    %c3_55 = arith.constant 3 : index
    %c0_56 = arith.constant 0 : index
    %c0_57 = arith.constant 0 : index
    %131 = vector.load %arg5[%c3_55, %c0_56, %c0_57] : memref<4x128x128xbf16, #tpu.memory_space<vmem>>, vector<1x128x128xbf16>
    %132 = vector.shape_cast %131 : vector<1x128x128xbf16> to vector<128x128xbf16>
    %cst_58 = arith.constant dense<0.000000e+00> : vector<128x256xf32>
    %133 = tpu.matmul %132, %130, %cst_58 {dimension_numbers = #tpu.dot_dimension_numbers<[1], [0], [0], [1], [0, 0, 1, 1], [], []>} : vector<128x128xbf16>, vector<128x256xbf16>, vector<128x256xf32> -> vector<128x256xf32>
    %c0_59 = arith.constant 0 : index
    %c8 = arith.constant 8 : index
    %134 = vector.load %arg3[%c0_59, %c8] : memref<128x9xf32, #tpu.memory_space<vmem>>, vector<128x1xf32>
    %135 = vector.broadcast %134 : vector<128x1xf32> to vector<128x256xf32>
    %136 = arith.addf %133, %135 : vector<128x256xf32>
    %137 = arith.addf %115, %136 : vector<128x256xf32>
    %cst_60 = arith.constant 0.000000e+00 : f32
    %138 = vector.broadcast %cst_60 : f32 to vector<128x256xf32>
    %139 = arith.subf %138, %137 : vector<128x256xf32>
    %140 = math.exp %139 : vector<128x256xf32>
    %cst_61 = arith.constant 1.000000e+00 : f32
    %141 = vector.broadcast %cst_61 : f32 to vector<128x256xf32>
    %142 = arith.addf %141, %140 : vector<128x256xf32>
    %143 = tpu.reciprocal %142 {approx = true} : vector<128x256xf32> -> vector<128x256xf32>
    %144 = arith.mulf %137, %143 : vector<128x256xf32>
    %c0_62 = arith.constant 0 : index
    %c0_63 = arith.constant 0 : index
    %145 = vector.load %arg6[%c0_62, %c0_63] : memref<2x128xbf16, #tpu.memory_space<vmem>>, vector<2x128xbf16>
    %146 = arith.truncf %144 : vector<128x256xf32> to vector<128x256xbf16>
    %cst_64 = arith.constant dense<0.000000e+00> : vector<2x256xf32>
    %147 = tpu.matmul %145, %146, %cst_64 {dimension_numbers = #tpu.dot_dimension_numbers<[1], [0], [0], [1], [0, 0, 1, 1], [], []>} : vector<2x128xbf16>, vector<128x256xbf16>, vector<2x256xf32> -> vector<2x256xf32>
    %c0_65 = arith.constant 0 : index
    %c0_66 = arith.constant 0 : index
    %148 = vector.load %arg7[%c0_65, %c0_66] : memref<2x1xf32, #tpu.memory_space<vmem>>, vector<2x1xf32>
    %149 = vector.broadcast %148 : vector<2x1xf32> to vector<2x256xf32>
    %150 = arith.addf %147, %149 : vector<2x256xf32>
    %c0_67 = arith.constant 0 : index
    %c0_68 = arith.constant 0 : index
    %151 = vector.load %arg8[%c0_67, %c0_68] : memref<2x256xf32, #tpu.memory_space<vmem>>, vector<2x256xf32>
    tpu.vector_store %arg8[%c0_67, %c0_68], %150 {strides = array<i32>} : memref<2x256xf32, #tpu.memory_space<vmem>>, vector<2x256xf32>,
    return
  }
  func.func @transform_0(%arg0: i32) -> (i32, i32) {
    %c0_i32 = arith.constant 0 : i32
    %c0_i32_0 = arith.constant 0 : i32
    return %c0_i32, %arg0 : i32, i32
  }
  func.func @transform_1(%arg0: i32) -> (i32, i32) {
    %c0_i32 = arith.constant 0 : i32
    %c0_i32_0 = arith.constant 0 : i32
    %c0_i32_1 = arith.constant 0 : i32
    return %c0_i32, %c0_i32_0 : i32, i32
  }
  func.func @transform_2(%arg0: i32) -> (i32, i32) {
    %c0_i32 = arith.constant 0 : i32
    %c0_i32_0 = arith.constant 0 : i32
    %c0_i32_1 = arith.constant 0 : i32
    return %c0_i32, %c0_i32_0 : i32, i32
  }
  func.func @transform_3(%arg0: i32) -> (i32, i32, i32) {
    %c0_i32 = arith.constant 0 : i32
    %c0_i32_0 = arith.constant 0 : i32
    %c0_i32_1 = arith.constant 0 : i32
    %c0_i32_2 = arith.constant 0 : i32
    return %c0_i32, %c0_i32_0, %c0_i32_1 : i32, i32, i32
  }
  func.func @transform_4(%arg0: i32) -> (i32, i32, i32) {
    %c0_i32 = arith.constant 0 : i32
    %c0_i32_0 = arith.constant 0 : i32
    %c0_i32_1 = arith.constant 0 : i32
    %c0_i32_2 = arith.constant 0 : i32
    return %c0_i32, %c0_i32_0, %c0_i32_1 : i32, i32, i32
  }
  func.func @transform_5(%arg0: i32) -> (i32, i32) {
    %c0_i32 = arith.constant 0 : i32
    %c0_i32_0 = arith.constant 0 : i32
    %c0_i32_1 = arith.constant 0 : i32
    return %c0_i32, %c0_i32_0 : i32, i32
  }
  func.func @transform_6(%arg0: i32) -> (i32, i32) {
    %c0_i32 = arith.constant 0 : i32
    %c0_i32_0 = arith.constant 0 : i32
    %c0_i32_1 = arith.constant 0 : i32
    return %c0_i32, %c0_i32_0 : i32, i32
  }
  func.func @transform_7(%arg0: i32) -> (i32, i32) {
    %c0_i32 = arith.constant 0 : i32
    %c0_i32_0 = arith.constant 0 : i32
    return %c0_i32, %arg0 : i32, i32
  }
}

</mosaic_0001>

<llo_original>
// kernel: tpu_custom_call.1
$region0: #{tpu_custom_call.1}
  #allocation0 [shape = 'u32[]', space=smem, size = 0x4, offset = 0x4, fixed_abs, tag = 'smem constant byte address 0x4 - core index']
  #allocation1 [shape = 'u32[144,128]{1,0:T(1,128)}', space=vmem, size = 0x12000, scoped, tag = 'internal scratch']
  %s0 = inlined_call_operand.hbm [shape: f32[3,512], index: 0, kind: input, shape index: {}]
  %s1 = inlined_call_operand.vmem [shape: f32[128,3], index: 1, kind: input, shape index: {}]
  %s2 = inlined_call_operand.vmem [shape: f32[128,9], index: 2, kind: input, shape index: {}]
  %s3 = inlined_call_operand.vmem [shape: bf16[4,128,128], index: 3, kind: input, shape index: {}]
  %s4 = inlined_call_operand.hbm [shape: bf16[4,128,128], index: 4, kind: input, shape index: {}]
  %s5 = inlined_call_operand.vmem [shape: bf16[2,128], index: 5, kind: input, shape index: {}]
  %s6 = inlined_call_operand.vmem [shape: f32[2,1], index: 6, kind: input, shape index: {}]
  %s7 = inlined_call_operand.hbm [shape: f32[2,512], index: 7, kind: output, shape index: {}]
  %s8 = sld [smem:[#allocation0]]
  $region69: #{tpu_custom_call.1} parent=0
    _
  %s10 = ssub.s32 1, %s8
  %s11 = scalar_select 0, %s10, %s8
  $region1: #{tpu_custom_call.1} parent=0
    #allocation2 [shape = 'u8[8192]{0}', space=vmem, size = 0x2000, scoped, tag = 'input window, operand 0']
    #allocation3 [shape = 's32[2]{0}', space=sflag, size = 0x8, scoped, tag = 'scoped memory for tpu_custom_call.1']
    #allocation4 [shape = 's32[2]{0}', space=sflag, size = 0x8, scoped, tag = 'scoped memory for tpu_custom_call.1']
    #allocation5 [shape = 'u8[131072]{0}', space=vmem, size = 0x20000, scoped, tag = 'input window, operand 4, single buffered']
    #allocation6 [shape = 's32[1]{0}', space=sflag, size = 0x4, scoped, tag = 'scoped memory for tpu_custom_call.1']
    #allocation7 [shape = 'u8[4096]{0}', space=vmem, size = 0x1000, scoped, tag = 'output window, operand 0']
    %12 = vsyncpa [#allocation3], 0
    %s13 = scalar_lea.sflag [#allocation3], 1
    %14 = vsyncpa %s13, 0
    %15 = vsyncpa [#allocation6], 0
    %16 = vsyncpa [#allocation4], 0
    %s17 = scalar_lea.sflag [#allocation4], 1
    %18 = vsyncpa %s17, 0
    loop: start=0, step=1, limit=4
    $region2: #{tpu_custom_call.1} parent=1 // loop_pre_header
      _
    $region3: #{tpu_custom_call.1} parent=1 // loop_header
      %s20 = sphi 0, %s24
      %p21 = scmp.ge.s32.totalorder %s20, 4
      %s30 = sphi 0, %s32
      %s33 = sphi 0, %s30
      %s34 = sphi 0, %s33
      %s50 = sphi 0, %s34
      %s54 = sphi 0, %s54
      %s56 = sphi 0, %s54
      %s57 = sphi 0, %s56
      %s71 = sphi 0, %s57
      %s75 = sphi 0, %s75
      %s77 = sphi 0, %s75
      %s78 = sphi 0, %s77
      %s92 = sphi 0, %s78
      %s96 = sphi 0, %s96
      %s98 = sphi 0, %s96
      %s99 = sphi 0, %s98
      %s113 = sphi 0, %s99
      %s117 = sphi 0, %s117
      %s119 = sphi 0, %s117
      %s120 = sphi 0, %s119
      %s134 = sphi 0, %s120
      %s138 = sphi 0, %s138
      %s140 = sphi 0, %s138
      %s141 = sphi 0, %s140
      %s155 = sphi 0, %s141
      %s159 = sphi 0, %s159
      %s161 = sphi 0, %s159
      %s162 = sphi 0, %s161
      %s176 = sphi 0, %s162
      %s182 = sphi 0, %s184
      %s185 = sphi 0, %s182
      %s186 = sphi 0, %s185
      %s202 = sphi 0, %s186
    $region4: #{tpu_custom_call.1} parent=1 // loop_header_branch
      %23 = sbr.rel (%p21) target = $region8
    $region5: #{tpu_custom_call.1} parent=1 // loop_body
      %s25 = ssub.s32 %s20, 1
      %s26 = ssub.s32 %s20, 2
      %s27 = sadd.s32 %s20, 1
      %s28 = ssub.s32 %s20, %s27
      %p29 = scmp.eq.s32.totalorder %s28, 0
      %s31 = sadd.s32 %s30, 1
      %s32 = scalar_select %p29, %s30, %s31
      %p35 = pneg %p29
      %p36 = scmp.eq.s32.totalorder %s20, 1
      %p37 = por %p35, %p36
      %p38 = scmp.ne.s32.totalorder %s30, %s33
      %p39 = scmp.eq.s32.totalorder %s20, 0
      %p40 = por %p38, %p39
      %p41 = scmp.ne.s32.totalorder %s30, %s33
      %p42 = scmp.eq.s32.totalorder %s25, 1
      %p43 = por %p41, %p42
      %p44 = scmp.ne.s32.totalorder %s33, %s34
      %p45 = scmp.eq.s32.totalorder %s25, 0
      %p46 = por %p44, %p45
      %p47 = scmp.ne.s32.totalorder %s33, %s34
      %p48 = scmp.eq.s32.totalorder %s26, 1
      %p49 = por %p47, %p48
      %p51 = scmp.ne.s32.totalorder %s34, %s50
      %p52 = scmp.eq.s32.totalorder %s26, 0
      %p53 = por %p51, %p52
      %s55 = sadd.s32 %s54, 1
      %p58 = scmp.eq.s32.totalorder %s20, 1
      %p59 = scmp.ne.s32.totalorder %s54, %s56
      %p60 = scmp.eq.s32.totalorder %s20, 0
      %p61 = por %p59, %p60
      %p62 = scmp.ne.s32.totalorder %s54, %s56
      %p63 = scmp.eq.s32.totalorder %s25, 1
      %p64 = por %p62, %p63
      %p65 = scmp.ne.s32.totalorder %s56, %s57
      %p66 = scmp.eq.s32.totalorder %s25, 0
      %p67 = por %p65, %p66
      %p68 = scmp.ne.s32.totalorder %s56, %s57
      %p69 = scmp.eq.s32.totalorder %s26, 1
      %p70 = por %p68, %p69
      %p72 = scmp.ne.s32.totalorder %s57, %s71
      %p73 = scmp.eq.s32.totalorder %s26, 0
      %p74 = por %p72, %p73
      %s76 = sadd.s32 %s75, 1
      %p79 = scmp.eq.s32.totalorder %s20, 1
      %p80 = scmp.ne.s32.totalorder %s75, %s77
      %p81 = scmp.eq.s32.totalorder %s20, 0
      %p82 = por %p80, %p81
      %p83 = scmp.ne.s32.totalorder %s75, %s77
      %p84 = scmp.eq.s32.totalorder %s25, 1
      %p85 = por %p83, %p84
      %p86 = scmp.ne.s32.totalorder %s77, %s78
      %p87 = scmp.eq.s32.totalorder %s25, 0
      %p88 = por %p86, %p87
      %p89 = scmp.ne.s32.totalorder %s77, %s78
      %p90 = scmp.eq.s32.totalorder %s26, 1
      %p91 = por %p89, %p90
      %p93 = scmp.ne.s32.totalorder %s78, %s92
      %p94 = scmp.eq.s32.totalorder %s26, 0
      %p95 = por %p93, %p94
      %s97 = sadd.s32 %s96, 1
      %p100 = scmp.eq.s32.totalorder %s20, 1
      %p101 = scmp.ne.s32.totalorder %s96, %s98
      %p102 = scmp.eq.s32.totalorder %s20, 0
      %p103 = por %p101, %p102
      %p104 = scmp.ne.s32.totalorder %s96, %s98
      %p105 = scmp.eq.s32.totalorder %s25, 1
      %p106 = por %p104, %p105
      %p107 = scmp.ne.s32.totalorder %s98, %s99
      %p108 = scmp.eq.s32.totalorder %s25, 0
      %p109 = por %p107, %p108
      %p110 = scmp.ne.s32.totalorder %s98, %s99
      %p111 = scmp.eq.s32.totalorder %s26, 1
      %p112 = por %p110, %p111
      %p114 = scmp.ne.s32.totalorder %s99, %s113
      %p115 = scmp.eq.s32.totalorder %s26, 0
      %p116 = por %p114, %p115
      %s118 = sadd.s32 %s117, 1
      %p121 = scmp.eq.s32.totalorder %s20, 1
      %p122 = scmp.ne.s32.totalorder %s117, %s119
      %p123 = scmp.eq.s32.totalorder %s20, 0
      %p124 = por %p122, %p123
      %p125 = scmp.ne.s32.totalorder %s117, %s119
      %p126 = scmp.eq.s32.totalorder %s25, 1
      %p127 = por %p125, %p126
      %p128 = scmp.ne.s32.totalorder %s119, %s120
      %p129 = scmp.eq.s32.totalorder %s25, 0
      %p130 = por %p128, %p129
      %p131 = scmp.ne.s32.totalorder %s119, %s120
      %p132 = scmp.eq.s32.totalorder %s26, 1
      %p133 = por %p131, %p132
      %p135 = scmp.ne.s32.totalorder %s120, %s134
      %p136 = scmp.eq.s32.totalorder %s26, 0
      %p137 = por %p135, %p136
      %s139 = sadd.s32 %s138, 1
      %p142 = scmp.eq.s32.totalorder %s20, 1
      %p143 = scmp.ne.s32.totalorder %s138, %s140
      %p144 = scmp.eq.s32.totalorder %s20, 0
      %p145 = por %p143, %p144
      %p146 = scmp.ne.s32.totalorder %s138, %s140
      %p147 = scmp.eq.s32.totalorder %s25, 1
      %p148 = por %p146, %p147
      %p149 = scmp.ne.s32.totalorder %s140, %s141
      %p150 = scmp.eq.s32.totalorder %s25, 0
      %p151 = por %p149, %p150
      %p152 = scmp.ne.s32.totalorder %s140, %s141
      %p153 = scmp.eq.s32.totalorder %s26, 1
      %p154 = por %p152, %p153
      %p156 = scmp.ne.s32.totalorder %s141, %s155
      %p157 = scmp.eq.s32.totalorder %s26, 0
      %p158 = por %p156, %p157
      %s160 = sadd.s32 %s159, 1
      %p163 = scmp.eq.s32.totalorder %s20, 1
      %p164 = scmp.ne.s32.totalorder %s159, %s161
      %p165 = scmp.eq.s32.totalorder %s20, 0
      %p166 = por %p164, %p165
      %p167 = scmp.ne.s32.totalorder %s159, %s161
      %p168 = scmp.eq.s32.totalorder %s25, 1
      %p169 = por %p167, %p168
      %p170 = scmp.ne.s32.totalorder %s161, %s162
      %p171 = scmp.eq.s32.totalorder %s25, 0
      %p172 = por %p170, %p171
      %p173 = scmp.ne.s32.totalorder %s161, %s162
      %p174 = scmp.eq.s32.totalorder %s26, 1
      %p175 = por %p173, %p174
      %p177 = scmp.ne.s32.totalorder %s162, %s176
      %p178 = scmp.eq.s32.totalorder %s26, 0
      %p179 = por %p177, %p178
      %s180 = ssub.s32 %s20, %s27
      %p181 = scmp.eq.s32.totalorder %s180, 0
      %s183 = sadd.s32 %s182, 1
      %s184 = scalar_select %p181, %s182, %s183
      %p187 = pneg %p181
      %p188 = scmp.eq.s32.totalorder %s20, 1
      %p189 = por %p187, %p188
      %p190 = scmp.ne.s32.totalorder %s182, %s185
      %p191 = scmp.eq.s32.totalorder %s20, 0
      %p192 = por %p190, %p191
      %p193 = scmp.ne.s32.totalorder %s182, %s185
      %p194 = scmp.eq.s32.totalorder %s25, 1
      %p195 = por %p193, %p194
      %p196 = scmp.ne.s32.totalorder %s185, %s186
      %p197 = scmp.eq.s32.totalorder %s25, 0
      %p198 = por %p196, %p197
      %p199 = scmp.ne.s32.totalorder %s185, %s186
      %p200 = scmp.eq.s32.totalorder %s26, 1
      %p201 = por %p199, %p200
      %p203 = scmp.ne.s32.totalorder %s186, %s202
      %p204 = scmp.eq.s32.totalorder %s26, 0
      %p205 = por %p203, %p204
      %p206 = scmp.le.s32.totalorder 1, %s20
      %p207 = scmp.lt.s32.totalorder %s20, 3
      %p208 = pnand %p206, %p207
      %p209 = pneg %p208
      // Predicated region
      $region9: #{tpu_custom_call.1} parent=5 // pred_check
        _
      $region10: #{tpu_custom_call.1} parent=5 // pred_check_branch
        %211 = sbr.rel (%p208) target = $region12
      $region11: #{tpu_custom_call.1} parent=5 // pred_region
        %s212 = ssub.s32 %s20, 1
        // Predicated region
        $region13: #{tpu_custom_call.1} parent=11 // pred_check
          %p213 = pneg %p67
        $region14: #{tpu_custom_call.1} parent=11 // pred_check_branch
          %215 = sbr.rel (%p213) target = $region16
        $region15: #{tpu_custom_call.1} parent=11 // pred_region
          _
        $region16: #{tpu_custom_call.1} parent=11 // pred_fallthru
          _
        // Predicated region
        $region17: #{tpu_custom_call.1} parent=11 // pred_check
          %p216 = pneg %p88
        $region18: #{tpu_custom_call.1} parent=11 // pred_check_branch
          %218 = sbr.rel (%p216) target = $region20
        $region19: #{tpu_custom_call.1} parent=11 // pred_region
          _
        $region20: #{tpu_custom_call.1} parent=11 // pred_fallthru
          _
        // Predicated region
        $region21: #{tpu_custom_call.1} parent=11 // pred_check
          %p219 = pneg %p109
        $region22: #{tpu_custom_call.1} parent=11 // pred_check_branch
          %221 = sbr.rel (%p219) target = $region24
        $region23: #{tpu_custom_call.1} parent=11 // pred_region
          _
        $region24: #{tpu_custom_call.1} parent=11 // pred_fallthru
          _
        // Predicated region
        $region25: #{tpu_custom_call.1} parent=11 // pred_check
          %p222 = pneg %p130
        $region26: #{tpu_custom_call.1} parent=11 // pred_check_branch
          %224 = sbr.rel (%p222) target = $region28
        $region27: #{tpu_custom_call.1} parent=11 // pred_region
          %s226 = ssub.s32 4096, 4096
          %227 = vsyncadd [#allocation6], %s226
          %s228 = sshll.u32 [#allocation5], 4
          %s229 = int_to_ptr.vmem [resolvable:$true] %s228
          %234 = dma.hbm_to_vmem [thread:$0]  %s4, 4096, %s229, [#allocation6], 64, 64, 4
        $region28: #{tpu_custom_call.1} parent=11 // pred_fallthru
          _
        // Predicated region
        $region29: #{tpu_custom_call.1} parent=11 // pred_check
          %p235 = pneg %p151
        $region30: #{tpu_custom_call.1} parent=11 // pred_check_branch
          %237 = sbr.rel (%p235) target = $region32
        $region31: #{tpu_custom_call.1} parent=11 // pred_region
          _
        $region32: #{tpu_custom_call.1} parent=11 // pred_fallthru
          _
        // Predicated region
        $region33: #{tpu_custom_call.1} parent=11 // pred_check
          %p238 = pneg %p172
        $region34: #{tpu_custom_call.1} parent=11 // pred_check_branch
          %240 = sbr.rel (%p238) target = $region36
        $region35: #{tpu_custom_call.1} parent=11 // pred_region
          _
        $region36: #{tpu_custom_call.1} parent=11 // pred_fallthru
          _
      $region12: #{tpu_custom_call.1} parent=5 // pred_fallthru
        _
      %p241 = scmp.lt.s32.totalorder %s20, 2
      // Predicated region
      $region37: #{tpu_custom_call.1} parent=5 // pred_check
        %p242 = pneg %p241
      $region38: #{tpu_custom_call.1} parent=5 // pred_check_branch
        %244 = sbr.rel (%p242) target = $region40
      $region39: #{tpu_custom_call.1} parent=5 // pred_region
        // Predicated region
        $region41: #{tpu_custom_call.1} parent=39 // pred_check
          %p245 = pneg %p40
        $region42: #{tpu_custom_call.1} parent=39 // pred_check_branch
          %247 = sbr.rel (%p245) target = $region44
        $region43: #{tpu_custom_call.1} parent=39 // pred_region
          %s248 = sand.u32 %s30, 1
          %s249 = scalar_lea.sflag [#allocation3], %s248
          %s250 = sand.u32 %s30, 1
          %s251 = smul.addr %s250, 8
          %s252 = scalar_lea.vmem [#allocation2], %s251
          %s253 = smul.u32 2, %s20
          %s255 = ssub.s32 128, 128
          %256 = vsyncadd %s249, %s255
          %s257 = smul.addr %s253, 64
          %s258 = scalar_lea.hbm %s0, %s257
          %s260 = sshll.u32 %s252, 4
          %s261 = int_to_ptr.vmem [resolvable:$true] %s260
          %263 = dma.hbm_to_vmem [thread:$0]  %s258, 128, %s261, %s249
        $region44: #{tpu_custom_call.1} parent=39 // pred_fallthru
          _
      $region40: #{tpu_custom_call.1} parent=5 // pred_fallthru
        _
      %p264 = scmp.le.s32.totalorder 1, %s20
      %p265 = scmp.lt.s32.totalorder %s20, 3
      %p266 = pnand %p264, %p265
      %p267 = pneg %p266
      // Predicated region
      $region45: #{tpu_custom_call.1} parent=5 // pred_check
        _
      $region46: #{tpu_custom_call.1} parent=5 // pred_check_branch
        %269 = sbr.rel (%p266) target = $region48
      $region47: #{tpu_custom_call.1} parent=5 // pred_region
        %s270 = ssub.s32 %s20, 1
        %s271 = sand.u32 %s33, 1
        %s272 = scalar_lea.sflag [#allocation3], %s271
        %s273 = sand.u32 %s33, 1
        %s274 = smul.addr %s273, 8
        %s275 = scalar_lea.vmem [#allocation2], %s274
        // Predicated region
        $region49: #{tpu_custom_call.1} parent=47 // pred_check
          %p276 = pneg %p46
        $region50: #{tpu_custom_call.1} parent=47 // pred_check_branch
          %278 = sbr.rel (%p276) target = $region52
        $region51: #{tpu_custom_call.1} parent=47 // pred_region
          %279 = dma.done %s272, 128
        $region52: #{tpu_custom_call.1} parent=47 // pred_fallthru
          _
        // Predicated region
        $region53: #{tpu_custom_call.1} parent=47 // pred_check
          %p280 = pneg %p130
        $region54: #{tpu_custom_call.1} parent=47 // pred_check_branch
          %282 = sbr.rel (%p280) target = $region56
        $region55: #{tpu_custom_call.1} parent=47 // pred_region
          %283 = dma.done [#allocation6], 4096
        $region56: #{tpu_custom_call.1} parent=47 // pred_fallthru
          _
        %s284 = sand.u32 %s33, 1
        %s285 = scalar_lea.sflag [#allocation3], %s284
        %s286 = sand.u32 %s33, 1
        %s287 = smul.addr %s286, 8
        %s288 = scalar_lea.vmem [#allocation2], %s287
        %p289 = pneg %p46
        %p290 = pneg %p43
        %p291 = pneg %p67
        %p292 = pneg %p64
        %p293 = pneg %p88
        %p294 = pneg %p85
        %p295 = pneg %p109
        %p296 = pneg %p106
        %p297 = pneg %p130
        %p298 = pneg %p127
        %p299 = pneg %p151
        %p300 = pneg %p148
        %p301 = pneg %p172
        %p302 = pneg %p169
        %p303 = pneg %p198
        %p304 = pneg %p195
        %s305 = sand.u32 %s185, 1
        %s306 = scalar_lea.sflag [#allocation4], %s305
        %s307 = sand.u32 %s185, 1
        %s308 = smul.addr %s307, 4
        %s309 = scalar_lea.vmem [#allocation7], %s308
        %s310 = smul.u32 2, %s25
        %s311 = smul.u32 2, %s25
        %v313 = vld [vmem:[%s275] sm:$0x77]
        %v314 = vld [vmem:[%s1] sm:$0xff]
        %v315 = vld [vmem:[%s1 + $0x8] sm:$0xff]
        %v316 = vld [vmem:[%s1 + $0x10] sm:$0xff]
        %v317 = vld [vmem:[%s1 + $0x18] sm:$0xff]
        %v318 = vld [vmem:[%s1 + $0x20] sm:$0xff]
        %v319 = vld [vmem:[%s1 + $0x28] sm:$0xff]
        %v320 = vld [vmem:[%s1 + $0x30] sm:$0xff]
        %v321 = vld [vmem:[%s1 + $0x38] sm:$0xff]
        %v322 = vld [vmem:[%s1 + $0x40] sm:$0xff]
        %v323 = vld [vmem:[%s1 + $0x48] sm:$0xff]
        %v324 = vld [vmem:[%s1 + $0x50] sm:$0xff]
        %v325 = vld [vmem:[%s1 + $0x58] sm:$0xff]
        %v326 = vld [vmem:[%s1 + $0x60] sm:$0xff]
        %v327 = vld [vmem:[%s1 + $0x68] sm:$0xff]
        %v328 = vld [vmem:[%s1 + $0x70] sm:$0xff]
        %v329 = vld [vmem:[%s1 + $0x78] sm:$0xff]
        %v330 = vld [vmem:[%s2] sm:$0xff]
        %v331 = vld [vmem:[%s2 + $0x8] sm:$0xff]
        %v332 = vld [vmem:[%s2 + $0x10] sm:$0xff]
        %v333 = vld [vmem:[%s2 + $0x18] sm:$0xff]
        %v334 = vld [vmem:[%s2 + $0x20] sm:$0xff]
        %v335 = vld [vmem:[%s2 + $0x28] sm:$0xff]
        %v336 = vld [vmem:[%s2 + $0x30] sm:$0xff]
        %v337 = vld [vmem:[%s2 + $0x38] sm:$0xff]
        %v338 = vld [vmem:[%s2 + $0x40] sm:$0xff]
        %v339 = vld [vmem:[%s2 + $0x48] sm:$0xff]
        %v340 = vld [vmem:[%s2 + $0x50] sm:$0xff]
        %v341 = vld [vmem:[%s2 + $0x58] sm:$0xff]
        %v342 = vld [vmem:[%s2 + $0x60] sm:$0xff]
        %v343 = vld [vmem:[%s2 + $0x68] sm:$0xff]
        %v344 = vld [vmem:[%s2 + $0x70] sm:$0xff]
        %v345 = vld [vmem:[%s2 + $0x78] sm:$0xff]
        %347 = vset.pattern.permute.xlu0 0
        %348 = vperm.xlu0 %347, %v314
        %v349 = vpop.permute.xlu0 %348
        %352 = vset.pattern.permute.xlu0 0
        %353 = vperm.xlu0 %352, %v315
        %v354 = vpop.permute.xlu0 %353
        %357 = vset.pattern.permute.xlu0 0
        %358 = vperm.xlu0 %357, %v316
        %v359 = vpop.permute.xlu0 %358
        %362 = vset.pattern.permute.xlu0 0
        %363 = vperm.xlu0 %362, %v317
        %v364 = vpop.permute.xlu0 %363
        %367 = vset.pattern.permute.xlu0 0
        %368 = vperm.xlu0 %367, %v318
        %v369 = vpop.permute.xlu0 %368
        %372 = vset.pattern.permute.xlu0 0
        %373 = vperm.xlu0 %372, %v319
        %v374 = vpop.permute.xlu0 %373
        %377 = vset.pattern.permute.xlu0 0
        %378 = vperm.xlu0 %377, %v320
        %v379 = vpop.permute.xlu0 %378
        %382 = vset.pattern.permute.xlu0 0
        %383 = vperm.xlu0 %382, %v321
        %v384 = vpop.permute.xlu0 %383
        %387 = vset.pattern.permute.xlu0 0
        %388 = vperm.xlu0 %387, %v322
        %v389 = vpop.permute.xlu0 %388
        %392 = vset.pattern.permute.xlu0 0
        %393 = vperm.xlu0 %392, %v323
        %v394 = vpop.permute.xlu0 %393
        %397 = vset.pattern.permute.xlu0 0
        %398 = vperm.xlu0 %397, %v324
        %v399 = vpop.permute.xlu0 %398
        %402 = vset.pattern.permute.xlu0 0
        %403 = vperm.xlu0 %402, %v325
        %v404 = vpop.permute.xlu0 %403
        %407 = vset.pattern.permute.xlu0 0
        %408 = vperm.xlu0 %407, %v326
        %v409 = vpop.permute.xlu0 %408
        %412 = vset.pattern.permute.xlu0 0
        %413 = vperm.xlu0 %412, %v327
        %v414 = vpop.permute.xlu0 %413
        %417 = vset.pattern.permute.xlu0 0
        %418 = vperm.xlu0 %417, %v328
        %v419 = vpop.permute.xlu0 %418
        %422 = vset.pattern.permute.xlu0 0
        %423 = vperm.xlu0 %422, %v329
        %v424 = vpop.permute.xlu0 %423
        %v427 = vlaneseq
        %v428 = vshrl.u32 %v427, 7
        %v429 = vsub.s32 0, %v428
        %v430 = vrot.slane %v313, %v429
        %v431 = vlaneseq
        %v432 = vshrl.u32 %v431, 7
        %v433 = vsub.s32 4, %v432
        %v434 = vrot.slane %v313, %v433
        %v437 = vlaneseq
        %v438 = vshrl.u32 %v437, 7
        %v439 = vsub.s32 0, %v438
        %v440 = vrot.slane %v430, %v439
        %v441 = vlaneseq
        %v442 = vshrl.u32 %v441, 7
        %v443 = vsub.s32 0, %v442
        %v444 = vrot.slane %v434, %v443
        %v445 = vmul.f32 %v349, %v440
        %v446 = vmul.f32 %v349, %v444
        %v447 = vmul.f32 %v354, %v440
        %v448 = vmul.f32 %v354, %v444
        %v449 = vmul.f32 %v359, %v440
        %v450 = vmul.f32 %v359, %v444
        %v451 = vmul.f32 %v364, %v440
        %v452 = vmul.f32 %v364, %v444
        %v453 = vmul.f32 %v369, %v440
        %v454 = vmul.f32 %v369, %v444
        %v455 = vmul.f32 %v374, %v440
        %v456 = vmul.f32 %v374, %v444
        %v457 = vmul.f32 %v379, %v440
        %v458 = vmul.f32 %v379, %v444
        %v459 = vmul.f32 %v384, %v440
        %v460 = vmul.f32 %v384, %v444
        %v461 = vmul.f32 %v389, %v440
        %v462 = vmul.f32 %v389, %v444
        %v463 = vmul.f32 %v394, %v440
        %v464 = vmul.f32 %v394, %v444
        %v465 = vmul.f32 %v399, %v440
        %v466 = vmul.f32 %v399, %v444
        %v467 = vmul.f32 %v404, %v440
        %v468 = vmul.f32 %v404, %v444
        %v469 = vmul.f32 %v409, %v440
        %v470 = vmul.f32 %v409, %v444
        %v471 = vmul.f32 %v414, %v440
        %v472 = vmul.f32 %v414, %v444
        %v473 = vmul.f32 %v419, %v440
        %v474 = vmul.f32 %v419, %v444
        %v475 = vmul.f32 %v424, %v440
        %v476 = vmul.f32 %v424, %v444
        %478 = vset.pattern.permute.xlu0 0
        %479 = vperm.xlu0 %478, %v330
        %v480 = vpop.permute.xlu0 %479
        %483 = vset.pattern.permute.xlu0 0
        %484 = vperm.xlu0 %483, %v331
        %v485 = vpop.permute.xlu0 %484
        %488 = vset.pattern.permute.xlu0 0
        %489 = vperm.xlu0 %488, %v332
        %v490 = vpop.permute.xlu0 %489
        %493 = vset.pattern.permute.xlu0 0
        %494 = vperm.xlu0 %493, %v333
        %v495 = vpop.permute.xlu0 %494
        %498 = vset.pattern.permute.xlu0 0
        %499 = vperm.xlu0 %498, %v334
        %v500 = vpop.permute.xlu0 %499
        %503 = vset.pattern.permute.xlu0 0
        %504 = vperm.xlu0 %503, %v335
        %v505 = vpop.permute.xlu0 %504
        %508 = vset.pattern.permute.xlu0 0
        %509 = vperm.xlu0 %508, %v336
        %v510 = vpop.permute.xlu0 %509
        %513 = vset.pattern.permute.xlu0 0
        %514 = vperm.xlu0 %513, %v337
        %v515 = vpop.permute.xlu0 %514
        %518 = vset.pattern.permute.xlu0 0
        %519 = vperm.xlu0 %518, %v338
        %v520 = vpop.permute.xlu0 %519
        %523 = vset.pattern.permute.xlu0 0
        %524 = vperm.xlu0 %523, %v339
        %v525 = vpop.permute.xlu0 %524
        %528 = vset.pattern.permute.xlu0 0
        %529 = vperm.xlu0 %528, %v340
        %v530 = vpop.permute.xlu0 %529
        %533 = vset.pattern.permute.xlu0 0
        %534 = vperm.xlu0 %533, %v341
        %v535 = vpop.permute.xlu0 %534
        %538 = vset.pattern.permute.xlu0 0
        %539 = vperm.xlu0 %538, %v342
        %v540 = vpop.permute.xlu0 %539
        %543 = vset.pattern.permute.xlu0 0
        %544 = vperm.xlu0 %543, %v343
        %v545 = vpop.permute.xlu0 %544
        %548 = vset.pattern.permute.xlu0 0
        %549 = vperm.xlu0 %548, %v344
        %v550 = vpop.permute.xlu0 %549
        %553 = vset.pattern.permute.xlu0 0
        %554 = vperm.xlu0 %553, %v345
        %v555 = vpop.permute.xlu0 %554
        %v557 = vadd.f32 %v480, %v445
        %v558 = vadd.f32 %v480, %v446
        %v559 = vadd.f32 %v485, %v447
        %v560 = vadd.f32 %v485, %v448
        %v561 = vadd.f32 %v490, %v449
        %v562 = vadd.f32 %v490, %v450
        %v563 = vadd.f32 %v495, %v451
        %v564 = vadd.f32 %v495, %v452
        %v565 = vadd.f32 %v500, %v453
        %v566 = vadd.f32 %v500, %v454
        %v567 = vadd.f32 %v505, %v455
        %v568 = vadd.f32 %v505, %v456
        %v569 = vadd.f32 %v510, %v457
        %v570 = vadd.f32 %v510, %v458
        %v571 = vadd.f32 %v515, %v459
        %v572 = vadd.f32 %v515, %v460
        %v573 = vadd.f32 %v520, %v461
        %v574 = vadd.f32 %v520, %v462
        %v575 = vadd.f32 %v525, %v463
        %v576 = vadd.f32 %v525, %v464
        %v577 = vadd.f32 %v530, %v465
        %v578 = vadd.f32 %v530, %v466
        %v579 = vadd.f32 %v535, %v467
        %v580 = vadd.f32 %v535, %v468
        %v581 = vadd.f32 %v540, %v469
        %v582 = vadd.f32 %v540, %v470
        %v583 = vadd.f32 %v545, %v471
        %v584 = vadd.f32 %v545, %v472
        %v585 = vadd.f32 %v550, %v473
        %v586 = vadd.f32 %v550, %v474
        %v587 = vadd.f32 %v555, %v475
        %v588 = vadd.f32 %v555, %v476
        %589 = vset.pattern.permute.xlu0 1
        %590 = vperm.xlu0 %589, %v314
        %v591 = vpop.permute.xlu0 %590
        %593 = vset.pattern.permute.xlu0 1
        %594 = vperm.xlu0 %593, %v315
        %v595 = vpop.permute.xlu0 %594
        %597 = vset.pattern.permute.xlu0 1
        %598 = vperm.xlu0 %597, %v316
        %v599 = vpop.permute.xlu0 %598
        %601 = vset.pattern.permute.xlu0 1
        %602 = vperm.xlu0 %601, %v317
        %v603 = vpop.permute.xlu0 %602
        %605 = vset.pattern.permute.xlu0 1
        %606 = vperm.xlu0 %605, %v318
        %v607 = vpop.permute.xlu0 %606
        %609 = vset.pattern.permute.xlu0 1
        %610 = vperm.xlu0 %609, %v319
        %v611 = vpop.permute.xlu0 %610
        %613 = vset.pattern.permute.xlu0 1
        %614 = vperm.xlu0 %613, %v320
        %v615 = vpop.permute.xlu0 %614
        %617 = vset.pattern.permute.xlu0 1
        %618 = vperm.xlu0 %617, %v321
        %v619 = vpop.permute.xlu0 %618
        %621 = vset.pattern.permute.xlu0 1
        %622 = vperm.xlu0 %621, %v322
        %v623 = vpop.permute.xlu0 %622
        %625 = vset.pattern.permute.xlu0 1
        %626 = vperm.xlu0 %625, %v323
        %v627 = vpop.permute.xlu0 %626
        %629 = vset.pattern.permute.xlu0 1
        %630 = vperm.xlu0 %629, %v324
        %v631 = vpop.permute.xlu0 %630
        %633 = vset.pattern.permute.xlu0 1
        %634 = vperm.xlu0 %633, %v325
        %v635 = vpop.permute.xlu0 %634
        %637 = vset.pattern.permute.xlu0 1
        %638 = vperm.xlu0 %637, %v326
        %v639 = vpop.permute.xlu0 %638
        %641 = vset.pattern.permute.xlu0 1
        %642 = vperm.xlu0 %641, %v327
        %v643 = vpop.permute.xlu0 %642
        %645 = vset.pattern.permute.xlu0 1
        %646 = vperm.xlu0 %645, %v328
        %v647 = vpop.permute.xlu0 %646
        %649 = vset.pattern.permute.xlu0 1
        %650 = vperm.xlu0 %649, %v329
        %v651 = vpop.permute.xlu0 %650
        %v653 = vlaneseq
        %v654 = vshrl.u32 %v653, 7
        %v655 = vsub.s32 1, %v654
        %v656 = vrot.slane %v313, %v655
        %v657 = vlaneseq
        %v658 = vshrl.u32 %v657, 7
        %v659 = vsub.s32 5, %v658
        %v660 = vrot.slane %v313, %v659
        %v663 = vlaneseq
        %v664 = vshrl.u32 %v663, 7
        %v665 = vsub.s32 1, %v664
        %v666 = vrot.slane %v656, %v665
        %v667 = vlaneseq
        %v668 = vshrl.u32 %v667, 7
        %v669 = vsub.s32 1, %v668
        %v670 = vrot.slane %v660, %v669
        %v671 = vmul.f32 %v591, %v666
        %v672 = vmul.f32 %v591, %v670
        %v673 = vmul.f32 %v595, %v666
        %v674 = vmul.f32 %v595, %v670
        %v675 = vmul.f32 %v599, %v666
        %v676 = vmul.f32 %v599, %v670
        %v677 = vmul.f32 %v603, %v666
        %v678 = vmul.f32 %v603, %v670
        %v679 = vmul.f32 %v607, %v666
        %v680 = vmul.f32 %v607, %v670
        %v681 = vmul.f32 %v611, %v666
        %v682 = vmul.f32 %v611, %v670
        %v683 = vmul.f32 %v615, %v666
        %v684 = vmul.f32 %v615, %v670
        %v685 = vmul.f32 %v619, %v666
        %v686 = vmul.f32 %v619, %v670
        %v687 = vmul.f32 %v623, %v666
        %v688 = vmul.f32 %v623, %v670
        %v689 = vmul.f32 %v627, %v666
        %v690 = vmul.f32 %v627, %v670
        %v691 = vmul.f32 %v631, %v666
        %v692 = vmul.f32 %v631, %v670
        %v693 = vmul.f32 %v635, %v666
        %v694 = vmul.f32 %v635, %v670
        %v695 = vmul.f32 %v639, %v666
        %v696 = vmul.f32 %v639, %v670
        %v697 = vmul.f32 %v643, %v666
        %v698 = vmul.f32 %v643, %v670
        %v699 = vmul.f32 %v647, %v666
        %v700 = vmul.f32 %v647, %v670
        %v701 = vmul.f32 %v651, %v666
        %v702 = vmul.f32 %v651, %v670
        %v703 = vadd.f32 %v557, %v671
        %v704 = vadd.f32 %v558, %v672
        %v705 = vadd.f32 %v559, %v673
        %v706 = vadd.f32 %v560, %v674
        %v707 = vadd.f32 %v561, %v675
        %v708 = vadd.f32 %v562, %v676
        %v709 = vadd.f32 %v563, %v677
        %v710 = vadd.f32 %v564, %v678
        %v711 = vadd.f32 %v565, %v679
        %v712 = vadd.f32 %v566, %v680
        %v713 = vadd.f32 %v567, %v681
        %v714 = vadd.f32 %v568, %v682
        %v715 = vadd.f32 %v569, %v683
        %v716 = vadd.f32 %v570, %v684
        %v717 = vadd.f32 %v571, %v685
        %v718 = vadd.f32 %v572, %v686
        %v719 = vadd.f32 %v573, %v687
        %v720 = vadd.f32 %v574, %v688
        %v721 = vadd.f32 %v575, %v689
        %v722 = vadd.f32 %v576, %v690
        %v723 = vadd.f32 %v577, %v691
        %v724 = vadd.f32 %v578, %v692
        %v725 = vadd.f32 %v579, %v693
        %v726 = vadd.f32 %v580, %v694
        %v727 = vadd.f32 %v581, %v695
        %v728 = vadd.f32 %v582, %v696
        %v729 = vadd.f32 %v583, %v697
        %v730 = vadd.f32 %v584, %v698
        %v731 = vadd.f32 %v585, %v699
        %v732 = vadd.f32 %v586, %v700
        %v733 = vadd.f32 %v587, %v701
        %v734 = vadd.f32 %v588, %v702
        %735 = vset.pattern.permute.xlu0 2
        %736 = vperm.xlu0 %735, %v314
        %v737 = vpop.permute.xlu0 %736
        %739 = vset.pattern.permute.xlu0 2
        %740 = vperm.xlu0 %739, %v315
        %v741 = vpop.permute.xlu0 %740
        %743 = vset.pattern.permute.xlu0 2
        %744 = vperm.xlu0 %743, %v316
        %v745 = vpop.permute.xlu0 %744
        %747 = vset.pattern.permute.xlu0 2
        %748 = vperm.xlu0 %747, %v317
        %v749 = vpop.permute.xlu0 %748
        %751 = vset.pattern.permute.xlu0 2
        %752 = vperm.xlu0 %751, %v318
        %v753 = vpop.permute.xlu0 %752
        %755 = vset.pattern.permute.xlu0 2
        %756 = vperm.xlu0 %755, %v319
        %v757 = vpop.permute.xlu0 %756
        %759 = vset.pattern.permute.xlu0 2
        %760 = vperm.xlu0 %759, %v320
        %v761 = vpop.permute.xlu0 %760
        %763 = vset.pattern.permute.xlu0 2
        %764 = vperm.xlu0 %763, %v321
        %v765 = vpop.permute.xlu0 %764
        %767 = vset.pattern.permute.xlu0 2
        %768 = vperm.xlu0 %767, %v322
        %v769 = vpop.permute.xlu0 %768
        %771 = vset.pattern.permute.xlu0 2
        %772 = vperm.xlu0 %771, %v323
        %v773 = vpop.permute.xlu0 %772
        %775 = vset.pattern.permute.xlu0 2
        %776 = vperm.xlu0 %775, %v324
        %v777 = vpop.permute.xlu0 %776
        %779 = vset.pattern.permute.xlu0 2
        %780 = vperm.xlu0 %779, %v325
        %v781 = vpop.permute.xlu0 %780
        %783 = vset.pattern.permute.xlu0 2
        %784 = vperm.xlu0 %783, %v326
        %v785 = vpop.permute.xlu0 %784
        %787 = vset.pattern.permute.xlu0 2
        %788 = vperm.xlu0 %787, %v327
        %v789 = vpop.permute.xlu0 %788
        %791 = vset.pattern.permute.xlu0 2
        %792 = vperm.xlu0 %791, %v328
        %v793 = vpop.permute.xlu0 %792
        %795 = vset.pattern.permute.xlu0 2
        %796 = vperm.xlu0 %795, %v329
        %v797 = vpop.permute.xlu0 %796
        %v799 = vlaneseq
        %v800 = vshrl.u32 %v799, 7
        %v801 = vsub.s32 2, %v800
        %v802 = vrot.slane %v313, %v801
        %v803 = vlaneseq
        %v804 = vshrl.u32 %v803, 7
        %v805 = vsub.s32 6, %v804
        %v806 = vrot.slane %v313, %v805
        %v809 = vlaneseq
        %v810 = vshrl.u32 %v809, 7
        %v811 = vsub.s32 2, %v810
        %v812 = vrot.slane %v802, %v811
        %v813 = vlaneseq
        %v814 = vshrl.u32 %v813, 7
        %v815 = vsub.s32 2, %v814
        %v816 = vrot.slane %v806, %v815
        %v817 = vmul.f32 %v737, %v812
        %v818 = vmul.f32 %v737, %v816
        %v819 = vmul.f32 %v741, %v812
        %v820 = vmul.f32 %v741, %v816
        %v821 = vmul.f32 %v745, %v812
        %v822 = vmul.f32 %v745, %v816
        %v823 = vmul.f32 %v749, %v812
        %v824 = vmul.f32 %v749, %v816
        %v825 = vmul.f32 %v753, %v812
        %v826 = vmul.f32 %v753, %v816
        %v827 = vmul.f32 %v757, %v812
        %v828 = vmul.f32 %v757, %v816
        %v829 = vmul.f32 %v761, %v812
        %v830 = vmul.f32 %v761, %v816
        %v831 = vmul.f32 %v765, %v812
        %v832 = vmul.f32 %v765, %v816
        %v833 = vmul.f32 %v769, %v812
        %v834 = vmul.f32 %v769, %v816
        %v835 = vmul.f32 %v773, %v812
        %v836 = vmul.f32 %v773, %v816
        %v837 = vmul.f32 %v777, %v812
        %v838 = vmul.f32 %v777, %v816
        %v839 = vmul.f32 %v781, %v812
        %v840 = vmul.f32 %v781, %v816
        %v841 = vmul.f32 %v785, %v812
        %v842 = vmul.f32 %v785, %v816
        %v843 = vmul.f32 %v789, %v812
        %v844 = vmul.f32 %v789, %v816
        %v845 = vmul.f32 %v793, %v812
        %v846 = vmul.f32 %v793, %v816
        %v847 = vmul.f32 %v797, %v812
        %v848 = vmul.f32 %v797, %v816
        %v849 = vadd.f32 %v703, %v817
        %v850 = vadd.f32 %v704, %v818
        %v851 = vadd.f32 %v705, %v819
        %v852 = vadd.f32 %v706, %v820
        %v853 = vadd.f32 %v707, %v821
        %v854 = vadd.f32 %v708, %v822
        %v855 = vadd.f32 %v709, %v823
        %v856 = vadd.f32 %v710, %v824
        %v857 = vadd.f32 %v711, %v825
        %v858 = vadd.f32 %v712, %v826
        %v859 = vadd.f32 %v713, %v827
        %v860 = vadd.f32 %v714, %v828
        %v861 = vadd.f32 %v715, %v829
        %v862 = vadd.f32 %v716, %v830
        %v863 = vadd.f32 %v717, %v831
        %v864 = vadd.f32 %v718, %v832
        %v865 = vadd.f32 %v719, %v833
        %v866 = vadd.f32 %v720, %v834
        %v867 = vadd.f32 %v721, %v835
        %v868 = vadd.f32 %v722, %v836
        %v869 = vadd.f32 %v723, %v837
        %v870 = vadd.f32 %v724, %v838
        %v871 = vadd.f32 %v725, %v839
        %v872 = vadd.f32 %v726, %v840
        %v873 = vadd.f32 %v727, %v841
        %v874 = vadd.f32 %v728, %v842
        %v875 = vadd.f32 %v729, %v843
        %v876 = vadd.f32 %v730, %v844
        %v877 = vadd.f32 %v731, %v845
        %v878 = vadd.f32 %v732, %v846
        %v879 = vadd.f32 %v733, %v847
        %v880 = vadd.f32 %v734, %v848
        %v881 = vsub.f32 0.0, %v849
        %v882 = vsub.f32 0.0, %v850
        %v883 = vsub.f32 0.0, %v851
        %v884 = vsub.f32 0.0, %v852
        %v885 = vsub.f32 0.0, %v853
        %v886 = vsub.f32 0.0, %v854
        %v887 = vsub.f32 0.0, %v855
        %v888 = vsub.f32 0.0, %v856
        %v889 = vsub.f32 0.0, %v857
        %v890 = vsub.f32 0.0, %v858
        %v891 = vsub.f32 0.0, %v859
        %v892 = vsub.f32 0.0, %v860
        %v893 = vsub.f32 0.0, %v861
        %v894 = vsub.f32 0.0, %v862
        %v895 = vsub.f32 0.0, %v863
        %v896 = vsub.f32 0.0, %v864
        %v897 = vsub.f32 0.0, %v865
        %v898 = vsub.f32 0.0, %v866
        %v899 = vsub.f32 0.0, %v867
        %v900 = vsub.f32 0.0, %v868
        %v901 = vsub.f32 0.0, %v869
        %v902 = vsub.f32 0.0, %v870
        %v903 = vsub.f32 0.0, %v871
        %v904 = vsub.f32 0.0, %v872
        %v905 = vsub.f32 0.0, %v873
        %v906 = vsub.f32 0.0, %v874
        %v907 = vsub.f32 0.0, %v875
        %v908 = vsub.f32 0.0, %v876
        %v909 = vsub.f32 0.0, %v877
        %v910 = vsub.f32 0.0, %v878
        %v911 = vsub.f32 0.0, %v879
        %v912 = vsub.f32 0.0, %v880
        %v913 = vmul.f32 %v881, 1.442695
        %v914 = vpow.pop %v913
        %v915 = vmul.f32 %v882, 1.442695
        %v916 = vpow.pop %v915
        %v917 = vmul.f32 %v883, 1.442695
        %v918 = vpow.pop %v917
        %v919 = vmul.f32 %v884, 1.442695
        %v920 = vpow.pop %v919
        %v921 = vmul.f32 %v885, 1.442695
        %v922 = vpow.pop %v921
        %v923 = vmul.f32 %v886, 1.442695
        %v924 = vpow.pop %v923
        %v925 = vmul.f32 %v887, 1.442695
        %v926 = vpow.pop %v925
        %v927 = vmul.f32 %v888, 1.442695
        %v928 = vpow.pop %v927
        %v929 = vmul.f32 %v889, 1.442695
        %v930 = vpow.pop %v929
        %v931 = vmul.f32 %v890, 1.442695
        %v932 = vpow.pop %v931
        %v933 = vmul.f32 %v891, 1.442695
        %v934 = vpow.pop %v933
        %v935 = vmul.f32 %v892, 1.442695
        %v936 = vpow.pop %v935
        %v937 = vmul.f32 %v893, 1.442695
        %v938 = vpow.pop %v937
        %v939 = vmul.f32 %v894, 1.442695
        %v940 = vpow.pop %v939
        %v941 = vmul.f32 %v895, 1.442695
        %v942 = vpow.pop %v941
        %v943 = vmul.f32 %v896, 1.442695
        %v944 = vpow.pop %v943
        %v945 = vmul.f32 %v897, 1.442695
        %v946 = vpow.pop %v945
        %v947 = vmul.f32 %v898, 1.442695
        %v948 = vpow.pop %v947
        %v949 = vmul.f32 %v899, 1.442695
        %v950 = vpow.pop %v949
        %v951 = vmul.f32 %v900, 1.442695
        %v952 = vpow.pop %v951
        %v953 = vmul.f32 %v901, 1.442695
        %v954 = vpow.pop %v953
        %v955 = vmul.f32 %v902, 1.442695
        %v956 = vpow.pop %v955
        %v957 = vmul.f32 %v903, 1.442695
        %v958 = vpow.pop %v957
        %v959 = vmul.f32 %v904, 1.442695
        %v960 = vpow.pop %v959
        %v961 = vmul.f32 %v905, 1.442695
        %v962 = vpow.pop %v961
        %v963 = vmul.f32 %v906, 1.442695
        %v964 = vpow.pop %v963
        %v965 = vmul.f32 %v907, 1.442695
        %v966 = vpow.pop %v965
        %v967 = vmul.f32 %v908, 1.442695
        %v968 = vpow.pop %v967
        %v969 = vmul.f32 %v909, 1.442695
        %v970 = vpow.pop %v969
        %v971 = vmul.f32 %v910, 1.442695
        %v972 = vpow.pop %v971
        %v973 = vmul.f32 %v911, 1.442695
        %v974 = vpow.pop %v973
        %v975 = vmul.f32 %v912, 1.442695
        %v976 = vpow.pop %v975
        %v977 = vadd.f32 %v914, 1.0
        %v978 = vadd.f32 %v916, 1.0
        %v979 = vadd.f32 %v918, 1.0
        %v980 = vadd.f32 %v920, 1.0
        %v981 = vadd.f32 %v922, 1.0
        %v982 = vadd.f32 %v924, 1.0
        %v983 = vadd.f32 %v926, 1.0
        %v984 = vadd.f32 %v928, 1.0
        %v985 = vadd.f32 %v930, 1.0
        %v986 = vadd.f32 %v932, 1.0
        %v987 = vadd.f32 %v934, 1.0
        %v988 = vadd.f32 %v936, 1.0
        %v989 = vadd.f32 %v938, 1.0
        %v990 = vadd.f32 %v940, 1.0
        %v991 = vadd.f32 %v942, 1.0
        %v992 = vadd.f32 %v944, 1.0
        %v993 = vadd.f32 %v946, 1.0
        %v994 = vadd.f32 %v948, 1.0
        %v995 = vadd.f32 %v950, 1.0
        %v996 = vadd.f32 %v952, 1.0
        %v997 = vadd.f32 %v954, 1.0
        %v998 = vadd.f32 %v956, 1.0
        %v999 = vadd.f32 %v958, 1.0
        %v1000 = vadd.f32 %v960, 1.0
        %v1001 = vadd.f32 %v962, 1.0
        %v1002 = vadd.f32 %v964, 1.0
        %v1003 = vadd.f32 %v966, 1.0
        %v1004 = vadd.f32 %v968, 1.0
        %v1005 = vadd.f32 %v970, 1.0
        %v1006 = vadd.f32 %v972, 1.0
        %v1007 = vadd.f32 %v974, 1.0
        %v1008 = vadd.f32 %v976, 1.0
        %v1009 = vrcp.pop %v977
        %v1010 = vrcp.pop %v978
        %v1011 = vrcp.pop %v979
        %v1012 = vrcp.pop %v980
        %v1013 = vrcp.pop %v981
        %v1014 = vrcp.pop %v982
        %v1015 = vrcp.pop %v983
        %v1016 = vrcp.pop %v984
        %v1017 = vrcp.pop %v985
        %v1018 = vrcp.pop %v986
        %v1019 = vrcp.pop %v987
        %v1020 = vrcp.pop %v988
        %v1021 = vrcp.pop %v989
        %v1022 = vrcp.pop %v990
        %v1023 = vrcp.pop %v991
        %v1024 = vrcp.pop %v992
        %v1025 = vrcp.pop %v993
        %v1026 = vrcp.pop %v994
        %v1027 = vrcp.pop %v995
        %v1028 = vrcp.pop %v996
        %v1029 = vrcp.pop %v997
        %v1030 = vrcp.pop %v998
        %v1031 = vrcp.pop %v999
        %v1032 = vrcp.pop %v1000
        %v1033 = vrcp.pop %v1001
        %v1034 = vrcp.pop %v1002
        %v1035 = vrcp.pop %v1003
        %v1036 = vrcp.pop %v1004
        %v1037 = vrcp.pop %v1005
        %v1038 = vrcp.pop %v1006
        %v1039 = vrcp.pop %v1007
        %v1040 = vrcp.pop %v1008
        %v1041 = vmul.f32 %v849, %v1009
        %v1042 = vmul.f32 %v850, %v1010
        %v1043 = vmul.f32 %v851, %v1011
        %v1044 = vmul.f32 %v852, %v1012
        %v1045 = vmul.f32 %v853, %v1013
        %v1046 = vmul.f32 %v854, %v1014
        %v1047 = vmul.f32 %v855, %v1015
        %v1048 = vmul.f32 %v856, %v1016
        %v1049 = vmul.f32 %v857, %v1017
        %v1050 = vmul.f32 %v858, %v1018
        %v1051 = vmul.f32 %v859, %v1019
        %v1052 = vmul.f32 %v860, %v1020
        %v1053 = vmul.f32 %v861, %v1021
        %v1054 = vmul.f32 %v862, %v1022
        %v1055 = vmul.f32 %v863, %v1023
        %v1056 = vmul.f32 %v864, %v1024
        %v1057 = vmul.f32 %v865, %v1025
        %v1058 = vmul.f32 %v866, %v1026
        %v1059 = vmul.f32 %v867, %v1027
        %v1060 = vmul.f32 %v868, %v1028
        %v1061 = vmul.f32 %v869, %v1029
        %v1062 = vmul.f32 %v870, %v1030
        %v1063 = vmul.f32 %v871, %v1031
        %v1064 = vmul.f32 %v872, %v1032
        %v1065 = vmul.f32 %v873, %v1033
        %v1066 = vmul.f32 %v874, %v1034
        %v1067 = vmul.f32 %v875, %v1035
        %v1068 = vmul.f32 %v876, %v1036
        %v1069 = vmul.f32 %v877, %v1037
        %v1070 = vmul.f32 %v878, %v1038
        %v1071 = vmul.f32 %v879, %v1039
        %v1072 = vmul.f32 %v880, %v1040
        %v1073 = vpack.c.bf16 %v1043, %v1041
        %v1074 = vpack.c.bf16 %v1044, %v1042
        %v1075 = vpack.c.bf16 %v1047, %v1045
        %v1076 = vpack.c.bf16 %v1048, %v1046
        %v1077 = vpack.c.bf16 %v1051, %v1049
        %v1078 = vpack.c.bf16 %v1052, %v1050
        %v1079 = vpack.c.bf16 %v1055, %v1053
        %v1080 = vpack.c.bf16 %v1056, %v1054
        %v1081 = vpack.c.bf16 %v1059, %v1057
        %v1082 = vpack.c.bf16 %v1060, %v1058
        %v1083 = vpack.c.bf16 %v1063, %v1061
        %v1084 = vpack.c.bf16 %v1064, %v1062
        %v1085 = vpack.c.bf16 %v1067, %v1065
        %v1086 = vpack.c.bf16 %v1068, %v1066
        %v1087 = vpack.c.bf16 %v1071, %v1069
        %v1088 = vpack.c.bf16 %v1072, %v1070
        %v1089 = vld [vmem:[%s3] sm:$0xf]
        %v1090 = vld [vmem:[%s3 + $0x4] sm:$0xf]
        %v1091 = vld [vmem:[%s3 + $0x8] sm:$0xf]
        %v1092 = vld [vmem:[%s3 + $0xc] sm:$0xf]
        %v1093 = vld [vmem:[%s3 + $0x10] sm:$0xf]
        %v1094 = vld [vmem:[%s3 + $0x14] sm:$0xf]
        %v1095 = vld [vmem:[%s3 + $0x18] sm:$0xf]
        %v1096 = vld [vmem:[%s3 + $0x1c] sm:$0xf]
        %v1097 = vld [vmem:[%s3 + $0x20] sm:$0xf]
        %v1098 = vld [vmem:[%s3 + $0x24] sm:$0xf]
        %v1099 = vld [vmem:[%s3 + $0x28] sm:$0xf]
        %v1100 = vld [vmem:[%s3 + $0x2c] sm:$0xf]
        %v1101 = vld [vmem:[%s3 + $0x30] sm:$0xf]
        %v1102 = vld [vmem:[%s3 + $0x34] sm:$0xf]
        %v1103 = vld [vmem:[%s3 + $0x38] sm:$0xf]
        %v1104 = vld [vmem:[%s3 + $0x3c] sm:$0xf]
        %1105 = vset.pattern.permute.xlu0 1
        %1106 = vperm.xlu0 %1105, %v330
        %v1107 = vpop.permute.xlu0 %1106
        %1109 = vset.pattern.permute.xlu0 1
        %1110 = vperm.xlu0 %1109, %v331
        %v1111 = vpop.permute.xlu0 %1110
        %1113 = vset.pattern.permute.xlu0 1
        %1114 = vperm.xlu0 %1113, %v332
        %v1115 = vpop.permute.xlu0 %1114
        %1117 = vset.pattern.permute.xlu0 1
        %1118 = vperm.xlu0 %1117, %v333
        %v1119 = vpop.permute.xlu0 %1118
        %1121 = vset.pattern.permute.xlu0 1
        %1122 = vperm.xlu0 %1121, %v334
        %v1123 = vpop.permute.xlu0 %1122
        %1125 = vset.pattern.permute.xlu0 1
        %1126 = vperm.xlu0 %1125, %v335
        %v1127 = vpop.permute.xlu0 %1126
        %1129 = vset.pattern.permute.xlu0 1
        %1130 = vperm.xlu0 %1129, %v336
        %v1131 = vpop.permute.xlu0 %1130
        %1133 = vset.pattern.permute.xlu0 1
        %1134 = vperm.xlu0 %1133, %v337
        %v1135 = vpop.permute.xlu0 %1134
        %1137 = vset.pattern.permute.xlu0 1
        %1138 = vperm.xlu0 %1137, %v338
        %v1139 = vpop.permute.xlu0 %1138
        %1141 = vset.pattern.permute.xlu0 1
        %1142 = vperm.xlu0 %1141, %v339
        %v1143 = vpop.permute.xlu0 %1142
        %1145 = vset.pattern.permute.xlu0 1
        %1146 = vperm.xlu0 %1145, %v340
        %v1147 = vpop.permute.xlu0 %1146
        %1149 = vset.pattern.permute.xlu0 1
        %1150 = vperm.xlu0 %1149, %v341
        %v1151 = vpop.permute.xlu0 %1150
        %1153 = vset.pattern.permute.xlu0 1
        %1154 = vperm.xlu0 %1153, %v342
        %v1155 = vpop.permute.xlu0 %1154
        %1157 = vset.pattern.permute.xlu0 1
        %1158 = vperm.xlu0 %1157, %v343
        %v1159 = vpop.permute.xlu0 %1158
        %1161 = vset.pattern.permute.xlu0 1
        %1162 = vperm.xlu0 %1161, %v344
        %v1163 = vpop.permute.xlu0 %1162
        %1165 = vset.pattern.permute.xlu0 1
        %1166 = vperm.xlu0 %1165, %v345
        %v1167 = vpop.permute.xlu0 %1166
        %v1185 = vunpack.c.l.b16 %v1089
        %v1186 = vunpack.c.l.b16 %v1090
        %v1187 = vunpack.c.l.b16 %v1091
        %v1188 = vunpack.c.l.b16 %v1092
        %v1189 = vunpack.c.l.b16 %v1093
        %v1190 = vunpack.c.l.b16 %v1094
        %v1191 = vunpack.c.l.b16 %v1095
        %v1192 = vunpack.c.l.b16 %v1096
        %v1193 = vunpack.c.l.b16 %v1097
        %v1194 = vunpack.c.l.b16 %v1098
        %v1195 = vunpack.c.l.b16 %v1099
        %v1196 = vunpack.c.l.b16 %v1100
        %v1197 = vunpack.c.l.b16 %v1101
        %v1198 = vunpack.c.l.b16 %v1102
        %v1199 = vunpack.c.l.b16 %v1103
        %v1200 = vunpack.c.l.b16 %v1104
        %v1201 = vpack.c.b16 %v1186, %v1185
        %v1202 = vpack.c.b16 %v1188, %v1187
        %v1203 = vpack.c.b16 %v1190, %v1189
        %v1204 = vpack.c.b16 %v1192, %v1191
        %v1205 = vpack.c.b16 %v1194, %v1193
        %v1206 = vpack.c.b16 %v1196, %v1195
        %v1207 = vpack.c.b16 %v1198, %v1197
        %v1208 = vpack.c.b16 %v1200, %v1199
        %1217 = vmatprep.subr.bf16.mxu0 %v1074
        %1218 = vmatpush1.bf16.msra.mxu0 %v1073
        %1219 = vmatprep.subr.bf16.mxu0 %v1076
        %1220 = vmatpush1.bf16.msra.mxu0 %v1075
        %1221 = vmatprep.subr.bf16.mxu0 %v1078
        %1222 = vmatpush1.bf16.msra.mxu0 %v1077
        %1223 = vmatprep.subr.bf16.mxu0 %v1080
        %1224 = vmatpush1.bf16.msra.mxu0 %v1079
        %1225 = vmatprep.subr.bf16.mxu0 %v1082
        %1226 = vmatpush1.bf16.msra.mxu0 %v1081
        %1227 = vmatprep.subr.bf16.mxu0 %v1084
        %1228 = vmatpush1.bf16.msra.mxu0 %v1083
        %1229 = vmatprep.subr.bf16.mxu0 %v1086
        %1230 = vmatpush1.bf16.msra.mxu0 %v1085
        %1231 = vmatprep.subr.bf16.mxu0 %v1088
        %1232 = vmatpush1.bf16.msra.mxu0 %v1087
        %1233 = vmatprep.subr.bf16.mxu0 0
        %1234 = vmatpush1.bf16.msra.mxu0 0
        %1235 = vmatprep.subr.bf16.mxu0 0
        %1236 = vmatpush1.bf16.msra.mxu0 0
        %1237 = vmatprep.subr.bf16.mxu0 0
        %1238 = vmatpush1.bf16.msra.mxu0 0
        %1239 = vmatprep.subr.bf16.mxu0 0
        %1240 = vmatpush1.bf16.msra.mxu0 0
        %1241 = vmatprep.subr.bf16.mxu0 0
        %1242 = vmatpush1.bf16.msra.mxu0 0
        %1243 = vmatprep.subr.bf16.mxu0 0
        %1244 = vmatpush1.bf16.msra.mxu0 0
        %1245 = vmatprep.subr.bf16.mxu0 0
        %1246 = vmatpush1.bf16.msra.mxu0 0
        %1247 = vmatprep.subr.bf16.mxu0 0
        %1248 = vmatpush1.bf16.msra.mxu0 0
        %1249 = vmatprep.mubr.bf16.mxu0 0
        %1250 = vmatmul.mubr.bf16.gmra.mrb[0].mxu0 %v1201
        %v1251 = vpop.f32.mrb[0].mxu0
        %v1252 = vadd.f32 %v1107, %v1251
        %v1253 = vpop.f32.mrb[0].mxu0
        %v1254 = vadd.f32 %v1107, %v1253
        %v1255 = vpop.f32.mrb[0].mxu0
        %v1256 = vadd.f32 %v1111, %v1255
        %v1257 = vpop.f32.mrb[0].mxu0
        %v1258 = vadd.f32 %v1111, %v1257
        %1259 = vmatprep.mubr.bf16.mxu0 0
        %1260 = vmatmul.mubr.bf16.gmra.mrb[0].mxu0 %v1202
        %v1261 = vpop.f32.mrb[0].mxu0
        %v1262 = vadd.f32 %v1115, %v1261
        %v1263 = vpop.f32.mrb[0].mxu0
        %v1264 = vadd.f32 %v1115, %v1263
        %v1265 = vpop.f32.mrb[0].mxu0
        %v1266 = vadd.f32 %v1119, %v1265
        %v1267 = vpop.f32.mrb[0].mxu0
        %v1268 = vadd.f32 %v1119, %v1267
        %1269 = vmatprep.mubr.bf16.mxu0 0
        %1270 = vmatmul.mubr.bf16.gmra.mrb[0].mxu0 %v1203
        %v1271 = vpop.f32.mrb[0].mxu0
        %v1272 = vadd.f32 %v1123, %v1271
        %v1273 = vpop.f32.mrb[0].mxu0
        %v1274 = vadd.f32 %v1123, %v1273
        %v1275 = vpop.f32.mrb[0].mxu0
        %v1276 = vadd.f32 %v1127, %v1275
        %v1277 = vpop.f32.mrb[0].mxu0
        %v1278 = vadd.f32 %v1127, %v1277
        %1279 = vmatprep.mubr.bf16.mxu0 0
        %1280 = vmatmul.mubr.bf16.gmra.mrb[0].mxu0 %v1204
        %v1281 = vpop.f32.mrb[0].mxu0
        %v1282 = vadd.f32 %v1131, %v1281
        %v1283 = vpop.f32.mrb[0].mxu0
        %v1284 = vadd.f32 %v1131, %v1283
        %v1285 = vpop.f32.mrb[0].mxu0
        %v1286 = vadd.f32 %v1135, %v1285
        %v1287 = vpop.f32.mrb[0].mxu0
        %v1288 = vadd.f32 %v1135, %v1287
        %1289 = vmatprep.mubr.bf16.mxu0 0
        %1290 = vmatmul.mubr.bf16.gmra.mrb[0].mxu0 %v1205
        %v1291 = vpop.f32.mrb[0].mxu0
        %v1292 = vadd.f32 %v1139, %v1291
        %v1293 = vpop.f32.mrb[0].mxu0
        %v1294 = vadd.f32 %v1139, %v1293
        %v1295 = vpop.f32.mrb[0].mxu0
        %v1296 = vadd.f32 %v1143, %v1295
        %v1297 = vpop.f32.mrb[0].mxu0
        %v1298 = vadd.f32 %v1143, %v1297
        %1299 = vmatprep.mubr.bf16.mxu0 0
        %1300 = vmatmul.mubr.bf16.gmra.mrb[0].mxu0 %v1206
        %v1301 = vpop.f32.mrb[0].mxu0
        %v1302 = vadd.f32 %v1147, %v1301
        %v1303 = vpop.f32.mrb[0].mxu0
        %v1304 = vadd.f32 %v1147, %v1303
        %v1305 = vpop.f32.mrb[0].mxu0
        %v1306 = vadd.f32 %v1151, %v1305
        %v1307 = vpop.f32.mrb[0].mxu0
        %v1308 = vadd.f32 %v1151, %v1307
        %1309 = vmatprep.mubr.bf16.mxu0 0
        %1310 = vmatmul.mubr.bf16.gmra.mrb[0].mxu0 %v1207
        %v1311 = vpop.f32.mrb[0].mxu0
        %v1312 = vadd.f32 %v1155, %v1311
        %v1313 = vpop.f32.mrb[0].mxu0
        %v1314 = vadd.f32 %v1155, %v1313
        %v1315 = vpop.f32.mrb[0].mxu0
        %v1316 = vadd.f32 %v1159, %v1315
        %v1317 = vpop.f32.mrb[0].mxu0
        %v1318 = vadd.f32 %v1159, %v1317
        %1319 = vmatprep.mubr.bf16.mxu0 0
        %1320 = vmatmul.mubr.bf16.gmra.mrb[0].mxu0 %v1208
        %v1321 = vpop.f32.mrb[0].mxu0
        %v1322 = vadd.f32 %v1163, %v1321
        %v1323 = vpop.f32.mrb[0].mxu0
        %v1324 = vadd.f32 %v1163, %v1323
        %v1325 = vpop.f32.mrb[0].mxu0
        %v1326 = vadd.f32 %v1167, %v1325
        %v1327 = vpop.f32.mrb[0].mxu0
        %v1328 = vadd.f32 %v1167, %v1327
        %1329 = vdwg.mxu0
        %v1330 = vsub.f32 0.0, %v1252
        %v1331 = vsub.f32 0.0, %v1254
        %v1332 = vsub.f32 0.0, %v1256
        %v1333 = vsub.f32 0.0, %v1258
        %v1334 = vsub.f32 0.0, %v1262
        %v1335 = vsub.f32 0.0, %v1264
        %v1336 = vsub.f32 0.0, %v1266
        %v1337 = vsub.f32 0.0, %v1268
        %v1338 = vsub.f32 0.0, %v1272
        %v1339 = vsub.f32 0.0, %v1274
        %v1340 = vsub.f32 0.0, %v1276
        %v1341 = vsub.f32 0.0, %v1278
        %v1342 = vsub.f32 0.0, %v1282
        %v1343 = vsub.f32 0.0, %v1284
        %v1344 = vsub.f32 0.0, %v1286
        %v1345 = vsub.f32 0.0, %v1288
        %v1346 = vsub.f32 0.0, %v1292
        %v1347 = vsub.f32 0.0, %v1294
        %v1348 = vsub.f32 0.0, %v1296
        %v1349 = vsub.f32 0.0, %v1298
        %v1350 = vsub.f32 0.0, %v1302
        %v1351 = vsub.f32 0.0, %v1304
        %v1352 = vsub.f32 0.0, %v1306
        %v1353 = vsub.f32 0.0, %v1308
        %v1354 = vsub.f32 0.0, %v1312
        %v1355 = vsub.f32 0.0, %v1314
        %v1356 = vsub.f32 0.0, %v1316
        %v1357 = vsub.f32 0.0, %v1318
        %v1358 = vsub.f32 0.0, %v1322
        %v1359 = vsub.f32 0.0, %v1324
        %v1360 = vsub.f32 0.0, %v1326
        %v1361 = vsub.f32 0.0, %v1328
        %v1362 = vmul.f32 %v1330, 1.442695
        %v1363 = vpow.pop %v1362
        %v1364 = vmul.f32 %v1331, 1.442695
        %v1365 = vpow.pop %v1364
        %v1366 = vmul.f32 %v1332, 1.442695
        %v1367 = vpow.pop %v1366
        %v1368 = vmul.f32 %v1333, 1.442695
        %v1369 = vpow.pop %v1368
        %v1370 = vmul.f32 %v1334, 1.442695
        %v1371 = vpow.pop %v1370
        %v1372 = vmul.f32 %v1335, 1.442695
        %v1373 = vpow.pop %v1372
        %v1374 = vmul.f32 %v1336, 1.442695
        %v1375 = vpow.pop %v1374
        %v1376 = vmul.f32 %v1337, 1.442695
        %v1377 = vpow.pop %v1376
        %v1378 = vmul.f32 %v1338, 1.442695
        %v1379 = vpow.pop %v1378
        %v1380 = vmul.f32 %v1339, 1.442695
        %v1381 = vpow.pop %v1380
        %v1382 = vmul.f32 %v1340, 1.442695
        %v1383 = vpow.pop %v1382
        %v1384 = vmul.f32 %v1341, 1.442695
        %v1385 = vpow.pop %v1384
        %v1386 = vmul.f32 %v1342, 1.442695
        %v1387 = vpow.pop %v1386
        %v1388 = vmul.f32 %v1343, 1.442695
        %v1389 = vpow.pop %v1388
        %v1390 = vmul.f32 %v1344, 1.442695
        %v1391 = vpow.pop %v1390
        %v1392 = vmul.f32 %v1345, 1.442695
        %v1393 = vpow.pop %v1392
        %v1394 = vmul.f32 %v1346, 1.442695
        %v1395 = vpow.pop %v1394
        %v1396 = vmul.f32 %v1347, 1.442695
        %v1397 = vpow.pop %v1396
        %v1398 = vmul.f32 %v1348, 1.442695
        %v1399 = vpow.pop %v1398
        %v1400 = vmul.f32 %v1349, 1.442695
        %v1401 = vpow.pop %v1400
        %v1402 = vmul.f32 %v1350, 1.442695
        %v1403 = vpow.pop %v1402
        %v1404 = vmul.f32 %v1351, 1.442695
        %v1405 = vpow.pop %v1404
        %v1406 = vmul.f32 %v1352, 1.442695
        %v1407 = vpow.pop %v1406
        %v1408 = vmul.f32 %v1353, 1.442695
        %v1409 = vpow.pop %v1408
        %v1410 = vmul.f32 %v1354, 1.442695
        %v1411 = vpow.pop %v1410
        %v1412 = vmul.f32 %v1355, 1.442695
        %v1413 = vpow.pop %v1412
        %v1414 = vmul.f32 %v1356, 1.442695
        %v1415 = vpow.pop %v1414
        %v1416 = vmul.f32 %v1357, 1.442695
        %v1417 = vpow.pop %v1416
        %v1418 = vmul.f32 %v1358, 1.442695
        %v1419 = vpow.pop %v1418
        %v1420 = vmul.f32 %v1359, 1.442695
        %v1421 = vpow.pop %v1420
        %v1422 = vmul.f32 %v1360, 1.442695
        %v1423 = vpow.pop %v1422
        %v1424 = vmul.f32 %v1361, 1.442695
        %v1425 = vpow.pop %v1424
        %v1426 = vadd.f32 %v1363, 1.0
        %v1427 = vadd.f32 %v1365, 1.0
        %v1428 = vadd.f32 %v1367, 1.0
        %v1429 = vadd.f32 %v1369, 1.0
        %v1430 = vadd.f32 %v1371, 1.0
        %v1431 = vadd.f32 %v1373, 1.0
        %v1432 = vadd.f32 %v1375, 1.0
        %v1433 = vadd.f32 %v1377, 1.0
        %v1434 = vadd.f32 %v1379, 1.0
        %v1435 = vadd.f32 %v1381, 1.0
        %v1436 = vadd.f32 %v1383, 1.0
        %v1437 = vadd.f32 %v1385, 1.0
        %v1438 = vadd.f32 %v1387, 1.0
        %v1439 = vadd.f32 %v1389, 1.0
        %v1440 = vadd.f32 %v1391, 1.0
        %v1441 = vadd.f32 %v1393, 1.0
        %v1442 = vadd.f32 %v1395, 1.0
        %v1443 = vadd.f32 %v1397, 1.0
        %v1444 = vadd.f32 %v1399, 1.0
        %v1445 = vadd.f32 %v1401, 1.0
        %v1446 = vadd.f32 %v1403, 1.0
        %v1447 = vadd.f32 %v1405, 1.0
        %v1448 = vadd.f32 %v1407, 1.0
        %v1449 = vadd.f32 %v1409, 1.0
        %v1450 = vadd.f32 %v1411, 1.0
        %v1451 = vadd.f32 %v1413, 1.0
        %v1452 = vadd.f32 %v1415, 1.0
        %v1453 = vadd.f32 %v1417, 1.0
        %v1454 = vadd.f32 %v1419, 1.0
        %v1455 = vadd.f32 %v1421, 1.0
        %v1456 = vadd.f32 %v1423, 1.0
        %v1457 = vadd.f32 %v1425, 1.0
        %v1458 = vrcp.pop %v1426
        %v1459 = vrcp.pop %v1427
        %v1460 = vrcp.pop %v1428
        %v1461 = vrcp.pop %v1429
        %v1462 = vrcp.pop %v1430
        %v1463 = vrcp.pop %v1431
        %v1464 = vrcp.pop %v1432
        %v1465 = vrcp.pop %v1433
        %v1466 = vrcp.pop %v1434
        %v1467 = vrcp.pop %v1435
        %v1468 = vrcp.pop %v1436
        %v1469 = vrcp.pop %v1437
        %v1470 = vrcp.pop %v1438
        %v1471 = vrcp.pop %v1439
        %v1472 = vrcp.pop %v1440
        %v1473 = vrcp.pop %v1441
        %v1474 = vrcp.pop %v1442
        %v1475 = vrcp.pop %v1443
        %v1476 = vrcp.pop %v1444
        %v1477 = vrcp.pop %v1445
        %v1478 = vrcp.pop %v1446
        %v1479 = vrcp.pop %v1447
        %v1480 = vrcp.pop %v1448
        %v1481 = vrcp.pop %v1449
        %v1482 = vrcp.pop %v1450
        %v1483 = vrcp.pop %v1451
        %v1484 = vrcp.pop %v1452
        %v1485 = vrcp.pop %v1453
        %v1486 = vrcp.pop %v1454
        %v1487 = vrcp.pop %v1455
        %v1488 = vrcp.pop %v1456
        %v1489 = vrcp.pop %v1457
        %v1490 = vmul.f32 %v1252, %v1458
        %v1491 = vmul.f32 %v1254, %v1459
        %v1492 = vmul.f32 %v1256, %v1460
        %v1493 = vmul.f32 %v1258, %v1461
        %v1494 = vmul.f32 %v1262, %v1462
        %v1495 = vmul.f32 %v1264, %v1463
        %v1496 = vmul.f32 %v1266, %v1464
        %v1497 = vmul.f32 %v1268, %v1465
        %v1498 = vmul.f32 %v1272, %v1466
        %v1499 = vmul.f32 %v1274, %v1467
        %v1500 = vmul.f32 %v1276, %v1468
        %v1501 = vmul.f32 %v1278, %v1469
        %v1502 = vmul.f32 %v1282, %v1470
        %v1503 = vmul.f32 %v1284, %v1471
        %v1504 = vmul.f32 %v1286, %v1472
        %v1505 = vmul.f32 %v1288, %v1473
        %v1506 = vmul.f32 %v1292, %v1474
        %v1507 = vmul.f32 %v1294, %v1475
        %v1508 = vmul.f32 %v1296, %v1476
        %v1509 = vmul.f32 %v1298, %v1477
        %v1510 = vmul.f32 %v1302, %v1478
        %v1511 = vmul.f32 %v1304, %v1479
        %v1512 = vmul.f32 %v1306, %v1480
        %v1513 = vmul.f32 %v1308, %v1481
        %v1514 = vmul.f32 %v1312, %v1482
        %v1515 = vmul.f32 %v1314, %v1483
        %v1516 = vmul.f32 %v1316, %v1484
        %v1517 = vmul.f32 %v1318, %v1485
        %v1518 = vmul.f32 %v1322, %v1486
        %v1519 = vmul.f32 %v1324, %v1487
        %v1520 = vmul.f32 %v1326, %v1488
        %v1521 = vmul.f32 %v1328, %v1489
        %v1522 = vpack.c.bf16 %v1492, %v1490
        %v1523 = vpack.c.bf16 %v1493, %v1491
        %v1524 = vpack.c.bf16 %v1496, %v1494
        %v1525 = vpack.c.bf16 %v1497, %v1495
        %v1526 = vpack.c.bf16 %v1500, %v1498
        %v1527 = vpack.c.bf16 %v1501, %v1499
        %v1528 = vpack.c.bf16 %v1504, %v1502
        %v1529 = vpack.c.bf16 %v1505, %v1503
        %v1530 = vpack.c.bf16 %v1508, %v1506
        %v1531 = vpack.c.bf16 %v1509, %v1507
        %v1532 = vpack.c.bf16 %v1512, %v1510
        %v1533 = vpack.c.bf16 %v1513, %v1511
        %v1534 = vpack.c.bf16 %v1516, %v1514
        %v1535 = vpack.c.bf16 %v1517, %v1515
        %v1536 = vpack.c.bf16 %v1520, %v1518
        %v1537 = vpack.c.bf16 %v1521, %v1519
        %v1538 = vld [vmem:[#allocation5] sm:$0xf]
        %v1539 = vld [vmem:[#allocation5 + $0x4] sm:$0xf]
        %v1540 = vld [vmem:[#allocation5 + $0x8] sm:$0xf]
        %v1541 = vld [vmem:[#allocation5 + $0xc] sm:$0xf]
        %v1542 = vld [vmem:[#allocation5 + $0x10] sm:$0xf]
        %v1543 = vld [vmem:[#allocation5 + $0x14] sm:$0xf]
        %v1544 = vld [vmem:[#allocation5 + $0x18] sm:$0xf]
        %v1545 = vld [vmem:[#allocation5 + $0x1c] sm:$0xf]
        %v1546 = vld [vmem:[#allocation5 + $0x20] sm:$0xf]
        %v1547 = vld [vmem:[#allocation5 + $0x24] sm:$0xf]
        %v1548 = vld [vmem:[#allocation5 + $0x28] sm:$0xf]
        %v1549 = vld [vmem:[#allocation5 + $0x2c] sm:$0xf]
        %v1550 = vld [vmem:[#allocation5 + $0x30] sm:$0xf]
        %v1551 = vld [vmem:[#allocation5 + $0x34] sm:$0xf]
        %v1552 = vld [vmem:[#allocation5 + $0x38] sm:$0xf]
        %v1553 = vld [vmem:[#allocation5 + $0x3c] sm:$0xf]
        %1554 = vset.pattern.permute.xlu0 2
        %1555 = vperm.xlu0 %1554, %v330
        %v1556 = vpop.permute.xlu0 %1555
        %1558 = vset.pattern.permute.xlu0 2
        %1559 = vperm.xlu0 %1558, %v331
        %v1560 = vpop.permute.xlu0 %1559
        %1562 = vset.pattern.permute.xlu0 2
        %1563 = vperm.xlu0 %1562, %v332
        %v1564 = vpop.permute.xlu0 %1563
        %1566 = vset.pattern.permute.xlu0 2
        %1567 = vperm.xlu0 %1566, %v333
        %v1568 = vpop.permute.xlu0 %1567
        %1570 = vset.pattern.permute.xlu0 2
        %1571 = vperm.xlu0 %1570, %v334
        %v1572 = vpop.permute.xlu0 %1571
        %1574 = vset.pattern.permute.xlu0 2
        %1575 = vperm.xlu0 %1574, %v335
        %v1576 = vpop.permute.xlu0 %1575
        %1578 = vset.pattern.permute.xlu0 2
        %1579 = vperm.xlu0 %1578, %v336
        %v1580 = vpop.permute.xlu0 %1579
        %1582 = vset.pattern.permute.xlu0 2
        %1583 = vperm.xlu0 %1582, %v337
        %v1584 = vpop.permute.xlu0 %1583
        %1586 = vset.pattern.permute.xlu0 2
        %1587 = vperm.xlu0 %1586, %v338
        %v1588 = vpop.permute.xlu0 %1587
        %1590 = vset.pattern.permute.xlu0 2
        %1591 = vperm.xlu0 %1590, %v339
        %v1592 = vpop.permute.xlu0 %1591
        %1594 = vset.pattern.permute.xlu0 2
        %1595 = vperm.xlu0 %1594, %v340
        %v1596 = vpop.permute.xlu0 %1595
        %1598 = vset.pattern.permute.xlu0 2
        %1599 = vperm.xlu0 %1598, %v341
        %v1600 = vpop.permute.xlu0 %1599
        %1602 = vset.pattern.permute.xlu0 2
        %1603 = vperm.xlu0 %1602, %v342
        %v1604 = vpop.permute.xlu0 %1603
        %1606 = vset.pattern.permute.xlu0 2
        %1607 = vperm.xlu0 %1606, %v343
        %v1608 = vpop.permute.xlu0 %1607
        %1610 = vset.pattern.permute.xlu0 2
        %1611 = vperm.xlu0 %1610, %v344
        %v1612 = vpop.permute.xlu0 %1611
        %1614 = vset.pattern.permute.xlu0 2
        %1615 = vperm.xlu0 %1614, %v345
        %v1616 = vpop.permute.xlu0 %1615
        %v1634 = vunpack.c.l.b16 %v1538
        %v1635 = vunpack.c.l.b16 %v1539
        %v1636 = vunpack.c.l.b16 %v1540
        %v1637 = vunpack.c.l.b16 %v1541
        %v1638 = vunpack.c.l.b16 %v1542
        %v1639 = vunpack.c.l.b16 %v1543
        %v1640 = vunpack.c.l.b16 %v1544
        %v1641 = vunpack.c.l.b16 %v1545
        %v1642 = vunpack.c.l.b16 %v1546
        %v1643 = vunpack.c.l.b16 %v1547
        %v1644 = vunpack.c.l.b16 %v1548
        %v1645 = vunpack.c.l.b16 %v1549
        %v1646 = vunpack.c.l.b16 %v1550
        %v1647 = vunpack.c.l.b16 %v1551
        %v1648 = vunpack.c.l.b16 %v1552
        %v1649 = vunpack.c.l.b16 %v1553
        %v1650 = vpack.c.b16 %v1635, %v1634
        %v1651 = vpack.c.b16 %v1637, %v1636
        %v1652 = vpack.c.b16 %v1639, %v1638
        %v1653 = vpack.c.b16 %v1641, %v1640
        %v1654 = vpack.c.b16 %v1643, %v1642
        %v1655 = vpack.c.b16 %v1645, %v1644
        %v1656 = vpack.c.b16 %v1647, %v1646
        %v1657 = vpack.c.b16 %v1649, %v1648
        %1666 = vmatprep.subr.bf16.mxu0 %v1523
        %1667 = vmatpush1.bf16.msra.mxu0 %v1522
        %1668 = vmatprep.subr.bf16.mxu0 %v1525
        %1669 = vmatpush1.bf16.msra.mxu0 %v1524
        %1670 = vmatprep.subr.bf16.mxu0 %v1527
        %1671 = vmatpush1.bf16.msra.mxu0 %v1526
        %1672 = vmatprep.subr.bf16.mxu0 %v1529
        %1673 = vmatpush1.bf16.msra.mxu0 %v1528
        %1674 = vmatprep.subr.bf16.mxu0 %v1531
        %1675 = vmatpush1.bf16.msra.mxu0 %v1530
        %1676 = vmatprep.subr.bf16.mxu0 %v1533
        %1677 = vmatpush1.bf16.msra.mxu0 %v1532
        %1678 = vmatprep.subr.bf16.mxu0 %v1535
        %1679 = vmatpush1.bf16.msra.mxu0 %v1534
        %1680 = vmatprep.subr.bf16.mxu0 %v1537
        %1681 = vmatpush1.bf16.msra.mxu0 %v1536
        %1682 = vmatprep.subr.bf16.mxu0 0
        %1683 = vmatpush1.bf16.msra.mxu0 0
        %1684 = vmatprep.subr.bf16.mxu0 0
        %1685 = vmatpush1.bf16.msra.mxu0 0
        %1686 = vmatprep.subr.bf16.mxu0 0
        %1687 = vmatpush1.bf16.msra.mxu0 0
        %1688 = vmatprep.subr.bf16.mxu0 0
        %1689 = vmatpush1.bf16.msra.mxu0 0
        %1690 = vmatprep.subr.bf16.mxu0 0
        %1691 = vmatpush1.bf16.msra.mxu0 0
        %1692 = vmatprep.subr.bf16.mxu0 0
        %1693 = vmatpush1.bf16.msra.mxu0 0
        %1694 = vmatprep.subr.bf16.mxu0 0
        %1695 = vmatpush1.bf16.msra.mxu0 0
        %1696 = vmatprep.subr.bf16.mxu0 0
        %1697 = vmatpush1.bf16.msra.mxu0 0
        %1698 = vmatprep.mubr.bf16.mxu0 0
        %1699 = vmatmul.mubr.bf16.gmra.mrb[0].mxu0 %v1650
        %v1700 = vpop.f32.mrb[0].mxu0
        %v1701 = vadd.f32 %v1556, %v1700
        %v1702 = vpop.f32.mrb[0].mxu0
        %v1703 = vadd.f32 %v1556, %v1702
        %v1704 = vpop.f32.mrb[0].mxu0
        %v1705 = vadd.f32 %v1560, %v1704
        %v1706 = vpop.f32.mrb[0].mxu0
        %v1707 = vadd.f32 %v1560, %v1706
        %1708 = vmatprep.mubr.bf16.mxu0 0
        %1709 = vmatmul.mubr.bf16.gmra.mrb[0].mxu0 %v1651
        %v1710 = vpop.f32.mrb[0].mxu0
        %v1711 = vadd.f32 %v1564, %v1710
        %v1712 = vpop.f32.mrb[0].mxu0
        %v1713 = vadd.f32 %v1564, %v1712
        %v1714 = vpop.f32.mrb[0].mxu0
        %v1715 = vadd.f32 %v1568, %v1714
        %v1716 = vpop.f32.mrb[0].mxu0
        %v1717 = vadd.f32 %v1568, %v1716
        %1718 = vmatprep.mubr.bf16.mxu0 0
        %1719 = vmatmul.mubr.bf16.gmra.mrb[0].mxu0 %v1652
        %v1720 = vpop.f32.mrb[0].mxu0
        %v1721 = vadd.f32 %v1572, %v1720
        %v1722 = vpop.f32.mrb[0].mxu0
        %v1723 = vadd.f32 %v1572, %v1722
        %v1724 = vpop.f32.mrb[0].mxu0
        %v1725 = vadd.f32 %v1576, %v1724
        %v1726 = vpop.f32.mrb[0].mxu0
        %v1727 = vadd.f32 %v1576, %v1726
        %1728 = vmatprep.mubr.bf16.mxu0 0
        %1729 = vmatmul.mubr.bf16.gmra.mrb[0].mxu0 %v1653
        %v1730 = vpop.f32.mrb[0].mxu0
        %v1731 = vadd.f32 %v1580, %v1730
        %v1732 = vpop.f32.mrb[0].mxu0
        %v1733 = vadd.f32 %v1580, %v1732
        %v1734 = vpop.f32.mrb[0].mxu0
        %v1735 = vadd.f32 %v1584, %v1734
        %v1736 = vpop.f32.mrb[0].mxu0
        %v1737 = vadd.f32 %v1584, %v1736
        %1738 = vmatprep.mubr.bf16.mxu0 0
        %1739 = vmatmul.mubr.bf16.gmra.mrb[0].mxu0 %v1654
        %v1740 = vpop.f32.mrb[0].mxu0
        %v1741 = vadd.f32 %v1588, %v1740
        %v1742 = vpop.f32.mrb[0].mxu0
        %v1743 = vadd.f32 %v1588, %v1742
        %v1744 = vpop.f32.mrb[0].mxu0
        %v1745 = vadd.f32 %v1592, %v1744
        %v1746 = vpop.f32.mrb[0].mxu0
        %v1747 = vadd.f32 %v1592, %v1746
        %1748 = vmatprep.mubr.bf16.mxu0 0
        %1749 = vmatmul.mubr.bf16.gmra.mrb[0].mxu0 %v1655
        %v1750 = vpop.f32.mrb[0].mxu0
        %v1751 = vadd.f32 %v1596, %v1750
        %v1752 = vpop.f32.mrb[0].mxu0
        %v1753 = vadd.f32 %v1596, %v1752
        %v1754 = vpop.f32.mrb[0].mxu0
        %v1755 = vadd.f32 %v1600, %v1754
        %v1756 = vpop.f32.mrb[0].mxu0
        %v1757 = vadd.f32 %v1600, %v1756
        %1758 = vmatprep.mubr.bf16.mxu0 0
        %1759 = vmatmul.mubr.bf16.gmra.mrb[0].mxu0 %v1656
        %v1760 = vpop.f32.mrb[0].mxu0
        %v1761 = vadd.f32 %v1604, %v1760
        %v1762 = vpop.f32.mrb[0].mxu0
        %v1763 = vadd.f32 %v1604, %v1762
        %v1764 = vpop.f32.mrb[0].mxu0
        %v1765 = vadd.f32 %v1608, %v1764
        %v1766 = vpop.f32.mrb[0].mxu0
        %v1767 = vadd.f32 %v1608, %v1766
        %1768 = vmatprep.mubr.bf16.mxu0 0
        %1769 = vmatmul.mubr.bf16.gmra.mrb[0].mxu0 %v1657
        %v1770 = vpop.f32.mrb[0].mxu0
        %v1771 = vadd.f32 %v1612, %v1770
        %v1772 = vpop.f32.mrb[0].mxu0
        %v1773 = vadd.f32 %v1612, %v1772
        %v1774 = vpop.f32.mrb[0].mxu0
        %v1775 = vadd.f32 %v1616, %v1774
        %v1776 = vpop.f32.mrb[0].mxu0
        %v1777 = vadd.f32 %v1616, %v1776
        %1778 = vdwg.mxu0
        %v1779 = vadd.f32 %v1041, %v1701
        %v1780 = vadd.f32 %v1042, %v1703
        %v1781 = vadd.f32 %v1043, %v1705
        %v1782 = vadd.f32 %v1044, %v1707
        %v1783 = vadd.f32 %v1045, %v1711
        %v1784 = vadd.f32 %v1046, %v1713
        %v1785 = vadd.f32 %v1047, %v1715
        %v1786 = vadd.f32 %v1048, %v1717
        %v1787 = vadd.f32 %v1049, %v1721
        %v1788 = vadd.f32 %v1050, %v1723
        %v1789 = vadd.f32 %v1051, %v1725
        %v1790 = vadd.f32 %v1052, %v1727
        %v1791 = vadd.f32 %v1053, %v1731
        %v1792 = vadd.f32 %v1054, %v1733
        %v1793 = vadd.f32 %v1055, %v1735
        %v1794 = vadd.f32 %v1056, %v1737
        %v1795 = vadd.f32 %v1057, %v1741
        %v1796 = vadd.f32 %v1058, %v1743
        %v1797 = vadd.f32 %v1059, %v1745
        %v1798 = vadd.f32 %v1060, %v1747
        %v1799 = vadd.f32 %v1061, %v1751
        %v1800 = vadd.f32 %v1062, %v1753
        %v1801 = vadd.f32 %v1063, %v1755
        %v1802 = vadd.f32 %v1064, %v1757
        %v1803 = vadd.f32 %v1065, %v1761
        %v1804 = vadd.f32 %v1066, %v1763
        %v1805 = vadd.f32 %v1067, %v1765
        %v1806 = vadd.f32 %v1068, %v1767
        %v1807 = vadd.f32 %v1069, %v1771
        %v1808 = vadd.f32 %v1070, %v1773
        %v1809 = vadd.f32 %v1071, %v1775
        %v1810 = vadd.f32 %v1072, %v1777
        %v1811 = vsub.f32 0.0, %v1779
        %v1812 = vsub.f32 0.0, %v1780
        %v1813 = vsub.f32 0.0, %v1781
        %v1814 = vsub.f32 0.0, %v1782
        %v1815 = vsub.f32 0.0, %v1783
        %v1816 = vsub.f32 0.0, %v1784
        %v1817 = vsub.f32 0.0, %v1785
        %v1818 = vsub.f32 0.0, %v1786
        %v1819 = vsub.f32 0.0, %v1787
        %v1820 = vsub.f32 0.0, %v1788
        %v1821 = vsub.f32 0.0, %v1789
        %v1822 = vsub.f32 0.0, %v1790
        %v1823 = vsub.f32 0.0, %v1791
        %v1824 = vsub.f32 0.0, %v1792
        %v1825 = vsub.f32 0.0, %v1793
        %v1826 = vsub.f32 0.0, %v1794
        %v1827 = vsub.f32 0.0, %v1795
        %v1828 = vsub.f32 0.0, %v1796
        %v1829 = vsub.f32 0.0, %v1797
        %v1830 = vsub.f32 0.0, %v1798
        %v1831 = vsub.f32 0.0, %v1799
        %v1832 = vsub.f32 0.0, %v1800
        %v1833 = vsub.f32 0.0, %v1801
        %v1834 = vsub.f32 0.0, %v1802
        %v1835 = vsub.f32 0.0, %v1803
        %v1836 = vsub.f32 0.0, %v1804
        %v1837 = vsub.f32 0.0, %v1805
        %v1838 = vsub.f32 0.0, %v1806
        %v1839 = vsub.f32 0.0, %v1807
        %v1840 = vsub.f32 0.0, %v1808
        %v1841 = vsub.f32 0.0, %v1809
        %v1842 = vsub.f32 0.0, %v1810
        %v1843 = vmul.f32 %v1811, 1.442695
        %v1844 = vpow.pop %v1843
        %v1845 = vmul.f32 %v1812, 1.442695
        %v1846 = vpow.pop %v1845
        %v1847 = vmul.f32 %v1813, 1.442695
        %v1848 = vpow.pop %v1847
        %v1849 = vmul.f32 %v1814, 1.442695
        %v1850 = vpow.pop %v1849
        %v1851 = vmul.f32 %v1815, 1.442695
        %v1852 = vpow.pop %v1851
        %v1853 = vmul.f32 %v1816, 1.442695
        %v1854 = vpow.pop %v1853
        %v1855 = vmul.f32 %v1817, 1.442695
        %v1856 = vpow.pop %v1855
        %v1857 = vmul.f32 %v1818, 1.442695
        %v1858 = vpow.pop %v1857
        %v1859 = vmul.f32 %v1819, 1.442695
        %v1860 = vpow.pop %v1859
        %v1861 = vmul.f32 %v1820, 1.442695
        %v1862 = vpow.pop %v1861
        %v1863 = vmul.f32 %v1821, 1.442695
        %v1864 = vpow.pop %v1863
        %v1865 = vmul.f32 %v1822, 1.442695
        %v1866 = vpow.pop %v1865
        %v1867 = vmul.f32 %v1823, 1.442695
        %v1868 = vpow.pop %v1867
        %v1869 = vmul.f32 %v1824, 1.442695
        %v1870 = vpow.pop %v1869
        %v1871 = vmul.f32 %v1825, 1.442695
        %v1872 = vpow.pop %v1871
        %v1873 = vmul.f32 %v1826, 1.442695
        %v1874 = vpow.pop %v1873
        %v1875 = vmul.f32 %v1827, 1.442695
        %v1876 = vpow.pop %v1875
        %v1877 = vmul.f32 %v1828, 1.442695
        %v1878 = vpow.pop %v1877
        %v1879 = vmul.f32 %v1829, 1.442695
        %v1880 = vpow.pop %v1879
        %v1881 = vmul.f32 %v1830, 1.442695
        %v1882 = vpow.pop %v1881
        %v1883 = vmul.f32 %v1831, 1.442695
        %v1884 = vpow.pop %v1883
        %v1885 = vmul.f32 %v1832, 1.442695
        %v1886 = vpow.pop %v1885
        %v1887 = vmul.f32 %v1833, 1.442695
        %v1888 = vpow.pop %v1887
        %v1889 = vmul.f32 %v1834, 1.442695
        %v1890 = vpow.pop %v1889
        %v1891 = vmul.f32 %v1835, 1.442695
        %v1892 = vpow.pop %v1891
        %v1893 = vmul.f32 %v1836, 1.442695
        %v1894 = vpow.pop %v1893
        %v1895 = vmul.f32 %v1837, 1.442695
        %v1896 = vpow.pop %v1895
        %v1897 = vmul.f32 %v1838, 1.442695
        %v1898 = vpow.pop %v1897
        %v1899 = vmul.f32 %v1839, 1.442695
        %v1900 = vpow.pop %v1899
        %v1901 = vmul.f32 %v1840, 1.442695
        %v1902 = vpow.pop %v1901
        %v1903 = vmul.f32 %v1841, 1.442695
        %v1904 = vpow.pop %v1903
        %v1905 = vmul.f32 %v1842, 1.442695
        %v1906 = vpow.pop %v1905
        %v1907 = vadd.f32 %v1844, 1.0
        %v1908 = vadd.f32 %v1846, 1.0
        %v1909 = vadd.f32 %v1848, 1.0
        %v1910 = vadd.f32 %v1850, 1.0
        %v1911 = vadd.f32 %v1852, 1.0
        %v1912 = vadd.f32 %v1854, 1.0
        %v1913 = vadd.f32 %v1856, 1.0
        %v1914 = vadd.f32 %v1858, 1.0
        %v1915 = vadd.f32 %v1860, 1.0
        %v1916 = vadd.f32 %v1862, 1.0
        %v1917 = vadd.f32 %v1864, 1.0
        %v1918 = vadd.f32 %v1866, 1.0
        %v1919 = vadd.f32 %v1868, 1.0
        %v1920 = vadd.f32 %v1870, 1.0
        %v1921 = vadd.f32 %v1872, 1.0
        %v1922 = vadd.f32 %v1874, 1.0
        %v1923 = vadd.f32 %v1876, 1.0
        %v1924 = vadd.f32 %v1878, 1.0
        %v1925 = vadd.f32 %v1880, 1.0
        %v1926 = vadd.f32 %v1882, 1.0
        %v1927 = vadd.f32 %v1884, 1.0
        %v1928 = vadd.f32 %v1886, 1.0
        %v1929 = vadd.f32 %v1888, 1.0
        %v1930 = vadd.f32 %v1890, 1.0
        %v1931 = vadd.f32 %v1892, 1.0
        %v1932 = vadd.f32 %v1894, 1.0
        %v1933 = vadd.f32 %v1896, 1.0
        %v1934 = vadd.f32 %v1898, 1.0
        %v1935 = vadd.f32 %v1900, 1.0
        %v1936 = vadd.f32 %v1902, 1.0
        %v1937 = vadd.f32 %v1904, 1.0
        %v1938 = vadd.f32 %v1906, 1.0
        %v1939 = vrcp.pop %v1907
        %v1940 = vrcp.pop %v1908
        %v1941 = vrcp.pop %v1909
        %v1942 = vrcp.pop %v1910
        %v1943 = vrcp.pop %v1911
        %v1944 = vrcp.pop %v1912
        %v1945 = vrcp.pop %v1913
        %v1946 = vrcp.pop %v1914
        %v1947 = vrcp.pop %v1915
        %v1948 = vrcp.pop %v1916
        %v1949 = vrcp.pop %v1917
        %v1950 = vrcp.pop %v1918
        %v1951 = vrcp.pop %v1919
        %v1952 = vrcp.pop %v1920
        %v1953 = vrcp.pop %v1921
        %v1954 = vrcp.pop %v1922
        %v1955 = vrcp.pop %v1923
        %v1956 = vrcp.pop %v1924
        %v1957 = vrcp.pop %v1925
        %v1958 = vrcp.pop %v1926
        %v1959 = vrcp.pop %v1927
        %v1960 = vrcp.pop %v1928
        %v1961 = vrcp.pop %v1929
        %v1962 = vrcp.pop %v1930
        %v1963 = vrcp.pop %v1931
        %v1964 = vrcp.pop %v1932
        %v1965 = vrcp.pop %v1933
        %v1966 = vrcp.pop %v1934
        %v1967 = vrcp.pop %v1935
        %v1968 = vrcp.pop %v1936
        %v1969 = vrcp.pop %v1937
        %v1970 = vrcp.pop %v1938
        %v1971 = vmul.f32 %v1779, %v1939
        %v1972 = vmul.f32 %v1780, %v1940
        %v1973 = vmul.f32 %v1781, %v1941
        %v1974 = vmul.f32 %v1782, %v1942
        %v1975 = vmul.f32 %v1783, %v1943
        %v1976 = vmul.f32 %v1784, %v1944
        %v1977 = vmul.f32 %v1785, %v1945
        %v1978 = vmul.f32 %v1786, %v1946
        %v1979 = vmul.f32 %v1787, %v1947
        %v1980 = vmul.f32 %v1788, %v1948
        %v1981 = vmul.f32 %v1789, %v1949
        %v1982 = vmul.f32 %v1790, %v1950
        %v1983 = vmul.f32 %v1791, %v1951
        %v1984 = vmul.f32 %v1792, %v1952
        %v1985 = vmul.f32 %v1793, %v1953
        %v1986 = vmul.f32 %v1794, %v1954
        %v1987 = vmul.f32 %v1795, %v1955
        %v1988 = vmul.f32 %v1796, %v1956
        %v1989 = vmul.f32 %v1797, %v1957
        %v1990 = vmul.f32 %v1798, %v1958
        %v1991 = vmul.f32 %v1799, %v1959
        %v1992 = vmul.f32 %v1800, %v1960
        %v1993 = vmul.f32 %v1801, %v1961
        %v1994 = vmul.f32 %v1802, %v1962
        %v1995 = vmul.f32 %v1803, %v1963
        %v1996 = vmul.f32 %v1804, %v1964
        %v1997 = vmul.f32 %v1805, %v1965
        %v1998 = vmul.f32 %v1806, %v1966
        %v1999 = vmul.f32 %v1807, %v1967
        %v2000 = vmul.f32 %v1808, %v1968
        %v2001 = vmul.f32 %v1809, %v1969
        %v2002 = vmul.f32 %v1810, %v1970
        %v2003 = vpack.c.bf16 %v1973, %v1971
        %v2004 = vpack.c.bf16 %v1974, %v1972
        %v2005 = vpack.c.bf16 %v1977, %v1975
        %v2006 = vpack.c.bf16 %v1978, %v1976
        %v2007 = vpack.c.bf16 %v1981, %v1979
        %v2008 = vpack.c.bf16 %v1982, %v1980
        %v2009 = vpack.c.bf16 %v1985, %v1983
        %v2010 = vpack.c.bf16 %v1986, %v1984
        %v2011 = vpack.c.bf16 %v1989, %v1987
        %v2012 = vpack.c.bf16 %v1990, %v1988
        %v2013 = vpack.c.bf16 %v1993, %v1991
        %v2014 = vpack.c.bf16 %v1994, %v1992
        %v2015 = vpack.c.bf16 %v1997, %v1995
        %v2016 = vpack.c.bf16 %v1998, %v1996
        %v2017 = vpack.c.bf16 %v2001, %v1999
        %v2018 = vpack.c.bf16 %v2002, %v2000
        %s2019 = scalar_lea.vmem %s3, 64
        %v2020 = vld [vmem:[%s2019] sm:$0xf]
        %v2021 = vld [vmem:[%s2019 + $0x4] sm:$0xf]
        %v2022 = vld [vmem:[%s2019 + $0x8] sm:$0xf]
        %v2023 = vld [vmem:[%s2019 + $0xc] sm:$0xf]
        %v2024 = vld [vmem:[%s2019 + $0x10] sm:$0xf]
        %v2025 = vld [vmem:[%s2019 + $0x14] sm:$0xf]
        %v2026 = vld [vmem:[%s2019 + $0x18] sm:$0xf]
        %v2027 = vld [vmem:[%s2019 + $0x1c] sm:$0xf]
        %v2028 = vld [vmem:[%s2019 + $0x20] sm:$0xf]
        %v2029 = vld [vmem:[%s2019 + $0x24] sm:$0xf]
        %v2030 = vld [vmem:[%s2019 + $0x28] sm:$0xf]
        %v2031 = vld [vmem:[%s2019 + $0x2c] sm:$0xf]
        %v2032 = vld [vmem:[%s2019 + $0x30] sm:$0xf]
        %v2033 = vld [vmem:[%s2019 + $0x34] sm:$0xf]
        %v2034 = vld [vmem:[%s2019 + $0x38] sm:$0xf]
        %v2035 = vld [vmem:[%s2019 + $0x3c] sm:$0xf]
        %2036 = vset.pattern.permute.xlu0 3
        %2037 = vperm.xlu0 %2036, %v330
        %v2038 = vpop.permute.xlu0 %2037
        %2040 = vset.pattern.permute.xlu0 3
        %2041 = vperm.xlu0 %2040, %v331
        %v2042 = vpop.permute.xlu0 %2041
        %2044 = vset.pattern.permute.xlu0 3
        %2045 = vperm.xlu0 %2044, %v332
        %v2046 = vpop.permute.xlu0 %2045
        %2048 = vset.pattern.permute.xlu0 3
        %2049 = vperm.xlu0 %2048, %v333
        %v2050 = vpop.permute.xlu0 %2049
        %2052 = vset.pattern.permute.xlu0 3
        %2053 = vperm.xlu0 %2052, %v334
        %v2054 = vpop.permute.xlu0 %2053
        %2056 = vset.pattern.permute.xlu0 3
        %2057 = vperm.xlu0 %2056, %v335
        %v2058 = vpop.permute.xlu0 %2057
        %2060 = vset.pattern.permute.xlu0 3
        %2061 = vperm.xlu0 %2060, %v336
        %v2062 = vpop.permute.xlu0 %2061
        %2064 = vset.pattern.permute.xlu0 3
        %2065 = vperm.xlu0 %2064, %v337
        %v2066 = vpop.permute.xlu0 %2065
        %2068 = vset.pattern.permute.xlu0 3
        %2069 = vperm.xlu0 %2068, %v338
        %v2070 = vpop.permute.xlu0 %2069
        %2072 = vset.pattern.permute.xlu0 3
        %2073 = vperm.xlu0 %2072, %v339
        %v2074 = vpop.permute.xlu0 %2073
        %2076 = vset.pattern.permute.xlu0 3
        %2077 = vperm.xlu0 %2076, %v340
        %v2078 = vpop.permute.xlu0 %2077
        %2080 = vset.pattern.permute.xlu0 3
        %2081 = vperm.xlu0 %2080, %v341
        %v2082 = vpop.permute.xlu0 %2081
        %2084 = vset.pattern.permute.xlu0 3
        %2085 = vperm.xlu0 %2084, %v342
        %v2086 = vpop.permute.xlu0 %2085
        %2088 = vset.pattern.permute.xlu0 3
        %2089 = vperm.xlu0 %2088, %v343
        %v2090 = vpop.permute.xlu0 %2089
        %2092 = vset.pattern.permute.xlu0 3
        %2093 = vperm.xlu0 %2092, %v344
        %v2094 = vpop.permute.xlu0 %2093
        %2096 = vset.pattern.permute.xlu0 3
        %2097 = vperm.xlu0 %2096, %v345
        %v2098 = vpop.permute.xlu0 %2097
        %v2116 = vunpack.c.l.b16 %v2020
        %v2117 = vunpack.c.l.b16 %v2021
        %v2118 = vunpack.c.l.b16 %v2022
        %v2119 = vunpack.c.l.b16 %v2023
        %v2120 = vunpack.c.l.b16 %v2024
        %v2121 = vunpack.c.l.b16 %v2025
        %v2122 = vunpack.c.l.b16 %v2026
        %v2123 = vunpack.c.l.b16 %v2027
        %v2124 = vunpack.c.l.b16 %v2028
        %v2125 = vunpack.c.l.b16 %v2029
        %v2126 = vunpack.c.l.b16 %v2030
        %v2127 = vunpack.c.l.b16 %v2031
        %v2128 = vunpack.c.l.b16 %v2032
        %v2129 = vunpack.c.l.b16 %v2033
        %v2130 = vunpack.c.l.b16 %v2034
        %v2131 = vunpack.c.l.b16 %v2035
        %v2132 = vpack.c.b16 %v2117, %v2116
        %v2133 = vpack.c.b16 %v2119, %v2118
        %v2134 = vpack.c.b16 %v2121, %v2120
        %v2135 = vpack.c.b16 %v2123, %v2122
        %v2136 = vpack.c.b16 %v2125, %v2124
        %v2137 = vpack.c.b16 %v2127, %v2126
        %v2138 = vpack.c.b16 %v2129, %v2128
        %v2139 = vpack.c.b16 %v2131, %v2130
        %2148 = vmatprep.subr.bf16.mxu0 %v2004
        %2149 = vmatpush1.bf16.msra.mxu0 %v2003
        %2150 = vmatprep.subr.bf16.mxu0 %v2006
        %2151 = vmatpush1.bf16.msra.mxu0 %v2005
        %2152 = vmatprep.subr.bf16.mxu0 %v2008
        %2153 = vmatpush1.bf16.msra.mxu0 %v2007
        %2154 = vmatprep.subr.bf16.mxu0 %v2010
        %2155 = vmatpush1.bf16.msra.mxu0 %v2009
        %2156 = vmatprep.subr.bf16.mxu0 %v2012
        %2157 = vmatpush1.bf16.msra.mxu0 %v2011
        %2158 = vmatprep.subr.bf16.mxu0 %v2014
        %2159 = vmatpush1.bf16.msra.mxu0 %v2013
        %2160 = vmatprep.subr.bf16.mxu0 %v2016
        %2161 = vmatpush1.bf16.msra.mxu0 %v2015
        %2162 = vmatprep.subr.bf16.mxu0 %v2018
        %2163 = vmatpush1.bf16.msra.mxu0 %v2017
        %2164 = vmatprep.subr.bf16.mxu0 0
        %2165 = vmatpush1.bf16.msra.mxu0 0
        %2166 = vmatprep.subr.bf16.mxu0 0
        %2167 = vmatpush1.bf16.msra.mxu0 0
        %2168 = vmatprep.subr.bf16.mxu0 0
        %2169 = vmatpush1.bf16.msra.mxu0 0
        %2170 = vmatprep.subr.bf16.mxu0 0
        %2171 = vmatpush1.bf16.msra.mxu0 0
        %2172 = vmatprep.subr.bf16.mxu0 0
        %2173 = vmatpush1.bf16.msra.mxu0 0
        %2174 = vmatprep.subr.bf16.mxu0 0
        %2175 = vmatpush1.bf16.msra.mxu0 0
        %2176 = vmatprep.subr.bf16.mxu0 0
        %2177 = vmatpush1.bf16.msra.mxu0 0
        %2178 = vmatprep.subr.bf16.mxu0 0
        %2179 = vmatpush1.bf16.msra.mxu0 0
        %2180 = vmatprep.mubr.bf16.mxu0 0
        %2181 = vmatmul.mubr.bf16.gmra.mrb[0].mxu0 %v2132
        %v2182 = vpop.f32.mrb[0].mxu0
        %v2183 = vadd.f32 %v2038, %v2182
        %v2184 = vpop.f32.mrb[0].mxu0
        %v2185 = vadd.f32 %v2038, %v2184
        %v2186 = vpop.f32.mrb[0].mxu0
        %v2187 = vadd.f32 %v2042, %v2186
        %v2188 = vpop.f32.mrb[0].mxu0
        %v2189 = vadd.f32 %v2042, %v2188
        %2190 = vmatprep.mubr.bf16.mxu0 0
        %2191 = vmatmul.mubr.bf16.gmra.mrb[0].mxu0 %v2133
        %v2192 = vpop.f32.mrb[0].mxu0
        %v2193 = vadd.f32 %v2046, %v2192
        %v2194 = vpop.f32.mrb[0].mxu0
        %v2195 = vadd.f32 %v2046, %v2194
        %v2196 = vpop.f32.mrb[0].mxu0
        %v2197 = vadd.f32 %v2050, %v2196
        %v2198 = vpop.f32.mrb[0].mxu0
        %v2199 = vadd.f32 %v2050, %v2198
        %2200 = vmatprep.mubr.bf16.mxu0 0
        %2201 = vmatmul.mubr.bf16.gmra.mrb[0].mxu0 %v2134
        %v2202 = vpop.f32.mrb[0].mxu0
        %v2203 = vadd.f32 %v2054, %v2202
        %v2204 = vpop.f32.mrb[0].mxu0
        %v2205 = vadd.f32 %v2054, %v2204
        %v2206 = vpop.f32.mrb[0].mxu0
        %v2207 = vadd.f32 %v2058, %v2206
        %v2208 = vpop.f32.mrb[0].mxu0
        %v2209 = vadd.f32 %v2058, %v2208
        %2210 = vmatprep.mubr.bf16.mxu0 0
        %2211 = vmatmul.mubr.bf16.gmra.mrb[0].mxu0 %v2135
        %v2212 = vpop.f32.mrb[0].mxu0
        %v2213 = vadd.f32 %v2062, %v2212
        %v2214 = vpop.f32.mrb[0].mxu0
        %v2215 = vadd.f32 %v2062, %v2214
        %v2216 = vpop.f32.mrb[0].mxu0
        %v2217 = vadd.f32 %v2066, %v2216
        %v2218 = vpop.f32.mrb[0].mxu0
        %v2219 = vadd.f32 %v2066, %v2218
        %2220 = vmatprep.mubr.bf16.mxu0 0
        %2221 = vmatmul.mubr.bf16.gmra.mrb[0].mxu0 %v2136
        %v2222 = vpop.f32.mrb[0].mxu0
        %v2223 = vadd.f32 %v2070, %v2222
        %v2224 = vpop.f32.mrb[0].mxu0
        %v2225 = vadd.f32 %v2070, %v2224
        %v2226 = vpop.f32.mrb[0].mxu0
        %v2227 = vadd.f32 %v2074, %v2226
        %v2228 = vpop.f32.mrb[0].mxu0
        %v2229 = vadd.f32 %v2074, %v2228
        %2230 = vmatprep.mubr.bf16.mxu0 0
        %2231 = vmatmul.mubr.bf16.gmra.mrb[0].mxu0 %v2137
        %v2232 = vpop.f32.mrb[0].mxu0
        %v2233 = vadd.f32 %v2078, %v2232
        %v2234 = vpop.f32.mrb[0].mxu0
        %v2235 = vadd.f32 %v2078, %v2234
        %v2236 = vpop.f32.mrb[0].mxu0
        %v2237 = vadd.f32 %v2082, %v2236
        %v2238 = vpop.f32.mrb[0].mxu0
        %v2239 = vadd.f32 %v2082, %v2238
        %2240 = vmatprep.mubr.bf16.mxu0 0
        %2241 = vmatmul.mubr.bf16.gmra.mrb[0].mxu0 %v2138
        %v2242 = vpop.f32.mrb[0].mxu0
        %v2243 = vadd.f32 %v2086, %v2242
        %v2244 = vpop.f32.mrb[0].mxu0
        %v2245 = vadd.f32 %v2086, %v2244
        %v2246 = vpop.f32.mrb[0].mxu0
        %v2247 = vadd.f32 %v2090, %v2246
        %v2248 = vpop.f32.mrb[0].mxu0
        %v2249 = vadd.f32 %v2090, %v2248
        %2250 = vmatprep.mubr.bf16.mxu0 0
        %2251 = vmatmul.mubr.bf16.gmra.mrb[0].mxu0 %v2139
        %v2252 = vpop.f32.mrb[0].mxu0
        %v2253 = vadd.f32 %v2094, %v2252
        %v2254 = vpop.f32.mrb[0].mxu0
        %v2255 = vadd.f32 %v2094, %v2254
        %v2256 = vpop.f32.mrb[0].mxu0
        %v2257 = vadd.f32 %v2098, %v2256
        %v2258 = vpop.f32.mrb[0].mxu0
        %v2259 = vadd.f32 %v2098, %v2258
        %2260 = vdwg.mxu0
        %v2261 = vsub.f32 0.0, %v2183
        %v2262 = vsub.f32 0.0, %v2185
        %v2263 = vsub.f32 0.0, %v2187
        %v2264 = vsub.f32 0.0, %v2189
        %v2265 = vsub.f32 0.0, %v2193
        %v2266 = vsub.f32 0.0, %v2195
        %v2267 = vsub.f32 0.0, %v2197
        %v2268 = vsub.f32 0.0, %v2199
        %v2269 = vsub.f32 0.0, %v2203
        %v2270 = vsub.f32 0.0, %v2205
        %v2271 = vsub.f32 0.0, %v2207
        %v2272 = vsub.f32 0.0, %v2209
        %v2273 = vsub.f32 0.0, %v2213
        %v2274 = vsub.f32 0.0, %v2215
        %v2275 = vsub.f32 0.0, %v2217
        %v2276 = vsub.f32 0.0, %v2219
        %v2277 = vsub.f32 0.0, %v2223
        %v2278 = vsub.f32 0.0, %v2225
        %v2279 = vsub.f32 0.0, %v2227
        %v2280 = vsub.f32 0.0, %v2229
        %v2281 = vsub.f32 0.0, %v2233
        %v2282 = vsub.f32 0.0, %v2235
        %v2283 = vsub.f32 0.0, %v2237
        %v2284 = vsub.f32 0.0, %v2239
        %v2285 = vsub.f32 0.0, %v2243
        %v2286 = vsub.f32 0.0, %v2245
        %v2287 = vsub.f32 0.0, %v2247
        %v2288 = vsub.f32 0.0, %v2249
        %v2289 = vsub.f32 0.0, %v2253
        %v2290 = vsub.f32 0.0, %v2255
        %v2291 = vsub.f32 0.0, %v2257
        %v2292 = vsub.f32 0.0, %v2259
        %v2293 = vmul.f32 %v2261, 1.442695
        %v2294 = vpow.pop %v2293
        %v2295 = vmul.f32 %v2262, 1.442695
        %v2296 = vpow.pop %v2295
        %v2297 = vmul.f32 %v2263, 1.442695
        %v2298 = vpow.pop %v2297
        %v2299 = vmul.f32 %v2264, 1.442695
        %v2300 = vpow.pop %v2299
        %v2301 = vmul.f32 %v2265, 1.442695
        %v2302 = vpow.pop %v2301
        %v2303 = vmul.f32 %v2266, 1.442695
        %v2304 = vpow.pop %v2303
        %v2305 = vmul.f32 %v2267, 1.442695
        %v2306 = vpow.pop %v2305
        %v2307 = vmul.f32 %v2268, 1.442695
        %v2308 = vpow.pop %v2307
        %v2309 = vmul.f32 %v2269, 1.442695
        %v2310 = vpow.pop %v2309
        %v2311 = vmul.f32 %v2270, 1.442695
        %v2312 = vpow.pop %v2311
        %v2313 = vmul.f32 %v2271, 1.442695
        %v2314 = vpow.pop %v2313
        %v2315 = vmul.f32 %v2272, 1.442695
        %v2316 = vpow.pop %v2315
        %v2317 = vmul.f32 %v2273, 1.442695
        %v2318 = vpow.pop %v2317
        %v2319 = vmul.f32 %v2274, 1.442695
        %v2320 = vpow.pop %v2319
        %v2321 = vmul.f32 %v2275, 1.442695
        %v2322 = vpow.pop %v2321
        %v2323 = vmul.f32 %v2276, 1.442695
        %v2324 = vpow.pop %v2323
        %v2325 = vmul.f32 %v2277, 1.442695
        %v2326 = vpow.pop %v2325
        %v2327 = vmul.f32 %v2278, 1.442695
        %v2328 = vpow.pop %v2327
        %v2329 = vmul.f32 %v2279, 1.442695
        %v2330 = vpow.pop %v2329
        %v2331 = vmul.f32 %v2280, 1.442695
        %v2332 = vpow.pop %v2331
        %v2333 = vmul.f32 %v2281, 1.442695
        %v2334 = vpow.pop %v2333
        %v2335 = vmul.f32 %v2282, 1.442695
        %v2336 = vpow.pop %v2335
        %v2337 = vmul.f32 %v2283, 1.442695
        %v2338 = vpow.pop %v2337
        %v2339 = vmul.f32 %v2284, 1.442695
        %v2340 = vpow.pop %v2339
        %v2341 = vmul.f32 %v2285, 1.442695
        %v2342 = vpow.pop %v2341
        %v2343 = vmul.f32 %v2286, 1.442695
        %v2344 = vpow.pop %v2343
        %v2345 = vmul.f32 %v2287, 1.442695
        %v2346 = vpow.pop %v2345
        %v2347 = vmul.f32 %v2288, 1.442695
        %v2348 = vpow.pop %v2347
        %v2349 = vmul.f32 %v2289, 1.442695
        %v2350 = vpow.pop %v2349
        %v2351 = vmul.f32 %v2290, 1.442695
        %v2352 = vpow.pop %v2351
        %v2353 = vmul.f32 %v2291, 1.442695
        %v2354 = vpow.pop %v2353
        %v2355 = vmul.f32 %v2292, 1.442695
        %v2356 = vpow.pop %v2355
        %v2357 = vadd.f32 %v2294, 1.0
        %v2358 = vadd.f32 %v2296, 1.0
        %v2359 = vadd.f32 %v2298, 1.0
        %v2360 = vadd.f32 %v2300, 1.0
        %v2361 = vadd.f32 %v2302, 1.0
        %v2362 = vadd.f32 %v2304, 1.0
        %v2363 = vadd.f32 %v2306, 1.0
        %v2364 = vadd.f32 %v2308, 1.0
        %v2365 = vadd.f32 %v2310, 1.0
        %v2366 = vadd.f32 %v2312, 1.0
        %v2367 = vadd.f32 %v2314, 1.0
        %v2368 = vadd.f32 %v2316, 1.0
        %v2369 = vadd.f32 %v2318, 1.0
        %v2370 = vadd.f32 %v2320, 1.0
        %v2371 = vadd.f32 %v2322, 1.0
        %v2372 = vadd.f32 %v2324, 1.0
        %v2373 = vadd.f32 %v2326, 1.0
        %v2374 = vadd.f32 %v2328, 1.0
        %v2375 = vadd.f32 %v2330, 1.0
        %v2376 = vadd.f32 %v2332, 1.0
        %v2377 = vadd.f32 %v2334, 1.0
        %v2378 = vadd.f32 %v2336, 1.0
        %v2379 = vadd.f32 %v2338, 1.0
        %v2380 = vadd.f32 %v2340, 1.0
        %v2381 = vadd.f32 %v2342, 1.0
        %v2382 = vadd.f32 %v2344, 1.0
        %v2383 = vadd.f32 %v2346, 1.0
        %v2384 = vadd.f32 %v2348, 1.0
        %v2385 = vadd.f32 %v2350, 1.0
        %v2386 = vadd.f32 %v2352, 1.0
        %v2387 = vadd.f32 %v2354, 1.0
        %v2388 = vadd.f32 %v2356, 1.0
        %v2389 = vrcp.pop %v2357
        %v2390 = vrcp.pop %v2358
        %v2391 = vrcp.pop %v2359
        %v2392 = vrcp.pop %v2360
        %v2393 = vrcp.pop %v2361
        %v2394 = vrcp.pop %v2362
        %v2395 = vrcp.pop %v2363
        %v2396 = vrcp.pop %v2364
        %v2397 = vrcp.pop %v2365
        %v2398 = vrcp.pop %v2366
        %v2399 = vrcp.pop %v2367
        %v2400 = vrcp.pop %v2368
        %v2401 = vrcp.pop %v2369
        %v2402 = vrcp.pop %v2370
        %v2403 = vrcp.pop %v2371
        %v2404 = vrcp.pop %v2372
        %v2405 = vrcp.pop %v2373
        %v2406 = vrcp.pop %v2374
        %v2407 = vrcp.pop %v2375
        %v2408 = vrcp.pop %v2376
        %v2409 = vrcp.pop %v2377
        %v2410 = vrcp.pop %v2378
        %v2411 = vrcp.pop %v2379
        %v2412 = vrcp.pop %v2380
        %v2413 = vrcp.pop %v2381
        %v2414 = vrcp.pop %v2382
        %v2415 = vrcp.pop %v2383
        %v2416 = vrcp.pop %v2384
        %v2417 = vrcp.pop %v2385
        %v2418 = vrcp.pop %v2386
        %v2419 = vrcp.pop %v2387
        %v2420 = vrcp.pop %v2388
        %v2421 = vmul.f32 %v2183, %v2389
        %v2422 = vmul.f32 %v2185, %v2390
        %v2423 = vmul.f32 %v2187, %v2391
        %v2424 = vmul.f32 %v2189, %v2392
        %v2425 = vmul.f32 %v2193, %v2393
        %v2426 = vmul.f32 %v2195, %v2394
        %v2427 = vmul.f32 %v2197, %v2395
        %v2428 = vmul.f32 %v2199, %v2396
        %v2429 = vmul.f32 %v2203, %v2397
        %v2430 = vmul.f32 %v2205, %v2398
        %v2431 = vmul.f32 %v2207, %v2399
        %v2432 = vmul.f32 %v2209, %v2400
        %v2433 = vmul.f32 %v2213, %v2401
        %v2434 = vmul.f32 %v2215, %v2402
        %v2435 = vmul.f32 %v2217, %v2403
        %v2436 = vmul.f32 %v2219, %v2404
        %v2437 = vmul.f32 %v2223, %v2405
        %v2438 = vmul.f32 %v2225, %v2406
        %v2439 = vmul.f32 %v2227, %v2407
        %v2440 = vmul.f32 %v2229, %v2408
        %v2441 = vmul.f32 %v2233, %v2409
        %v2442 = vmul.f32 %v2235, %v2410
        %v2443 = vmul.f32 %v2237, %v2411
        %v2444 = vmul.f32 %v2239, %v2412
        %v2445 = vmul.f32 %v2243, %v2413
        %v2446 = vmul.f32 %v2245, %v2414
        %v2447 = vmul.f32 %v2247, %v2415
        %v2448 = vmul.f32 %v2249, %v2416
        %v2449 = vmul.f32 %v2253, %v2417
        %v2450 = vmul.f32 %v2255, %v2418
        %v2451 = vmul.f32 %v2257, %v2419
        %v2452 = vmul.f32 %v2259, %v2420
        %v2453 = vpack.c.bf16 %v2423, %v2421
        %v2454 = vpack.c.bf16 %v2424, %v2422
        %v2455 = vpack.c.bf16 %v2427, %v2425
        %v2456 = vpack.c.bf16 %v2428, %v2426
        %v2457 = vpack.c.bf16 %v2431, %v2429
        %v2458 = vpack.c.bf16 %v2432, %v2430
        %v2459 = vpack.c.bf16 %v2435, %v2433
        %v2460 = vpack.c.bf16 %v2436, %v2434
        %v2461 = vpack.c.bf16 %v2439, %v2437
        %v2462 = vpack.c.bf16 %v2440, %v2438
        %v2463 = vpack.c.bf16 %v2443, %v2441
        %v2464 = vpack.c.bf16 %v2444, %v2442
        %v2465 = vpack.c.bf16 %v2447, %v2445
        %v2466 = vpack.c.bf16 %v2448, %v2446
        %v2467 = vpack.c.bf16 %v2451, %v2449
        %v2468 = vpack.c.bf16 %v2452, %v2450
        %s2469 = scalar_lea.vmem [#allocation5], 64
        %v2470 = vld [vmem:[%s2469] sm:$0xf]
        %v2471 = vld [vmem:[%s2469 + $0x4] sm:$0xf]
        %v2472 = vld [vmem:[%s2469 + $0x8] sm:$0xf]
        %v2473 = vld [vmem:[%s2469 + $0xc] sm:$0xf]
        %v2474 = vld [vmem:[%s2469 + $0x10] sm:$0xf]
        %v2475 = vld [vmem:[%s2469 + $0x14] sm:$0xf]
        %v2476 = vld [vmem:[%s2469 + $0x18] sm:$0xf]
        %v2477 = vld [vmem:[%s2469 + $0x1c] sm:$0xf]
        %v2478 = vld [vmem:[%s2469 + $0x20] sm:$0xf]
        %v2479 = vld [vmem:[%s2469 + $0x24] sm:$0xf]
        %v2480 = vld [vmem:[%s2469 + $0x28] sm:$0xf]
        %v2481 = vld [vmem:[%s2469 + $0x2c] sm:$0xf]
        %v2482 = vld [vmem:[%s2469 + $0x30] sm:$0xf]
        %v2483 = vld [vmem:[%s2469 + $0x34] sm:$0xf]
        %v2484 = vld [vmem:[%s2469 + $0x38] sm:$0xf]
        %v2485 = vld [vmem:[%s2469 + $0x3c] sm:$0xf]
        %2486 = vset.pattern.permute.xlu0 4
        %2487 = vperm.xlu0 %2486, %v330
        %v2488 = vpop.permute.xlu0 %2487
        %2490 = vset.pattern.permute.xlu0 4
        %2491 = vperm.xlu0 %2490, %v331
        %v2492 = vpop.permute.xlu0 %2491
        %2494 = vset.pattern.permute.xlu0 4
        %2495 = vperm.xlu0 %2494, %v332
        %v2496 = vpop.permute.xlu0 %2495
        %2498 = vset.pattern.permute.xlu0 4
        %2499 = vperm.xlu0 %2498, %v333
        %v2500 = vpop.permute.xlu0 %2499
        %2502 = vset.pattern.permute.xlu0 4
        %2503 = vperm.xlu0 %2502, %v334
        %v2504 = vpop.permute.xlu0 %2503
        %2506 = vset.pattern.permute.xlu0 4
        %2507 = vperm.xlu0 %2506, %v335
        %v2508 = vpop.permute.xlu0 %2507
        %2510 = vset.pattern.permute.xlu0 4
        %2511 = vperm.xlu0 %2510, %v336
        %v2512 = vpop.permute.xlu0 %2511
        %2514 = vset.pattern.permute.xlu0 4
        %2515 = vperm.xlu0 %2514, %v337
        %v2516 = vpop.permute.xlu0 %2515
        %2518 = vset.pattern.permute.xlu0 4
        %2519 = vperm.xlu0 %2518, %v338
        %v2520 = vpop.permute.xlu0 %2519
        %2522 = vset.pattern.permute.xlu0 4
        %2523 = vperm.xlu0 %2522, %v339
        %v2524 = vpop.permute.xlu0 %2523
        %2526 = vset.pattern.permute.xlu0 4
        %2527 = vperm.xlu0 %2526, %v340
        %v2528 = vpop.permute.xlu0 %2527
        %2530 = vset.pattern.permute.xlu0 4
        %2531 = vperm.xlu0 %2530, %v341
        %v2532 = vpop.permute.xlu0 %2531
        %2534 = vset.pattern.permute.xlu0 4
        %2535 = vperm.xlu0 %2534, %v342
        %v2536 = vpop.permute.xlu0 %2535
        %2538 = vset.pattern.permute.xlu0 4
        %2539 = vperm.xlu0 %2538, %v343
        %v2540 = vpop.permute.xlu0 %2539
        %2542 = vset.pattern.permute.xlu0 4
        %2543 = vperm.xlu0 %2542, %v344
        %v2544 = vpop.permute.xlu0 %2543
        %2546 = vset.pattern.permute.xlu0 4
        %2547 = vperm.xlu0 %2546, %v345
        %v2548 = vpop.permute.xlu0 %2547
        %v2566 = vunpack.c.l.b16 %v2470
        %v2567 = vunpack.c.l.b16 %v2471
        %v2568 = vunpack.c.l.b16 %v2472
        %v2569 = vunpack.c.l.b16 %v2473
        %v2570 = vunpack.c.l.b16 %v2474
        %v2571 = vunpack.c.l.b16 %v2475
        %v2572 = vunpack.c.l.b16 %v2476
        %v2573 = vunpack.c.l.b16 %v2477
        %v2574 = vunpack.c.l.b16 %v2478
        %v2575 = vunpack.c.l.b16 %v2479
        %v2576 = vunpack.c.l.b16 %v2480
        %v2577 = vunpack.c.l.b16 %v2481
        %v2578 = vunpack.c.l.b16 %v2482
        %v2579 = vunpack.c.l.b16 %v2483
        %v2580 = vunpack.c.l.b16 %v2484
        %v2581 = vunpack.c.l.b16 %v2485
        %v2582 = vpack.c.b16 %v2567, %v2566
        %v2583 = vpack.c.b16 %v2569, %v2568
        %v2584 = vpack.c.b16 %v2571, %v2570
        %v2585 = vpack.c.b16 %v2573, %v2572
        %v2586 = vpack.c.b16 %v2575, %v2574
        %v2587 = vpack.c.b16 %v2577, %v2576
        %v2588 = vpack.c.b16 %v2579, %v2578
        %v2589 = vpack.c.b16 %v2581, %v2580
        %2598 = vmatprep.subr.bf16.mxu0 %v2454
        %2599 = vmatpush1.bf16.msra.mxu0 %v2453
        %2600 = vmatprep.subr.bf16.mxu0 %v2456
        %2601 = vmatpush1.bf16.msra.mxu0 %v2455
        %2602 = vmatprep.subr.bf16.mxu0 %v2458
        %2603 = vmatpush1.bf16.msra.mxu0 %v2457
        %2604 = vmatprep.subr.bf16.mxu0 %v2460
        %2605 = vmatpush1.bf16.msra.mxu0 %v2459
        %2606 = vmatprep.subr.bf16.mxu0 %v2462
        %2607 = vmatpush1.bf16.msra.mxu0 %v2461
        %2608 = vmatprep.subr.bf16.mxu0 %v2464
        %2609 = vmatpush1.bf16.msra.mxu0 %v2463
        %2610 = vmatprep.subr.bf16.mxu0 %v2466
        %2611 = vmatpush1.bf16.msra.mxu0 %v2465
        %2612 = vmatprep.subr.bf16.mxu0 %v2468
        %2613 = vmatpush1.bf16.msra.mxu0 %v2467
        %2614 = vmatprep.subr.bf16.mxu0 0
        %2615 = vmatpush1.bf16.msra.mxu0 0
        %2616 = vmatprep.subr.bf16.mxu0 0
        %2617 = vmatpush1.bf16.msra.mxu0 0
        %2618 = vmatprep.subr.bf16.mxu0 0
        %2619 = vmatpush1.bf16.msra.mxu0 0
        %2620 = vmatprep.subr.bf16.mxu0 0
        %2621 = vmatpush1.bf16.msra.mxu0 0
        %2622 = vmatprep.subr.bf16.mxu0 0
        %2623 = vmatpush1.bf16.msra.mxu0 0
        %2624 = vmatprep.subr.bf16.mxu0 0
        %2625 = vmatpush1.bf16.msra.mxu0 0
        %2626 = vmatprep.subr.bf16.mxu0 0
        %2627 = vmatpush1.bf16.msra.mxu0 0
        %2628 = vmatprep.subr.bf16.mxu0 0
        %2629 = vmatpush1.bf16.msra.mxu0 0
        %2630 = vmatprep.mubr.bf16.mxu0 0
        %2631 = vmatmul.mubr.bf16.gmra.mrb[0].mxu0 %v2582
        %v2632 = vpop.f32.mrb[0].mxu0
        %v2633 = vadd.f32 %v2488, %v2632
        %v2634 = vpop.f32.mrb[0].mxu0
        %v2635 = vadd.f32 %v2488, %v2634
        %v2636 = vpop.f32.mrb[0].mxu0
        %v2637 = vadd.f32 %v2492, %v2636
        %v2638 = vpop.f32.mrb[0].mxu0
        %v2639 = vadd.f32 %v2492, %v2638
        %2640 = vmatprep.mubr.bf16.mxu0 0
        %2641 = vmatmul.mubr.bf16.gmra.mrb[0].mxu0 %v2583
        %v2642 = vpop.f32.mrb[0].mxu0
        %v2643 = vadd.f32 %v2496, %v2642
        %v2644 = vpop.f32.mrb[0].mxu0
        %v2645 = vadd.f32 %v2496, %v2644
        %v2646 = vpop.f32.mrb[0].mxu0
        %v2647 = vadd.f32 %v2500, %v2646
        %v2648 = vpop.f32.mrb[0].mxu0
        %v2649 = vadd.f32 %v2500, %v2648
        %2650 = vmatprep.mubr.bf16.mxu0 0
        %2651 = vmatmul.mubr.bf16.gmra.mrb[0].mxu0 %v2584
        %v2652 = vpop.f32.mrb[0].mxu0
        %v2653 = vadd.f32 %v2504, %v2652
        %v2654 = vpop.f32.mrb[0].mxu0
        %v2655 = vadd.f32 %v2504, %v2654
        %v2656 = vpop.f32.mrb[0].mxu0
        %v2657 = vadd.f32 %v2508, %v2656
        %v2658 = vpop.f32.mrb[0].mxu0
        %v2659 = vadd.f32 %v2508, %v2658
        %2660 = vmatprep.mubr.bf16.mxu0 0
        %2661 = vmatmul.mubr.bf16.gmra.mrb[0].mxu0 %v2585
        %v2662 = vpop.f32.mrb[0].mxu0
        %v2663 = vadd.f32 %v2512, %v2662
        %v2664 = vpop.f32.mrb[0].mxu0
        %v2665 = vadd.f32 %v2512, %v2664
        %v2666 = vpop.f32.mrb[0].mxu0
        %v2667 = vadd.f32 %v2516, %v2666
        %v2668 = vpop.f32.mrb[0].mxu0
        %v2669 = vadd.f32 %v2516, %v2668
        %2670 = vmatprep.mubr.bf16.mxu0 0
        %2671 = vmatmul.mubr.bf16.gmra.mrb[0].mxu0 %v2586
        %v2672 = vpop.f32.mrb[0].mxu0
        %v2673 = vadd.f32 %v2520, %v2672
        %v2674 = vpop.f32.mrb[0].mxu0
        %v2675 = vadd.f32 %v2520, %v2674
        %v2676 = vpop.f32.mrb[0].mxu0
        %v2677 = vadd.f32 %v2524, %v2676
        %v2678 = vpop.f32.mrb[0].mxu0
        %v2679 = vadd.f32 %v2524, %v2678
        %2680 = vmatprep.mubr.bf16.mxu0 0
        %2681 = vmatmul.mubr.bf16.gmra.mrb[0].mxu0 %v2587
        %v2682 = vpop.f32.mrb[0].mxu0
        %v2683 = vadd.f32 %v2528, %v2682
        %v2684 = vpop.f32.mrb[0].mxu0
        %v2685 = vadd.f32 %v2528, %v2684
        %v2686 = vpop.f32.mrb[0].mxu0
        %v2687 = vadd.f32 %v2532, %v2686
        %v2688 = vpop.f32.mrb[0].mxu0
        %v2689 = vadd.f32 %v2532, %v2688
        %2690 = vmatprep.mubr.bf16.mxu0 0
        %2691 = vmatmul.mubr.bf16.gmra.mrb[0].mxu0 %v2588
        %v2692 = vpop.f32.mrb[0].mxu0
        %v2693 = vadd.f32 %v2536, %v2692
        %v2694 = vpop.f32.mrb[0].mxu0
        %v2695 = vadd.f32 %v2536, %v2694
        %v2696 = vpop.f32.mrb[0].mxu0
        %v2697 = vadd.f32 %v2540, %v2696
        %v2698 = vpop.f32.mrb[0].mxu0
        %v2699 = vadd.f32 %v2540, %v2698
        %2700 = vmatprep.mubr.bf16.mxu0 0
        %2701 = vmatmul.mubr.bf16.gmra.mrb[0].mxu0 %v2589
        %v2702 = vpop.f32.mrb[0].mxu0
        %v2703 = vadd.f32 %v2544, %v2702
        %v2704 = vpop.f32.mrb[0].mxu0
        %v2705 = vadd.f32 %v2544, %v2704
        %v2706 = vpop.f32.mrb[0].mxu0
        %v2707 = vadd.f32 %v2548, %v2706
        %v2708 = vpop.f32.mrb[0].mxu0
        %v2709 = vadd.f32 %v2548, %v2708
        %2710 = vdwg.mxu0
        %v2711 = vadd.f32 %v1971, %v2633
        %v2712 = vadd.f32 %v1972, %v2635
        %v2713 = vadd.f32 %v1973, %v2637
        %v2714 = vadd.f32 %v1974, %v2639
        %v2715 = vadd.f32 %v1975, %v2643
        %v2716 = vadd.f32 %v1976, %v2645
        %v2717 = vadd.f32 %v1977, %v2647
        %v2718 = vadd.f32 %v1978, %v2649
        %v2719 = vadd.f32 %v1979, %v2653
        %v2720 = vadd.f32 %v1980, %v2655
        %v2721 = vadd.f32 %v1981, %v2657
        %v2722 = vadd.f32 %v1982, %v2659
        %v2723 = vadd.f32 %v1983, %v2663
        %v2724 = vadd.f32 %v1984, %v2665
        %v2725 = vadd.f32 %v1985, %v2667
        %v2726 = vadd.f32 %v1986, %v2669
        %v2727 = vadd.f32 %v1987, %v2673
        %v2728 = vadd.f32 %v1988, %v2675
        %v2729 = vadd.f32 %v1989, %v2677
        %v2730 = vadd.f32 %v1990, %v2679
        %v2731 = vadd.f32 %v1991, %v2683
        %v2732 = vadd.f32 %v1992, %v2685
        %v2733 = vadd.f32 %v1993, %v2687
        %v2734 = vadd.f32 %v1994, %v2689
        %v2735 = vadd.f32 %v1995, %v2693
        %v2736 = vadd.f32 %v1996, %v2695
        %v2737 = vadd.f32 %v1997, %v2697
        %v2738 = vadd.f32 %v1998, %v2699
        %v2739 = vadd.f32 %v1999, %v2703
        %v2740 = vadd.f32 %v2000, %v2705
        %v2741 = vadd.f32 %v2001, %v2707
        %v2742 = vadd.f32 %v2002, %v2709
        %v2743 = vsub.f32 0.0, %v2711
        %v2744 = vsub.f32 0.0, %v2712
        %v2745 = vsub.f32 0.0, %v2713
        %v2746 = vsub.f32 0.0, %v2714
        %v2747 = vsub.f32 0.0, %v2715
        %v2748 = vsub.f32 0.0, %v2716
        %v2749 = vsub.f32 0.0, %v2717
        %v2750 = vsub.f32 0.0, %v2718
        %v2751 = vsub.f32 0.0, %v2719
        %v2752 = vsub.f32 0.0, %v2720
        %v2753 = vsub.f32 0.0, %v2721
        %v2754 = vsub.f32 0.0, %v2722
        %v2755 = vsub.f32 0.0, %v2723
        %v2756 = vsub.f32 0.0, %v2724
        %v2757 = vsub.f32 0.0, %v2725
        %v2758 = vsub.f32 0.0, %v2726
        %v2759 = vsub.f32 0.0, %v2727
        %v2760 = vsub.f32 0.0, %v2728
        %v2761 = vsub.f32 0.0, %v2729
        %v2762 = vsub.f32 0.0, %v2730
        %v2763 = vsub.f32 0.0, %v2731
        %v2764 = vsub.f32 0.0, %v2732
        %v2765 = vsub.f32 0.0, %v2733
        %v2766 = vsub.f32 0.0, %v2734
        %v2767 = vsub.f32 0.0, %v2735
        %v2768 = vsub.f32 0.0, %v2736
        %v2769 = vsub.f32 0.0, %v2737
        %v2770 = vsub.f32 0.0, %v2738
        %v2771 = vsub.f32 0.0, %v2739
        %v2772 = vsub.f32 0.0, %v2740
        %v2773 = vsub.f32 0.0, %v2741
        %v2774 = vsub.f32 0.0, %v2742
        %v2775 = vmul.f32 %v2743, 1.442695
        %v2776 = vpow.pop %v2775
        %v2777 = vmul.f32 %v2744, 1.442695
        %v2778 = vpow.pop %v2777
        %v2779 = vmul.f32 %v2745, 1.442695
        %v2780 = vpow.pop %v2779
        %v2781 = vmul.f32 %v2746, 1.442695
        %v2782 = vpow.pop %v2781
        %v2783 = vmul.f32 %v2747, 1.442695
        %v2784 = vpow.pop %v2783
        %v2785 = vmul.f32 %v2748, 1.442695
        %v2786 = vpow.pop %v2785
        %v2787 = vmul.f32 %v2749, 1.442695
        %v2788 = vpow.pop %v2787
        %v2789 = vmul.f32 %v2750, 1.442695
        %v2790 = vpow.pop %v2789
        %v2791 = vmul.f32 %v2751, 1.442695
        %v2792 = vpow.pop %v2791
        %v2793 = vmul.f32 %v2752, 1.442695
        %v2794 = vpow.pop %v2793
        %v2795 = vmul.f32 %v2753, 1.442695
        %v2796 = vpow.pop %v2795
        %v2797 = vmul.f32 %v2754, 1.442695
        %v2798 = vpow.pop %v2797
        %v2799 = vmul.f32 %v2755, 1.442695
        %v2800 = vpow.pop %v2799
        %v2801 = vmul.f32 %v2756, 1.442695
        %v2802 = vpow.pop %v2801
        %v2803 = vmul.f32 %v2757, 1.442695
        %v2804 = vpow.pop %v2803
        %v2805 = vmul.f32 %v2758, 1.442695
        %v2806 = vpow.pop %v2805
        %v2807 = vmul.f32 %v2759, 1.442695
        %v2808 = vpow.pop %v2807
        %v2809 = vmul.f32 %v2760, 1.442695
        %v2810 = vpow.pop %v2809
        %v2811 = vmul.f32 %v2761, 1.442695
        %v2812 = vpow.pop %v2811
        %v2813 = vmul.f32 %v2762, 1.442695
        %v2814 = vpow.pop %v2813
        %v2815 = vmul.f32 %v2763, 1.442695
        %v2816 = vpow.pop %v2815
        %v2817 = vmul.f32 %v2764, 1.442695
        %v2818 = vpow.pop %v2817
        %v2819 = vmul.f32 %v2765, 1.442695
        %v2820 = vpow.pop %v2819
        %v2821 = vmul.f32 %v2766, 1.442695
        %v2822 = vpow.pop %v2821
        %v2823 = vmul.f32 %v2767, 1.442695
        %v2824 = vpow.pop %v2823
        %v2825 = vmul.f32 %v2768, 1.442695
        %v2826 = vpow.pop %v2825
        %v2827 = vmul.f32 %v2769, 1.442695
        %v2828 = vpow.pop %v2827
        %v2829 = vmul.f32 %v2770, 1.442695
        %v2830 = vpow.pop %v2829
        %v2831 = vmul.f32 %v2771, 1.442695
        %v2832 = vpow.pop %v2831
        %v2833 = vmul.f32 %v2772, 1.442695
        %v2834 = vpow.pop %v2833
        %v2835 = vmul.f32 %v2773, 1.442695
        %v2836 = vpow.pop %v2835
        %v2837 = vmul.f32 %v2774, 1.442695
        %v2838 = vpow.pop %v2837
        %v2839 = vadd.f32 %v2776, 1.0
        %v2840 = vadd.f32 %v2778, 1.0
        %v2841 = vadd.f32 %v2780, 1.0
        %v2842 = vadd.f32 %v2782, 1.0
        %v2843 = vadd.f32 %v2784, 1.0
        %v2844 = vadd.f32 %v2786, 1.0
        %v2845 = vadd.f32 %v2788, 1.0
        %v2846 = vadd.f32 %v2790, 1.0
        %v2847 = vadd.f32 %v2792, 1.0
        %v2848 = vadd.f32 %v2794, 1.0
        %v2849 = vadd.f32 %v2796, 1.0
        %v2850 = vadd.f32 %v2798, 1.0
        %v2851 = vadd.f32 %v2800, 1.0
        %v2852 = vadd.f32 %v2802, 1.0
        %v2853 = vadd.f32 %v2804, 1.0
        %v2854 = vadd.f32 %v2806, 1.0
        %v2855 = vadd.f32 %v2808, 1.0
        %v2856 = vadd.f32 %v2810, 1.0
        %v2857 = vadd.f32 %v2812, 1.0
        %v2858 = vadd.f32 %v2814, 1.0
        %v2859 = vadd.f32 %v2816, 1.0
        %v2860 = vadd.f32 %v2818, 1.0
        %v2861 = vadd.f32 %v2820, 1.0
        %v2862 = vadd.f32 %v2822, 1.0
        %v2863 = vadd.f32 %v2824, 1.0
        %v2864 = vadd.f32 %v2826, 1.0
        %v2865 = vadd.f32 %v2828, 1.0
        %v2866 = vadd.f32 %v2830, 1.0
        %v2867 = vadd.f32 %v2832, 1.0
        %v2868 = vadd.f32 %v2834, 1.0
        %v2869 = vadd.f32 %v2836, 1.0
        %v2870 = vadd.f32 %v2838, 1.0
        %v2871 = vrcp.pop %v2839
        %v2872 = vrcp.pop %v2840
        %v2873 = vrcp.pop %v2841
        %v2874 = vrcp.pop %v2842
        %v2875 = vrcp.pop %v2843
        %v2876 = vrcp.pop %v2844
        %v2877 = vrcp.pop %v2845
        %v2878 = vrcp.pop %v2846
        %v2879 = vrcp.pop %v2847
        %v2880 = vrcp.pop %v2848
        %v2881 = vrcp.pop %v2849
        %v2882 = vrcp.pop %v2850
        %v2883 = vrcp.pop %v2851
        %v2884 = vrcp.pop %v2852
        %v2885 = vrcp.pop %v2853
        %v2886 = vrcp.pop %v2854
        %v2887 = vrcp.pop %v2855
        %v2888 = vrcp.pop %v2856
        %v2889 = vrcp.pop %v2857
        %v2890 = vrcp.pop %v2858
        %v2891 = vrcp.pop %v2859
        %v2892 = vrcp.pop %v2860
        %v2893 = vrcp.pop %v2861
        %v2894 = vrcp.pop %v2862
        %v2895 = vrcp.pop %v2863
        %v2896 = vrcp.pop %v2864
        %v2897 = vrcp.pop %v2865
        %v2898 = vrcp.pop %v2866
        %v2899 = vrcp.pop %v2867
        %v2900 = vrcp.pop %v2868
        %v2901 = vrcp.pop %v2869
        %v2902 = vrcp.pop %v2870
        %v2903 = vmul.f32 %v2711, %v2871
        %v2904 = vmul.f32 %v2712, %v2872
        %v2905 = vmul.f32 %v2713, %v2873
        %v2906 = vmul.f32 %v2714, %v2874
        %v2907 = vmul.f32 %v2715, %v2875
        %v2908 = vmul.f32 %v2716, %v2876
        %v2909 = vmul.f32 %v2717, %v2877
        %v2910 = vmul.f32 %v2718, %v2878
        %v2911 = vmul.f32 %v2719, %v2879
        %v2912 = vmul.f32 %v2720, %v2880
        %v2913 = vmul.f32 %v2721, %v2881
        %v2914 = vmul.f32 %v2722, %v2882
        %v2915 = vmul.f32 %v2723, %v2883
        %v2916 = vmul.f32 %v2724, %v2884
        %v2917 = vmul.f32 %v2725, %v2885
        %v2918 = vmul.f32 %v2726, %v2886
        %v2919 = vmul.f32 %v2727, %v2887
        %v2920 = vmul.f32 %v2728, %v2888
        %v2921 = vmul.f32 %v2729, %v2889
        %v2922 = vmul.f32 %v2730, %v2890
        %v2923 = vmul.f32 %v2731, %v2891
        %v2924 = vmul.f32 %v2732, %v2892
        %v2925 = vmul.f32 %v2733, %v2893
        %v2926 = vmul.f32 %v2734, %v2894
        %v2927 = vmul.f32 %v2735, %v2895
        %v2928 = vmul.f32 %v2736, %v2896
        %v2929 = vmul.f32 %v2737, %v2897
        %v2930 = vmul.f32 %v2738, %v2898
        %v2931 = vmul.f32 %v2739, %v2899
        %v2932 = vmul.f32 %v2740, %v2900
        %v2933 = vmul.f32 %v2741, %v2901
        %v2934 = vmul.f32 %v2742, %v2902
        %v2935 = vpack.c.bf16 %v2905, %v2903
        %v2936 = vpack.c.bf16 %v2906, %v2904
        %v2937 = vpack.c.bf16 %v2909, %v2907
        %v2938 = vpack.c.bf16 %v2910, %v2908
        %v2939 = vpack.c.bf16 %v2913, %v2911
        %v2940 = vpack.c.bf16 %v2914, %v2912
        %v2941 = vpack.c.bf16 %v2917, %v2915
        %v2942 = vpack.c.bf16 %v2918, %v2916
        %v2943 = vpack.c.bf16 %v2921, %v2919
        %v2944 = vpack.c.bf16 %v2922, %v2920
        %v2945 = vpack.c.bf16 %v2925, %v2923
        %v2946 = vpack.c.bf16 %v2926, %v2924
        %v2947 = vpack.c.bf16 %v2929, %v2927
        %v2948 = vpack.c.bf16 %v2930, %v2928
        %v2949 = vpack.c.bf16 %v2933, %v2931
        %v2950 = vpack.c.bf16 %v2934, %v2932
        %s2951 = scalar_lea.vmem %s3, 128
        %v2952 = vld [vmem:[%s2951] sm:$0xf]
        %v2953 = vld [vmem:[%s2951 + $0x4] sm:$0xf]
        %v2954 = vld [vmem:[%s2951 + $0x8] sm:$0xf]
        %v2955 = vld [vmem:[%s2951 + $0xc] sm:$0xf]
        %v2956 = vld [vmem:[%s2951 + $0x10] sm:$0xf]
        %v2957 = vld [vmem:[%s2951 + $0x14] sm:$0xf]
        %v2958 = vld [vmem:[%s2951 + $0x18] sm:$0xf]
        %v2959 = vld [vmem:[%s2951 + $0x1c] sm:$0xf]
        %v2960 = vld [vmem:[%s2951 + $0x20] sm:$0xf]
        %v2961 = vld [vmem:[%s2951 + $0x24] sm:$0xf]
        %v2962 = vld [vmem:[%s2951 + $0x28] sm:$0xf]
        %v2963 = vld [vmem:[%s2951 + $0x2c] sm:$0xf]
        %v2964 = vld [vmem:[%s2951 + $0x30] sm:$0xf]
        %v2965 = vld [vmem:[%s2951 + $0x34] sm:$0xf]
        %v2966 = vld [vmem:[%s2951 + $0x38] sm:$0xf]
        %v2967 = vld [vmem:[%s2951 + $0x3c] sm:$0xf]
        %2968 = vset.pattern.permute.xlu0 5
        %2969 = vperm.xlu0 %2968, %v330
        %v2970 = vpop.permute.xlu0 %2969
        %2972 = vset.pattern.permute.xlu0 5
        %2973 = vperm.xlu0 %2972, %v331
        %v2974 = vpop.permute.xlu0 %2973
        %2976 = vset.pattern.permute.xlu0 5
        %2977 = vperm.xlu0 %2976, %v332
        %v2978 = vpop.permute.xlu0 %2977
        %2980 = vset.pattern.permute.xlu0 5
        %2981 = vperm.xlu0 %2980, %v333
        %v2982 = vpop.permute.xlu0 %2981
        %2984 = vset.pattern.permute.xlu0 5
        %2985 = vperm.xlu0 %2984, %v334
        %v2986 = vpop.permute.xlu0 %2985
        %2988 = vset.pattern.permute.xlu0 5
        %2989 = vperm.xlu0 %2988, %v335
        %v2990 = vpop.permute.xlu0 %2989
        %2992 = vset.pattern.permute.xlu0 5
        %2993 = vperm.xlu0 %2992, %v336
        %v2994 = vpop.permute.xlu0 %2993
        %2996 = vset.pattern.permute.xlu0 5
        %2997 = vperm.xlu0 %2996, %v337
        %v2998 = vpop.permute.xlu0 %2997
        %3000 = vset.pattern.permute.xlu0 5
        %3001 = vperm.xlu0 %3000, %v338
        %v3002 = vpop.permute.xlu0 %3001
        %3004 = vset.pattern.permute.xlu0 5
        %3005 = vperm.xlu0 %3004, %v339
        %v3006 = vpop.permute.xlu0 %3005
        %3008 = vset.pattern.permute.xlu0 5
        %3009 = vperm.xlu0 %3008, %v340
        %v3010 = vpop.permute.xlu0 %3009
        %3012 = vset.pattern.permute.xlu0 5
        %3013 = vperm.xlu0 %3012, %v341
        %v3014 = vpop.permute.xlu0 %3013
        %3016 = vset.pattern.permute.xlu0 5
        %3017 = vperm.xlu0 %3016, %v342
        %v3018 = vpop.permute.xlu0 %3017
        %3020 = vset.pattern.permute.xlu0 5
        %3021 = vperm.xlu0 %3020, %v343
        %v3022 = vpop.permute.xlu0 %3021
        %3024 = vset.pattern.permute.xlu0 5
        %3025 = vperm.xlu0 %3024, %v344
        %v3026 = vpop.permute.xlu0 %3025
        %3028 = vset.pattern.permute.xlu0 5
        %3029 = vperm.xlu0 %3028, %v345
        %v3030 = vpop.permute.xlu0 %3029
        %v3048 = vunpack.c.l.b16 %v2952
        %v3049 = vunpack.c.l.b16 %v2953
        %v3050 = vunpack.c.l.b16 %v2954
        %v3051 = vunpack.c.l.b16 %v2955
        %v3052 = vunpack.c.l.b16 %v2956
        %v3053 = vunpack.c.l.b16 %v2957
        %v3054 = vunpack.c.l.b16 %v2958
        %v3055 = vunpack.c.l.b16 %v2959
        %v3056 = vunpack.c.l.b16 %v2960
        %v3057 = vunpack.c.l.b16 %v2961
        %v3058 = vunpack.c.l.b16 %v2962
        %v3059 = vunpack.c.l.b16 %v2963
        %v3060 = vunpack.c.l.b16 %v2964
        %v3061 = vunpack.c.l.b16 %v2965
        %v3062 = vunpack.c.l.b16 %v2966
        %v3063 = vunpack.c.l.b16 %v2967
        %v3064 = vpack.c.b16 %v3049, %v3048
        %v3065 = vpack.c.b16 %v3051, %v3050
        %v3066 = vpack.c.b16 %v3053, %v3052
        %v3067 = vpack.c.b16 %v3055, %v3054
        %v3068 = vpack.c.b16 %v3057, %v3056
        %v3069 = vpack.c.b16 %v3059, %v3058
        %v3070 = vpack.c.b16 %v3061, %v3060
        %v3071 = vpack.c.b16 %v3063, %v3062
        %3080 = vmatprep.subr.bf16.mxu0 %v2936
        %3081 = vmatpush1.bf16.msra.mxu0 %v2935
        %3082 = vmatprep.subr.bf16.mxu0 %v2938
        %3083 = vmatpush1.bf16.msra.mxu0 %v2937
        %3084 = vmatprep.subr.bf16.mxu0 %v2940
        %3085 = vmatpush1.bf16.msra.mxu0 %v2939
        %3086 = vmatprep.subr.bf16.mxu0 %v2942
        %3087 = vmatpush1.bf16.msra.mxu0 %v2941
        %3088 = vmatprep.subr.bf16.mxu0 %v2944
        %3089 = vmatpush1.bf16.msra.mxu0 %v2943
        %3090 = vmatprep.subr.bf16.mxu0 %v2946
        %3091 = vmatpush1.bf16.msra.mxu0 %v2945
        %3092 = vmatprep.subr.bf16.mxu0 %v2948
        %3093 = vmatpush1.bf16.msra.mxu0 %v2947
        %3094 = vmatprep.subr.bf16.mxu0 %v2950
        %3095 = vmatpush1.bf16.msra.mxu0 %v2949
        %3096 = vmatprep.subr.bf16.mxu0 0
        %3097 = vmatpush1.bf16.msra.mxu0 0
        %3098 = vmatprep.subr.bf16.mxu0 0
        %3099 = vmatpush1.bf16.msra.mxu0 0
        %3100 = vmatprep.subr.bf16.mxu0 0
        %3101 = vmatpush1.bf16.msra.mxu0 0
        %3102 = vmatprep.subr.bf16.mxu0 0
        %3103 = vmatpush1.bf16.msra.mxu0 0
        %3104 = vmatprep.subr.bf16.mxu0 0
        %3105 = vmatpush1.bf16.msra.mxu0 0
        %3106 = vmatprep.subr.bf16.mxu0 0
        %3107 = vmatpush1.bf16.msra.mxu0 0
        %3108 = vmatprep.subr.bf16.mxu0 0
        %3109 = vmatpush1.bf16.msra.mxu0 0
        %3110 = vmatprep.subr.bf16.mxu0 0
        %3111 = vmatpush1.bf16.msra.mxu0 0
        %3112 = vmatprep.mubr.bf16.mxu0 0
        %3113 = vmatmul.mubr.bf16.gmra.mrb[0].mxu0 %v3064
        %v3114 = vpop.f32.mrb[0].mxu0
        %v3115 = vadd.f32 %v2970, %v3114
        %v3116 = vpop.f32.mrb[0].mxu0
        %v3117 = vadd.f32 %v2970, %v3116
        %v3118 = vpop.f32.mrb[0].mxu0
        %v3119 = vadd.f32 %v2974, %v3118
        %v3120 = vpop.f32.mrb[0].mxu0
        %v3121 = vadd.f32 %v2974, %v3120
        %3122 = vmatprep.mubr.bf16.mxu0 0
        %3123 = vmatmul.mubr.bf16.gmra.mrb[0].mxu0 %v3065
        %v3124 = vpop.f32.mrb[0].mxu0
        %v3125 = vadd.f32 %v2978, %v3124
        %v3126 = vpop.f32.mrb[0].mxu0
        %v3127 = vadd.f32 %v2978, %v3126
        %v3128 = vpop.f32.mrb[0].mxu0
        %v3129 = vadd.f32 %v2982, %v3128
        %v3130 = vpop.f32.mrb[0].mxu0
        %v3131 = vadd.f32 %v2982, %v3130
        %3132 = vmatprep.mubr.bf16.mxu0 0
        %3133 = vmatmul.mubr.bf16.gmra.mrb[0].mxu0 %v3066
        %v3134 = vpop.f32.mrb[0].mxu0
        %v3135 = vadd.f32 %v2986, %v3134
        %v3136 = vpop.f32.mrb[0].mxu0
        %v3137 = vadd.f32 %v2986, %v3136
        %v3138 = vpop.f32.mrb[0].mxu0
        %v3139 = vadd.f32 %v2990, %v3138
        %v3140 = vpop.f32.mrb[0].mxu0
        %v3141 = vadd.f32 %v2990, %v3140
        %3142 = vmatprep.mubr.bf16.mxu0 0
        %3143 = vmatmul.mubr.bf16.gmra.mrb[0].mxu0 %v3067
        %v3144 = vpop.f32.mrb[0].mxu0
        %v3145 = vadd.f32 %v2994, %v3144
        %v3146 = vpop.f32.mrb[0].mxu0
        %v3147 = vadd.f32 %v2994, %v3146
        %v3148 = vpop.f32.mrb[0].mxu0
        %v3149 = vadd.f32 %v2998, %v3148
        %v3150 = vpop.f32.mrb[0].mxu0
        %v3151 = vadd.f32 %v2998, %v3150
        %3152 = vmatprep.mubr.bf16.mxu0 0
        %3153 = vmatmul.mubr.bf16.gmra.mrb[0].mxu0 %v3068
        %v3154 = vpop.f32.mrb[0].mxu0
        %v3155 = vadd.f32 %v3002, %v3154
        %v3156 = vpop.f32.mrb[0].mxu0
        %v3157 = vadd.f32 %v3002, %v3156
        %v3158 = vpop.f32.mrb[0].mxu0
        %v3159 = vadd.f32 %v3006, %v3158
        %v3160 = vpop.f32.mrb[0].mxu0
        %v3161 = vadd.f32 %v3006, %v3160
        %3162 = vmatprep.mubr.bf16.mxu0 0
        %3163 = vmatmul.mubr.bf16.gmra.mrb[0].mxu0 %v3069
        %v3164 = vpop.f32.mrb[0].mxu0
        %v3165 = vadd.f32 %v3010, %v3164
        %v3166 = vpop.f32.mrb[0].mxu0
        %v3167 = vadd.f32 %v3010, %v3166
        %v3168 = vpop.f32.mrb[0].mxu0
        %v3169 = vadd.f32 %v3014, %v3168
        %v3170 = vpop.f32.mrb[0].mxu0
        %v3171 = vadd.f32 %v3014, %v3170
        %3172 = vmatprep.mubr.bf16.mxu0 0
        %3173 = vmatmul.mubr.bf16.gmra.mrb[0].mxu0 %v3070
        %v3174 = vpop.f32.mrb[0].mxu0
        %v3175 = vadd.f32 %v3018, %v3174
        %v3176 = vpop.f32.mrb[0].mxu0
        %v3177 = vadd.f32 %v3018, %v3176
        %v3178 = vpop.f32.mrb[0].mxu0
        %v3179 = vadd.f32 %v3022, %v3178
        %v3180 = vpop.f32.mrb[0].mxu0
        %v3181 = vadd.f32 %v3022, %v3180
        %3182 = vmatprep.mubr.bf16.mxu0 0
        %3183 = vmatmul.mubr.bf16.gmra.mrb[0].mxu0 %v3071
        %v3184 = vpop.f32.mrb[0].mxu0
        %v3185 = vadd.f32 %v3026, %v3184
        %v3186 = vpop.f32.mrb[0].mxu0
        %v3187 = vadd.f32 %v3026, %v3186
        %v3188 = vpop.f32.mrb[0].mxu0
        %v3189 = vadd.f32 %v3030, %v3188
        %v3190 = vpop.f32.mrb[0].mxu0
        %v3191 = vadd.f32 %v3030, %v3190
        %3192 = vdwg.mxu0
        %v3193 = vsub.f32 0.0, %v3115
        %v3194 = vsub.f32 0.0, %v3117
        %v3195 = vsub.f32 0.0, %v3119
        %v3196 = vsub.f32 0.0, %v3121
        %v3197 = vsub.f32 0.0, %v3125
        %v3198 = vsub.f32 0.0, %v3127
        %v3199 = vsub.f32 0.0, %v3129
        %v3200 = vsub.f32 0.0, %v3131
        %v3201 = vsub.f32 0.0, %v3135
        %v3202 = vsub.f32 0.0, %v3137
        %v3203 = vsub.f32 0.0, %v3139
        %v3204 = vsub.f32 0.0, %v3141
        %v3205 = vsub.f32 0.0, %v3145
        %v3206 = vsub.f32 0.0, %v3147
        %v3207 = vsub.f32 0.0, %v3149
        %v3208 = vsub.f32 0.0, %v3151
        %v3209 = vsub.f32 0.0, %v3155
        %v3210 = vsub.f32 0.0, %v3157
        %v3211 = vsub.f32 0.0, %v3159
        %v3212 = vsub.f32 0.0, %v3161
        %v3213 = vsub.f32 0.0, %v3165
        %v3214 = vsub.f32 0.0, %v3167
        %v3215 = vsub.f32 0.0, %v3169
        %v3216 = vsub.f32 0.0, %v3171
        %v3217 = vsub.f32 0.0, %v3175
        %v3218 = vsub.f32 0.0, %v3177
        %v3219 = vsub.f32 0.0, %v3179
        %v3220 = vsub.f32 0.0, %v3181
        %v3221 = vsub.f32 0.0, %v3185
        %v3222 = vsub.f32 0.0, %v3187
        %v3223 = vsub.f32 0.0, %v3189
        %v3224 = vsub.f32 0.0, %v3191
        %v3225 = vmul.f32 %v3193, 1.442695
        %v3226 = vpow.pop %v3225
        %v3227 = vmul.f32 %v3194, 1.442695
        %v3228 = vpow.pop %v3227
        %v3229 = vmul.f32 %v3195, 1.442695
        %v3230 = vpow.pop %v3229
        %v3231 = vmul.f32 %v3196, 1.442695
        %v3232 = vpow.pop %v3231
        %v3233 = vmul.f32 %v3197, 1.442695
        %v3234 = vpow.pop %v3233
        %v3235 = vmul.f32 %v3198, 1.442695
        %v3236 = vpow.pop %v3235
        %v3237 = vmul.f32 %v3199, 1.442695
        %v3238 = vpow.pop %v3237
        %v3239 = vmul.f32 %v3200, 1.442695
        %v3240 = vpow.pop %v3239
        %v3241 = vmul.f32 %v3201, 1.442695
        %v3242 = vpow.pop %v3241
        %v3243 = vmul.f32 %v3202, 1.442695
        %v3244 = vpow.pop %v3243
        %v3245 = vmul.f32 %v3203, 1.442695
        %v3246 = vpow.pop %v3245
        %v3247 = vmul.f32 %v3204, 1.442695
        %v3248 = vpow.pop %v3247
        %v3249 = vmul.f32 %v3205, 1.442695
        %v3250 = vpow.pop %v3249
        %v3251 = vmul.f32 %v3206, 1.442695
        %v3252 = vpow.pop %v3251
        %v3253 = vmul.f32 %v3207, 1.442695
        %v3254 = vpow.pop %v3253
        %v3255 = vmul.f32 %v3208, 1.442695
        %v3256 = vpow.pop %v3255
        %v3257 = vmul.f32 %v3209, 1.442695
        %v3258 = vpow.pop %v3257
        %v3259 = vmul.f32 %v3210, 1.442695
        %v3260 = vpow.pop %v3259
        %v3261 = vmul.f32 %v3211, 1.442695
        %v3262 = vpow.pop %v3261
        %v3263 = vmul.f32 %v3212, 1.442695
        %v3264 = vpow.pop %v3263
        %v3265 = vmul.f32 %v3213, 1.442695
        %v3266 = vpow.pop %v3265
        %v3267 = vmul.f32 %v3214, 1.442695
        %v3268 = vpow.pop %v3267
        %v3269 = vmul.f32 %v3215, 1.442695
        %v3270 = vpow.pop %v3269
        %v3271 = vmul.f32 %v3216, 1.442695
        %v3272 = vpow.pop %v3271
        %v3273 = vmul.f32 %v3217, 1.442695
        %v3274 = vpow.pop %v3273
        %v3275 = vmul.f32 %v3218, 1.442695
        %v3276 = vpow.pop %v3275
        %v3277 = vmul.f32 %v3219, 1.442695
        %v3278 = vpow.pop %v3277
        %v3279 = vmul.f32 %v3220, 1.442695
        %v3280 = vpow.pop %v3279
        %v3281 = vmul.f32 %v3221, 1.442695
        %v3282 = vpow.pop %v3281
        %v3283 = vmul.f32 %v3222, 1.442695
        %v3284 = vpow.pop %v3283
        %v3285 = vmul.f32 %v3223, 1.442695
        %v3286 = vpow.pop %v3285
        %v3287 = vmul.f32 %v3224, 1.442695
        %v3288 = vpow.pop %v3287
        %v3289 = vadd.f32 %v3226, 1.0
        %v3290 = vadd.f32 %v3228, 1.0
        %v3291 = vadd.f32 %v3230, 1.0
        %v3292 = vadd.f32 %v3232, 1.0
        %v3293 = vadd.f32 %v3234, 1.0
        %v3294 = vadd.f32 %v3236, 1.0
        %v3295 = vadd.f32 %v3238, 1.0
        %v3296 = vadd.f32 %v3240, 1.0
        %v3297 = vadd.f32 %v3242, 1.0
        %v3298 = vadd.f32 %v3244, 1.0
        %v3299 = vadd.f32 %v3246, 1.0
        %v3300 = vadd.f32 %v3248, 1.0
        %v3301 = vadd.f32 %v3250, 1.0
        %v3302 = vadd.f32 %v3252, 1.0
        %v3303 = vadd.f32 %v3254, 1.0
        %v3304 = vadd.f32 %v3256, 1.0
        %v3305 = vadd.f32 %v3258, 1.0
        %v3306 = vadd.f32 %v3260, 1.0
        %v3307 = vadd.f32 %v3262, 1.0
        %v3308 = vadd.f32 %v3264, 1.0
        %v3309 = vadd.f32 %v3266, 1.0
        %v3310 = vadd.f32 %v3268, 1.0
        %v3311 = vadd.f32 %v3270, 1.0
        %v3312 = vadd.f32 %v3272, 1.0
        %v3313 = vadd.f32 %v3274, 1.0
        %v3314 = vadd.f32 %v3276, 1.0
        %v3315 = vadd.f32 %v3278, 1.0
        %v3316 = vadd.f32 %v3280, 1.0
        %v3317 = vadd.f32 %v3282, 1.0
        %v3318 = vadd.f32 %v3284, 1.0
        %v3319 = vadd.f32 %v3286, 1.0
        %v3320 = vadd.f32 %v3288, 1.0
        %v3321 = vrcp.pop %v3289
        %v3322 = vrcp.pop %v3290
        %v3323 = vrcp.pop %v3291
        %v3324 = vrcp.pop %v3292
        %v3325 = vrcp.pop %v3293
        %v3326 = vrcp.pop %v3294
        %v3327 = vrcp.pop %v3295
        %v3328 = vrcp.pop %v3296
        %v3329 = vrcp.pop %v3297
        %v3330 = vrcp.pop %v3298
        %v3331 = vrcp.pop %v3299
        %v3332 = vrcp.pop %v3300
        %v3333 = vrcp.pop %v3301
        %v3334 = vrcp.pop %v3302
        %v3335 = vrcp.pop %v3303
        %v3336 = vrcp.pop %v3304
        %v3337 = vrcp.pop %v3305
        %v3338 = vrcp.pop %v3306
        %v3339 = vrcp.pop %v3307
        %v3340 = vrcp.pop %v3308
        %v3341 = vrcp.pop %v3309
        %v3342 = vrcp.pop %v3310
        %v3343 = vrcp.pop %v3311
        %v3344 = vrcp.pop %v3312
        %v3345 = vrcp.pop %v3313
        %v3346 = vrcp.pop %v3314
        %v3347 = vrcp.pop %v3315
        %v3348 = vrcp.pop %v3316
        %v3349 = vrcp.pop %v3317
        %v3350 = vrcp.pop %v3318
        %v3351 = vrcp.pop %v3319
        %v3352 = vrcp.pop %v3320
        %v3353 = vmul.f32 %v3115, %v3321
        %v3354 = vmul.f32 %v3117, %v3322
        %v3355 = vmul.f32 %v3119, %v3323
        %v3356 = vmul.f32 %v3121, %v3324
        %v3357 = vmul.f32 %v3125, %v3325
        %v3358 = vmul.f32 %v3127, %v3326
        %v3359 = vmul.f32 %v3129, %v3327
        %v3360 = vmul.f32 %v3131, %v3328
        %v3361 = vmul.f32 %v3135, %v3329
        %v3362 = vmul.f32 %v3137, %v3330
        %v3363 = vmul.f32 %v3139, %v3331
        %v3364 = vmul.f32 %v3141, %v3332
        %v3365 = vmul.f32 %v3145, %v3333
        %v3366 = vmul.f32 %v3147, %v3334
        %v3367 = vmul.f32 %v3149, %v3335
        %v3368 = vmul.f32 %v3151, %v3336
        %v3369 = vmul.f32 %v3155, %v3337
        %v3370 = vmul.f32 %v3157, %v3338
        %v3371 = vmul.f32 %v3159, %v3339
        %v3372 = vmul.f32 %v3161, %v3340
        %v3373 = vmul.f32 %v3165, %v3341
        %v3374 = vmul.f32 %v3167, %v3342
        %v3375 = vmul.f32 %v3169, %v3343
        %v3376 = vmul.f32 %v3171, %v3344
        %v3377 = vmul.f32 %v3175, %v3345
        %v3378 = vmul.f32 %v3177, %v3346
        %v3379 = vmul.f32 %v3179, %v3347
        %v3380 = vmul.f32 %v3181, %v3348
        %v3381 = vmul.f32 %v3185, %v3349
        %v3382 = vmul.f32 %v3187, %v3350
        %v3383 = vmul.f32 %v3189, %v3351
        %v3384 = vmul.f32 %v3191, %v3352
        %v3385 = vpack.c.bf16 %v3355, %v3353
        %v3386 = vpack.c.bf16 %v3356, %v3354
        %v3387 = vpack.c.bf16 %v3359, %v3357
        %v3388 = vpack.c.bf16 %v3360, %v3358
        %v3389 = vpack.c.bf16 %v3363, %v3361
        %v3390 = vpack.c.bf16 %v3364, %v3362
        %v3391 = vpack.c.bf16 %v3367, %v3365
        %v3392 = vpack.c.bf16 %v3368, %v3366
        %v3393 = vpack.c.bf16 %v3371, %v3369
        %v3394 = vpack.c.bf16 %v3372, %v3370
        %v3395 = vpack.c.bf16 %v3375, %v3373
        %v3396 = vpack.c.bf16 %v3376, %v3374
        %v3397 = vpack.c.bf16 %v3379, %v3377
        %v3398 = vpack.c.bf16 %v3380, %v3378
        %v3399 = vpack.c.bf16 %v3383, %v3381
        %v3400 = vpack.c.bf16 %v3384, %v3382
        %s3401 = scalar_lea.vmem [#allocation5], 128
        %v3402 = vld [vmem:[%s3401] sm:$0xf]
        %v3403 = vld [vmem:[%s3401 + $0x4] sm:$0xf]
        %v3404 = vld [vmem:[%s3401 + $0x8] sm:$0xf]
        %v3405 = vld [vmem:[%s3401 + $0xc] sm:$0xf]
        %v3406 = vld [vmem:[%s3401 + $0x10] sm:$0xf]
        %v3407 = vld [vmem:[%s3401 + $0x14] sm:$0xf]
        %v3408 = vld [vmem:[%s3401 + $0x18] sm:$0xf]
        %v3409 = vld [vmem:[%s3401 + $0x1c] sm:$0xf]
        %v3410 = vld [vmem:[%s3401 + $0x20] sm:$0xf]
        %v3411 = vld [vmem:[%s3401 + $0x24] sm:$0xf]
        %v3412 = vld [vmem:[%s3401 + $0x28] sm:$0xf]
        %v3413 = vld [vmem:[%s3401 + $0x2c] sm:$0xf]
        %v3414 = vld [vmem:[%s3401 + $0x30] sm:$0xf]
        %v3415 = vld [vmem:[%s3401 + $0x34] sm:$0xf]
        %v3416 = vld [vmem:[%s3401 + $0x38] sm:$0xf]
        %v3417 = vld [vmem:[%s3401 + $0x3c] sm:$0xf]
        %3418 = vset.pattern.permute.xlu0 6
        %3419 = vperm.xlu0 %3418, %v330
        %v3420 = vpop.permute.xlu0 %3419
        %3422 = vset.pattern.permute.xlu0 6
        %3423 = vperm.xlu0 %3422, %v331
        %v3424 = vpop.permute.xlu0 %3423
        %3426 = vset.pattern.permute.xlu0 6
        %3427 = vperm.xlu0 %3426, %v332
        %v3428 = vpop.permute.xlu0 %3427
        %3430 = vset.pattern.permute.xlu0 6
        %3431 = vperm.xlu0 %3430, %v333
        %v3432 = vpop.permute.xlu0 %3431
        %3434 = vset.pattern.permute.xlu0 6
        %3435 = vperm.xlu0 %3434, %v334
        %v3436 = vpop.permute.xlu0 %3435
        %3438 = vset.pattern.permute.xlu0 6
        %3439 = vperm.xlu0 %3438, %v335
        %v3440 = vpop.permute.xlu0 %3439
        %3442 = vset.pattern.permute.xlu0 6
        %3443 = vperm.xlu0 %3442, %v336
        %v3444 = vpop.permute.xlu0 %3443
        %3446 = vset.pattern.permute.xlu0 6
        %3447 = vperm.xlu0 %3446, %v337
        %v3448 = vpop.permute.xlu0 %3447
        %3450 = vset.pattern.permute.xlu0 6
        %3451 = vperm.xlu0 %3450, %v338
        %v3452 = vpop.permute.xlu0 %3451
        %3454 = vset.pattern.permute.xlu0 6
        %3455 = vperm.xlu0 %3454, %v339
        %v3456 = vpop.permute.xlu0 %3455
        %3458 = vset.pattern.permute.xlu0 6
        %3459 = vperm.xlu0 %3458, %v340
        %v3460 = vpop.permute.xlu0 %3459
        %3462 = vset.pattern.permute.xlu0 6
        %3463 = vperm.xlu0 %3462, %v341
        %v3464 = vpop.permute.xlu0 %3463
        %3466 = vset.pattern.permute.xlu0 6
        %3467 = vperm.xlu0 %3466, %v342
        %v3468 = vpop.permute.xlu0 %3467
        %3470 = vset.pattern.permute.xlu0 6
        %3471 = vperm.xlu0 %3470, %v343
        %v3472 = vpop.permute.xlu0 %3471
        %3474 = vset.pattern.permute.xlu0 6
        %3475 = vperm.xlu0 %3474, %v344
        %v3476 = vpop.permute.xlu0 %3475
        %3478 = vset.pattern.permute.xlu0 6
        %3479 = vperm.xlu0 %3478, %v345
        %v3480 = vpop.permute.xlu0 %3479
        %v3498 = vunpack.c.l.b16 %v3402
        %v3499 = vunpack.c.l.b16 %v3403
        %v3500 = vunpack.c.l.b16 %v3404
        %v3501 = vunpack.c.l.b16 %v3405
        %v3502 = vunpack.c.l.b16 %v3406
        %v3503 = vunpack.c.l.b16 %v3407
        %v3504 = vunpack.c.l.b16 %v3408
        %v3505 = vunpack.c.l.b16 %v3409
        %v3506 = vunpack.c.l.b16 %v3410
        %v3507 = vunpack.c.l.b16 %v3411
        %v3508 = vunpack.c.l.b16 %v3412
        %v3509 = vunpack.c.l.b16 %v3413
        %v3510 = vunpack.c.l.b16 %v3414
        %v3511 = vunpack.c.l.b16 %v3415
        %v3512 = vunpack.c.l.b16 %v3416
        %v3513 = vunpack.c.l.b16 %v3417
        %v3514 = vpack.c.b16 %v3499, %v3498
        %v3515 = vpack.c.b16 %v3501, %v3500
        %v3516 = vpack.c.b16 %v3503, %v3502
        %v3517 = vpack.c.b16 %v3505, %v3504
        %v3518 = vpack.c.b16 %v3507, %v3506
        %v3519 = vpack.c.b16 %v3509, %v3508
        %v3520 = vpack.c.b16 %v3511, %v3510
        %v3521 = vpack.c.b16 %v3513, %v3512
        %3530 = vmatprep.subr.bf16.mxu0 %v3386
        %3531 = vmatpush1.bf16.msra.mxu0 %v3385
        %3532 = vmatprep.subr.bf16.mxu0 %v3388
        %3533 = vmatpush1.bf16.msra.mxu0 %v3387
        %3534 = vmatprep.subr.bf16.mxu0 %v3390
        %3535 = vmatpush1.bf16.msra.mxu0 %v3389
        %3536 = vmatprep.subr.bf16.mxu0 %v3392
        %3537 = vmatpush1.bf16.msra.mxu0 %v3391
        %3538 = vmatprep.subr.bf16.mxu0 %v3394
        %3539 = vmatpush1.bf16.msra.mxu0 %v3393
        %3540 = vmatprep.subr.bf16.mxu0 %v3396
        %3541 = vmatpush1.bf16.msra.mxu0 %v3395
        %3542 = vmatprep.subr.bf16.mxu0 %v3398
        %3543 = vmatpush1.bf16.msra.mxu0 %v3397
        %3544 = vmatprep.subr.bf16.mxu0 %v3400
        %3545 = vmatpush1.bf16.msra.mxu0 %v3399
        %3546 = vmatprep.subr.bf16.mxu0 0
        %3547 = vmatpush1.bf16.msra.mxu0 0
        %3548 = vmatprep.subr.bf16.mxu0 0
        %3549 = vmatpush1.bf16.msra.mxu0 0
        %3550 = vmatprep.subr.bf16.mxu0 0
        %3551 = vmatpush1.bf16.msra.mxu0 0
        %3552 = vmatprep.subr.bf16.mxu0 0
        %3553 = vmatpush1.bf16.msra.mxu0 0
        %3554 = vmatprep.subr.bf16.mxu0 0
        %3555 = vmatpush1.bf16.msra.mxu0 0
        %3556 = vmatprep.subr.bf16.mxu0 0
        %3557 = vmatpush1.bf16.msra.mxu0 0
        %3558 = vmatprep.subr.bf16.mxu0 0
        %3559 = vmatpush1.bf16.msra.mxu0 0
        %3560 = vmatprep.subr.bf16.mxu0 0
        %3561 = vmatpush1.bf16.msra.mxu0 0
        %3562 = vmatprep.mubr.bf16.mxu0 0
        %3563 = vmatmul.mubr.bf16.gmra.mrb[0].mxu0 %v3514
        %v3564 = vpop.f32.mrb[0].mxu0
        %v3565 = vadd.f32 %v3420, %v3564
        %v3566 = vpop.f32.mrb[0].mxu0
        %v3567 = vadd.f32 %v3420, %v3566
        %v3568 = vpop.f32.mrb[0].mxu0
        %v3569 = vadd.f32 %v3424, %v3568
        %v3570 = vpop.f32.mrb[0].mxu0
        %v3571 = vadd.f32 %v3424, %v3570
        %3572 = vmatprep.mubr.bf16.mxu0 0
        %3573 = vmatmul.mubr.bf16.gmra.mrb[0].mxu0 %v3515
        %v3574 = vpop.f32.mrb[0].mxu0
        %v3575 = vadd.f32 %v3428, %v3574
        %v3576 = vpop.f32.mrb[0].mxu0
        %v3577 = vadd.f32 %v3428, %v3576
        %v3578 = vpop.f32.mrb[0].mxu0
        %v3579 = vadd.f32 %v3432, %v3578
        %v3580 = vpop.f32.mrb[0].mxu0
        %v3581 = vadd.f32 %v3432, %v3580
        %3582 = vmatprep.mubr.bf16.mxu0 0
        %3583 = vmatmul.mubr.bf16.gmra.mrb[0].mxu0 %v3516
        %v3584 = vpop.f32.mrb[0].mxu0
        %v3585 = vadd.f32 %v3436, %v3584
        %v3586 = vpop.f32.mrb[0].mxu0
        %v3587 = vadd.f32 %v3436, %v3586
        %v3588 = vpop.f32.mrb[0].mxu0
        %v3589 = vadd.f32 %v3440, %v3588
        %v3590 = vpop.f32.mrb[0].mxu0
        %v3591 = vadd.f32 %v3440, %v3590
        %3592 = vmatprep.mubr.bf16.mxu0 0
        %3593 = vmatmul.mubr.bf16.gmra.mrb[0].mxu0 %v3517
        %v3594 = vpop.f32.mrb[0].mxu0
        %v3595 = vadd.f32 %v3444, %v3594
        %v3596 = vpop.f32.mrb[0].mxu0
        %v3597 = vadd.f32 %v3444, %v3596
        %v3598 = vpop.f32.mrb[0].mxu0
        %v3599 = vadd.f32 %v3448, %v3598
        %v3600 = vpop.f32.mrb[0].mxu0
        %v3601 = vadd.f32 %v3448, %v3600
        %3602 = vmatprep.mubr.bf16.mxu0 0
        %3603 = vmatmul.mubr.bf16.gmra.mrb[0].mxu0 %v3518
        %v3604 = vpop.f32.mrb[0].mxu0
        %v3605 = vadd.f32 %v3452, %v3604
        %v3606 = vpop.f32.mrb[0].mxu0
        %v3607 = vadd.f32 %v3452, %v3606
        %v3608 = vpop.f32.mrb[0].mxu0
        %v3609 = vadd.f32 %v3456, %v3608
        %v3610 = vpop.f32.mrb[0].mxu0
        %v3611 = vadd.f32 %v3456, %v3610
        %3612 = vmatprep.mubr.bf16.mxu0 0
        %3613 = vmatmul.mubr.bf16.gmra.mrb[0].mxu0 %v3519
        %v3614 = vpop.f32.mrb[0].mxu0
        %v3615 = vadd.f32 %v3460, %v3614
        %v3616 = vpop.f32.mrb[0].mxu0
        %v3617 = vadd.f32 %v3460, %v3616
        %v3618 = vpop.f32.mrb[0].mxu0
        %v3619 = vadd.f32 %v3464, %v3618
        %v3620 = vpop.f32.mrb[0].mxu0
        %v3621 = vadd.f32 %v3464, %v3620
        %3622 = vmatprep.mubr.bf16.mxu0 0
        %3623 = vmatmul.mubr.bf16.gmra.mrb[0].mxu0 %v3520
        %v3624 = vpop.f32.mrb[0].mxu0
        %v3625 = vadd.f32 %v3468, %v3624
        %v3626 = vpop.f32.mrb[0].mxu0
        %v3627 = vadd.f32 %v3468, %v3626
        %v3628 = vpop.f32.mrb[0].mxu0
        %v3629 = vadd.f32 %v3472, %v3628
        %v3630 = vpop.f32.mrb[0].mxu0
        %v3631 = vadd.f32 %v3472, %v3630
        %3632 = vmatprep.mubr.bf16.mxu0 0
        %3633 = vmatmul.mubr.bf16.gmra.mrb[0].mxu0 %v3521
        %v3634 = vpop.f32.mrb[0].mxu0
        %v3635 = vadd.f32 %v3476, %v3634
        %v3636 = vpop.f32.mrb[0].mxu0
        %v3637 = vadd.f32 %v3476, %v3636
        %v3638 = vpop.f32.mrb[0].mxu0
        %v3639 = vadd.f32 %v3480, %v3638
        %v3640 = vpop.f32.mrb[0].mxu0
        %v3641 = vadd.f32 %v3480, %v3640
        %3642 = vdwg.mxu0
        %v3643 = vadd.f32 %v2903, %v3565
        %v3644 = vadd.f32 %v2904, %v3567
        %v3645 = vadd.f32 %v2905, %v3569
        %v3646 = vadd.f32 %v2906, %v3571
        %v3647 = vadd.f32 %v2907, %v3575
        %v3648 = vadd.f32 %v2908, %v3577
        %v3649 = vadd.f32 %v2909, %v3579
        %v3650 = vadd.f32 %v2910, %v3581
        %v3651 = vadd.f32 %v2911, %v3585
        %v3652 = vadd.f32 %v2912, %v3587
        %v3653 = vadd.f32 %v2913, %v3589
        %v3654 = vadd.f32 %v2914, %v3591
        %v3655 = vadd.f32 %v2915, %v3595
        %v3656 = vadd.f32 %v2916, %v3597
        %v3657 = vadd.f32 %v2917, %v3599
        %v3658 = vadd.f32 %v2918, %v3601
        %v3659 = vadd.f32 %v2919, %v3605
        %v3660 = vadd.f32 %v2920, %v3607
        %v3661 = vadd.f32 %v2921, %v3609
        %v3662 = vadd.f32 %v2922, %v3611
        %v3663 = vadd.f32 %v2923, %v3615
        %v3664 = vadd.f32 %v2924, %v3617
        %v3665 = vadd.f32 %v2925, %v3619
        %v3666 = vadd.f32 %v2926, %v3621
        %v3667 = vadd.f32 %v2927, %v3625
        %v3668 = vadd.f32 %v2928, %v3627
        %v3669 = vadd.f32 %v2929, %v3629
        %v3670 = vadd.f32 %v2930, %v3631
        %v3671 = vadd.f32 %v2931, %v3635
        %v3672 = vadd.f32 %v2932, %v3637
        %v3673 = vadd.f32 %v2933, %v3639
        %v3674 = vadd.f32 %v2934, %v3641
        %v3675 = vsub.f32 0.0, %v3643
        %v3676 = vsub.f32 0.0, %v3644
        %v3677 = vsub.f32 0.0, %v3645
        %v3678 = vsub.f32 0.0, %v3646
        %v3679 = vsub.f32 0.0, %v3647
        %v3680 = vsub.f32 0.0, %v3648
        %v3681 = vsub.f32 0.0, %v3649
        %v3682 = vsub.f32 0.0, %v3650
        %v3683 = vsub.f32 0.0, %v3651
        %v3684 = vsub.f32 0.0, %v3652
        %v3685 = vsub.f32 0.0, %v3653
        %v3686 = vsub.f32 0.0, %v3654
        %v3687 = vsub.f32 0.0, %v3655
        %v3688 = vsub.f32 0.0, %v3656
        %v3689 = vsub.f32 0.0, %v3657
        %v3690 = vsub.f32 0.0, %v3658
        %v3691 = vsub.f32 0.0, %v3659
        %v3692 = vsub.f32 0.0, %v3660
        %v3693 = vsub.f32 0.0, %v3661
        %v3694 = vsub.f32 0.0, %v3662
        %v3695 = vsub.f32 0.0, %v3663
        %v3696 = vsub.f32 0.0, %v3664
        %v3697 = vsub.f32 0.0, %v3665
        %v3698 = vsub.f32 0.0, %v3666
        %v3699 = vsub.f32 0.0, %v3667
        %v3700 = vsub.f32 0.0, %v3668
        %v3701 = vsub.f32 0.0, %v3669
        %v3702 = vsub.f32 0.0, %v3670
        %v3703 = vsub.f32 0.0, %v3671
        %v3704 = vsub.f32 0.0, %v3672
        %v3705 = vsub.f32 0.0, %v3673
        %v3706 = vsub.f32 0.0, %v3674
        %v3707 = vmul.f32 %v3675, 1.442695
        %v3708 = vpow.pop %v3707
        %v3709 = vmul.f32 %v3676, 1.442695
        %v3710 = vpow.pop %v3709
        %v3711 = vmul.f32 %v3677, 1.442695
        %v3712 = vpow.pop %v3711
        %v3713 = vmul.f32 %v3678, 1.442695
        %v3714 = vpow.pop %v3713
        %v3715 = vmul.f32 %v3679, 1.442695
        %v3716 = vpow.pop %v3715
        %v3717 = vmul.f32 %v3680, 1.442695
        %v3718 = vpow.pop %v3717
        %v3719 = vmul.f32 %v3681, 1.442695
        %v3720 = vpow.pop %v3719
        %v3721 = vmul.f32 %v3682, 1.442695
        %v3722 = vpow.pop %v3721
        %v3723 = vmul.f32 %v3683, 1.442695
        %v3724 = vpow.pop %v3723
        %v3725 = vmul.f32 %v3684, 1.442695
        %v3726 = vpow.pop %v3725
        %v3727 = vmul.f32 %v3685, 1.442695
        %v3728 = vpow.pop %v3727
        %v3729 = vmul.f32 %v3686, 1.442695
        %v3730 = vpow.pop %v3729
        %v3731 = vmul.f32 %v3687, 1.442695
        %v3732 = vpow.pop %v3731
        %v3733 = vmul.f32 %v3688, 1.442695
        %v3734 = vpow.pop %v3733
        %v3735 = vmul.f32 %v3689, 1.442695
        %v3736 = vpow.pop %v3735
        %v3737 = vmul.f32 %v3690, 1.442695
        %v3738 = vpow.pop %v3737
        %v3739 = vmul.f32 %v3691, 1.442695
        %v3740 = vpow.pop %v3739
        %v3741 = vmul.f32 %v3692, 1.442695
        %v3742 = vpow.pop %v3741
        %v3743 = vmul.f32 %v3693, 1.442695
        %v3744 = vpow.pop %v3743
        %v3745 = vmul.f32 %v3694, 1.442695
        %v3746 = vpow.pop %v3745
        %v3747 = vmul.f32 %v3695, 1.442695
        %v3748 = vpow.pop %v3747
        %v3749 = vmul.f32 %v3696, 1.442695
        %v3750 = vpow.pop %v3749
        %v3751 = vmul.f32 %v3697, 1.442695
        %v3752 = vpow.pop %v3751
        %v3753 = vmul.f32 %v3698, 1.442695
        %v3754 = vpow.pop %v3753
        %v3755 = vmul.f32 %v3699, 1.442695
        %v3756 = vpow.pop %v3755
        %v3757 = vmul.f32 %v3700, 1.442695
        %v3758 = vpow.pop %v3757
        %v3759 = vmul.f32 %v3701, 1.442695
        %v3760 = vpow.pop %v3759
        %v3761 = vmul.f32 %v3702, 1.442695
        %v3762 = vpow.pop %v3761
        %v3763 = vmul.f32 %v3703, 1.442695
        %v3764 = vpow.pop %v3763
        %v3765 = vmul.f32 %v3704, 1.442695
        %v3766 = vpow.pop %v3765
        %v3767 = vmul.f32 %v3705, 1.442695
        %v3768 = vpow.pop %v3767
        %v3769 = vmul.f32 %v3706, 1.442695
        %v3770 = vpow.pop %v3769
        %v3771 = vadd.f32 %v3708, 1.0
        %v3772 = vadd.f32 %v3710, 1.0
        %v3773 = vadd.f32 %v3712, 1.0
        %v3774 = vadd.f32 %v3714, 1.0
        %v3775 = vadd.f32 %v3716, 1.0
        %v3776 = vadd.f32 %v3718, 1.0
        %v3777 = vadd.f32 %v3720, 1.0
        %v3778 = vadd.f32 %v3722, 1.0
        %v3779 = vadd.f32 %v3724, 1.0
        %v3780 = vadd.f32 %v3726, 1.0
        %v3781 = vadd.f32 %v3728, 1.0
        %v3782 = vadd.f32 %v3730, 1.0
        %v3783 = vadd.f32 %v3732, 1.0
        %v3784 = vadd.f32 %v3734, 1.0
        %v3785 = vadd.f32 %v3736, 1.0
        %v3786 = vadd.f32 %v3738, 1.0
        %v3787 = vadd.f32 %v3740, 1.0
        %v3788 = vadd.f32 %v3742, 1.0
        %v3789 = vadd.f32 %v3744, 1.0
        %v3790 = vadd.f32 %v3746, 1.0
        %v3791 = vadd.f32 %v3748, 1.0
        %v3792 = vadd.f32 %v3750, 1.0
        %v3793 = vadd.f32 %v3752, 1.0
        %v3794 = vadd.f32 %v3754, 1.0
        %v3795 = vadd.f32 %v3756, 1.0
        %v3796 = vadd.f32 %v3758, 1.0
        %v3797 = vadd.f32 %v3760, 1.0
        %v3798 = vadd.f32 %v3762, 1.0
        %v3799 = vadd.f32 %v3764, 1.0
        %v3800 = vadd.f32 %v3766, 1.0
        %v3801 = vadd.f32 %v3768, 1.0
        %v3802 = vadd.f32 %v3770, 1.0
        %v3803 = vrcp.pop %v3771
        %v3804 = vrcp.pop %v3772
        %v3805 = vrcp.pop %v3773
        %v3806 = vrcp.pop %v3774
        %v3807 = vrcp.pop %v3775
        %v3808 = vrcp.pop %v3776
        %v3809 = vrcp.pop %v3777
        %v3810 = vrcp.pop %v3778
        %v3811 = vrcp.pop %v3779
        %v3812 = vrcp.pop %v3780
        %v3813 = vrcp.pop %v3781
        %v3814 = vrcp.pop %v3782
        %v3815 = vrcp.pop %v3783
        %v3816 = vrcp.pop %v3784
        %v3817 = vrcp.pop %v3785
        %v3818 = vrcp.pop %v3786
        %v3819 = vrcp.pop %v3787
        %v3820 = vrcp.pop %v3788
        %v3821 = vrcp.pop %v3789
        %v3822 = vrcp.pop %v3790
        %v3823 = vrcp.pop %v3791
        %v3824 = vrcp.pop %v3792
        %v3825 = vrcp.pop %v3793
        %v3826 = vrcp.pop %v3794
        %v3827 = vrcp.pop %v3795
        %v3828 = vrcp.pop %v3796
        %v3829 = vrcp.pop %v3797
        %v3830 = vrcp.pop %v3798
        %v3831 = vrcp.pop %v3799
        %v3832 = vrcp.pop %v3800
        %v3833 = vrcp.pop %v3801
        %v3834 = vrcp.pop %v3802
        %v3835 = vmul.f32 %v3643, %v3803
        %v3836 = vmul.f32 %v3644, %v3804
        %v3837 = vmul.f32 %v3645, %v3805
        %v3838 = vmul.f32 %v3646, %v3806
        %v3839 = vmul.f32 %v3647, %v3807
        %v3840 = vmul.f32 %v3648, %v3808
        %v3841 = vmul.f32 %v3649, %v3809
        %v3842 = vmul.f32 %v3650, %v3810
        %v3843 = vmul.f32 %v3651, %v3811
        %v3844 = vmul.f32 %v3652, %v3812
        %v3845 = vmul.f32 %v3653, %v3813
        %v3846 = vmul.f32 %v3654, %v3814
        %v3847 = vmul.f32 %v3655, %v3815
        %v3848 = vmul.f32 %v3656, %v3816
        %v3849 = vmul.f32 %v3657, %v3817
        %v3850 = vmul.f32 %v3658, %v3818
        %v3851 = vmul.f32 %v3659, %v3819
        %v3852 = vmul.f32 %v3660, %v3820
        %v3853 = vmul.f32 %v3661, %v3821
        %v3854 = vmul.f32 %v3662, %v3822
        %v3855 = vmul.f32 %v3663, %v3823
        %v3856 = vmul.f32 %v3664, %v3824
        %v3857 = vmul.f32 %v3665, %v3825
        %v3858 = vmul.f32 %v3666, %v3826
        %v3859 = vmul.f32 %v3667, %v3827
        %v3860 = vmul.f32 %v3668, %v3828
        %v3861 = vmul.f32 %v3669, %v3829
        %v3862 = vmul.f32 %v3670, %v3830
        %v3863 = vmul.f32 %v3671, %v3831
        %v3864 = vmul.f32 %v3672, %v3832
        %v3865 = vmul.f32 %v3673, %v3833
        %v3866 = vmul.f32 %v3674, %v3834
        %v3867 = vpack.c.bf16 %v3837, %v3835
        %v3868 = vpack.c.bf16 %v3838, %v3836
        %v3869 = vpack.c.bf16 %v3841, %v3839
        %v3870 = vpack.c.bf16 %v3842, %v3840
        %v3871 = vpack.c.bf16 %v3845, %v3843
        %v3872 = vpack.c.bf16 %v3846, %v3844
        %v3873 = vpack.c.bf16 %v3849, %v3847
        %v3874 = vpack.c.bf16 %v3850, %v3848
        %v3875 = vpack.c.bf16 %v3853, %v3851
        %v3876 = vpack.c.bf16 %v3854, %v3852
        %v3877 = vpack.c.bf16 %v3857, %v3855
        %v3878 = vpack.c.bf16 %v3858, %v3856
        %v3879 = vpack.c.bf16 %v3861, %v3859
        %v3880 = vpack.c.bf16 %v3862, %v3860
        %v3881 = vpack.c.bf16 %v3865, %v3863
        %v3882 = vpack.c.bf16 %v3866, %v3864
        %s3883 = scalar_lea.vmem %s3, 192
        %v3884 = vld [vmem:[%s3883] sm:$0xf]
        %v3885 = vld [vmem:[%s3883 + $0x4] sm:$0xf]
        %v3886 = vld [vmem:[%s3883 + $0x8] sm:$0xf]
        %v3887 = vld [vmem:[%s3883 + $0xc] sm:$0xf]
        %v3888 = vld [vmem:[%s3883 + $0x10] sm:$0xf]
        %v3889 = vld [vmem:[%s3883 + $0x14] sm:$0xf]
        %v3890 = vld [vmem:[%s3883 + $0x18] sm:$0xf]
        %v3891 = vld [vmem:[%s3883 + $0x1c] sm:$0xf]
        %v3892 = vld [vmem:[%s3883 + $0x20] sm:$0xf]
        %v3893 = vld [vmem:[%s3883 + $0x24] sm:$0xf]
        %v3894 = vld [vmem:[%s3883 + $0x28] sm:$0xf]
        %v3895 = vld [vmem:[%s3883 + $0x2c] sm:$0xf]
        %v3896 = vld [vmem:[%s3883 + $0x30] sm:$0xf]
        %v3897 = vld [vmem:[%s3883 + $0x34] sm:$0xf]
        %v3898 = vld [vmem:[%s3883 + $0x38] sm:$0xf]
        %v3899 = vld [vmem:[%s3883 + $0x3c] sm:$0xf]
        %3900 = vset.pattern.permute.xlu0 7
        %3901 = vperm.xlu0 %3900, %v330
        %v3902 = vpop.permute.xlu0 %3901
        %3904 = vset.pattern.permute.xlu0 7
        %3905 = vperm.xlu0 %3904, %v331
        %v3906 = vpop.permute.xlu0 %3905
        %3908 = vset.pattern.permute.xlu0 7
        %3909 = vperm.xlu0 %3908, %v332
        %v3910 = vpop.permute.xlu0 %3909
        %3912 = vset.pattern.permute.xlu0 7
        %3913 = vperm.xlu0 %3912, %v333
        %v3914 = vpop.permute.xlu0 %3913
        %3916 = vset.pattern.permute.xlu0 7
        %3917 = vperm.xlu0 %3916, %v334
        %v3918 = vpop.permute.xlu0 %3917
        %3920 = vset.pattern.permute.xlu0 7
        %3921 = vperm.xlu0 %3920, %v335
        %v3922 = vpop.permute.xlu0 %3921
        %3924 = vset.pattern.permute.xlu0 7
        %3925 = vperm.xlu0 %3924, %v336
        %v3926 = vpop.permute.xlu0 %3925
        %3928 = vset.pattern.permute.xlu0 7
        %3929 = vperm.xlu0 %3928, %v337
        %v3930 = vpop.permute.xlu0 %3929
        %3932 = vset.pattern.permute.xlu0 7
        %3933 = vperm.xlu0 %3932, %v338
        %v3934 = vpop.permute.xlu0 %3933
        %3936 = vset.pattern.permute.xlu0 7
        %3937 = vperm.xlu0 %3936, %v339
        %v3938 = vpop.permute.xlu0 %3937
        %3940 = vset.pattern.permute.xlu0 7
        %3941 = vperm.xlu0 %3940, %v340
        %v3942 = vpop.permute.xlu0 %3941
        %3944 = vset.pattern.permute.xlu0 7
        %3945 = vperm.xlu0 %3944, %v341
        %v3946 = vpop.permute.xlu0 %3945
        %3948 = vset.pattern.permute.xlu0 7
        %3949 = vperm.xlu0 %3948, %v342
        %v3950 = vpop.permute.xlu0 %3949
        %3952 = vset.pattern.permute.xlu0 7
        %3953 = vperm.xlu0 %3952, %v343
        %v3954 = vpop.permute.xlu0 %3953
        %3956 = vset.pattern.permute.xlu0 7
        %3957 = vperm.xlu0 %3956, %v344
        %v3958 = vpop.permute.xlu0 %3957
        %3960 = vset.pattern.permute.xlu0 7
        %3961 = vperm.xlu0 %3960, %v345
        %v3962 = vpop.permute.xlu0 %3961
        %v3980 = vunpack.c.l.b16 %v3884
        %v3981 = vunpack.c.l.b16 %v3885
        %v3982 = vunpack.c.l.b16 %v3886
        %v3983 = vunpack.c.l.b16 %v3887
        %v3984 = vunpack.c.l.b16 %v3888
        %v3985 = vunpack.c.l.b16 %v3889
        %v3986 = vunpack.c.l.b16 %v3890
        %v3987 = vunpack.c.l.b16 %v3891
        %v3988 = vunpack.c.l.b16 %v3892
        %v3989 = vunpack.c.l.b16 %v3893
        %v3990 = vunpack.c.l.b16 %v3894
        %v3991 = vunpack.c.l.b16 %v3895
        %v3992 = vunpack.c.l.b16 %v3896
        %v3993 = vunpack.c.l.b16 %v3897
        %v3994 = vunpack.c.l.b16 %v3898
        %v3995 = vunpack.c.l.b16 %v3899
        %v3996 = vpack.c.b16 %v3981, %v3980
        %v3997 = vpack.c.b16 %v3983, %v3982
        %v3998 = vpack.c.b16 %v3985, %v3984
        %v3999 = vpack.c.b16 %v3987, %v3986
        %v4000 = vpack.c.b16 %v3989, %v3988
        %v4001 = vpack.c.b16 %v3991, %v3990
        %v4002 = vpack.c.b16 %v3993, %v3992
        %v4003 = vpack.c.b16 %v3995, %v3994
        %4012 = vmatprep.subr.bf16.mxu0 %v3868
        %4013 = vmatpush1.bf16.msra.mxu0 %v3867
        %4014 = vmatprep.subr.bf16.mxu0 %v3870
        %4015 = vmatpush1.bf16.msra.mxu0 %v3869
        %4016 = vmatprep.subr.bf16.mxu0 %v3872
        %4017 = vmatpush1.bf16.msra.mxu0 %v3871
        %4018 = vmatprep.subr.bf16.mxu0 %v3874
        %4019 = vmatpush1.bf16.msra.mxu0 %v3873
        %4020 = vmatprep.subr.bf16.mxu0 %v3876
        %4021 = vmatpush1.bf16.msra.mxu0 %v3875
        %4022 = vmatprep.subr.bf16.mxu0 %v3878
        %4023 = vmatpush1.bf16.msra.mxu0 %v3877
        %4024 = vmatprep.subr.bf16.mxu0 %v3880
        %4025 = vmatpush1.bf16.msra.mxu0 %v3879
        %4026 = vmatprep.subr.bf16.mxu0 %v3882
        %4027 = vmatpush1.bf16.msra.mxu0 %v3881
        %4028 = vmatprep.subr.bf16.mxu0 0
        %4029 = vmatpush1.bf16.msra.mxu0 0
        %4030 = vmatprep.subr.bf16.mxu0 0
        %4031 = vmatpush1.bf16.msra.mxu0 0
        %4032 = vmatprep.subr.bf16.mxu0 0
        %4033 = vmatpush1.bf16.msra.mxu0 0
        %4034 = vmatprep.subr.bf16.mxu0 0
        %4035 = vmatpush1.bf16.msra.mxu0 0
        %4036 = vmatprep.subr.bf16.mxu0 0
        %4037 = vmatpush1.bf16.msra.mxu0 0
        %4038 = vmatprep.subr.bf16.mxu0 0
        %4039 = vmatpush1.bf16.msra.mxu0 0
        %4040 = vmatprep.subr.bf16.mxu0 0
        %4041 = vmatpush1.bf16.msra.mxu0 0
        %4042 = vmatprep.subr.bf16.mxu0 0
        %4043 = vmatpush1.bf16.msra.mxu0 0
        %4044 = vmatprep.mubr.bf16.mxu0 0
        %4045 = vmatmul.mubr.bf16.gmra.mrb[0].mxu0 %v3996
        %v4046 = vpop.f32.mrb[0].mxu0
        %v4047 = vadd.f32 %v3902, %v4046
        %v4048 = vpop.f32.mrb[0].mxu0
        %v4049 = vadd.f32 %v3902, %v4048
        %v4050 = vpop.f32.mrb[0].mxu0
        %v4051 = vadd.f32 %v3906, %v4050
        %v4052 = vpop.f32.mrb[0].mxu0
        %v4053 = vadd.f32 %v3906, %v4052
        %4054 = vmatprep.mubr.bf16.mxu0 0
        %4055 = vmatmul.mubr.bf16.gmra.mrb[0].mxu0 %v3997
        %v4056 = vpop.f32.mrb[0].mxu0
        %v4057 = vadd.f32 %v3910, %v4056
        %v4058 = vpop.f32.mrb[0].mxu0
        %v4059 = vadd.f32 %v3910, %v4058
        %v4060 = vpop.f32.mrb[0].mxu0
        %v4061 = vadd.f32 %v3914, %v4060
        %v4062 = vpop.f32.mrb[0].mxu0
        %v4063 = vadd.f32 %v3914, %v4062
        %4064 = vmatprep.mubr.bf16.mxu0 0
        %4065 = vmatmul.mubr.bf16.gmra.mrb[0].mxu0 %v3998
        %v4066 = vpop.f32.mrb[0].mxu0
        %v4067 = vadd.f32 %v3918, %v4066
        %v4068 = vpop.f32.mrb[0].mxu0
        %v4069 = vadd.f32 %v3918, %v4068
        %v4070 = vpop.f32.mrb[0].mxu0
        %v4071 = vadd.f32 %v3922, %v4070
        %v4072 = vpop.f32.mrb[0].mxu0
        %v4073 = vadd.f32 %v3922, %v4072
        %4074 = vmatprep.mubr.bf16.mxu0 0
        %4075 = vmatmul.mubr.bf16.gmra.mrb[0].mxu0 %v3999
        %v4076 = vpop.f32.mrb[0].mxu0
        %v4077 = vadd.f32 %v3926, %v4076
        %v4078 = vpop.f32.mrb[0].mxu0
        %v4079 = vadd.f32 %v3926, %v4078
        %v4080 = vpop.f32.mrb[0].mxu0
        %v4081 = vadd.f32 %v3930, %v4080
        %v4082 = vpop.f32.mrb[0].mxu0
        %v4083 = vadd.f32 %v3930, %v4082
        %4084 = vmatprep.mubr.bf16.mxu0 0
        %4085 = vmatmul.mubr.bf16.gmra.mrb[0].mxu0 %v4000
        %v4086 = vpop.f32.mrb[0].mxu0
        %v4087 = vadd.f32 %v3934, %v4086
        %v4088 = vpop.f32.mrb[0].mxu0
        %v4089 = vadd.f32 %v3934, %v4088
        %v4090 = vpop.f32.mrb[0].mxu0
        %v4091 = vadd.f32 %v3938, %v4090
        %v4092 = vpop.f32.mrb[0].mxu0
        %v4093 = vadd.f32 %v3938, %v4092
        %4094 = vmatprep.mubr.bf16.mxu0 0
        %4095 = vmatmul.mubr.bf16.gmra.mrb[0].mxu0 %v4001
        %v4096 = vpop.f32.mrb[0].mxu0
        %v4097 = vadd.f32 %v3942, %v4096
        %v4098 = vpop.f32.mrb[0].mxu0
        %v4099 = vadd.f32 %v3942, %v4098
        %v4100 = vpop.f32.mrb[0].mxu0
        %v4101 = vadd.f32 %v3946, %v4100
        %v4102 = vpop.f32.mrb[0].mxu0
        %v4103 = vadd.f32 %v3946, %v4102
        %4104 = vmatprep.mubr.bf16.mxu0 0
        %4105 = vmatmul.mubr.bf16.gmra.mrb[0].mxu0 %v4002
        %v4106 = vpop.f32.mrb[0].mxu0
        %v4107 = vadd.f32 %v3950, %v4106
        %v4108 = vpop.f32.mrb[0].mxu0
        %v4109 = vadd.f32 %v3950, %v4108
        %v4110 = vpop.f32.mrb[0].mxu0
        %v4111 = vadd.f32 %v3954, %v4110
        %v4112 = vpop.f32.mrb[0].mxu0
        %v4113 = vadd.f32 %v3954, %v4112
        %4114 = vmatprep.mubr.bf16.mxu0 0
        %4115 = vmatmul.mubr.bf16.gmra.mrb[0].mxu0 %v4003
        %v4116 = vpop.f32.mrb[0].mxu0
        %v4117 = vadd.f32 %v3958, %v4116
        %v4118 = vpop.f32.mrb[0].mxu0
        %v4119 = vadd.f32 %v3958, %v4118
        %v4120 = vpop.f32.mrb[0].mxu0
        %v4121 = vadd.f32 %v3962, %v4120
        %v4122 = vpop.f32.mrb[0].mxu0
        %v4123 = vadd.f32 %v3962, %v4122
        %4124 = vdwg.mxu0
        %v4125 = vsub.f32 0.0, %v4047
        %v4126 = vsub.f32 0.0, %v4049
        %v4127 = vsub.f32 0.0, %v4051
        %v4128 = vsub.f32 0.0, %v4053
        %v4129 = vsub.f32 0.0, %v4057
        %v4130 = vsub.f32 0.0, %v4059
        %v4131 = vsub.f32 0.0, %v4061
        %v4132 = vsub.f32 0.0, %v4063
        %v4133 = vsub.f32 0.0, %v4067
        %v4134 = vsub.f32 0.0, %v4069
        %v4135 = vsub.f32 0.0, %v4071
        %v4136 = vsub.f32 0.0, %v4073
        %v4137 = vsub.f32 0.0, %v4077
        %v4138 = vsub.f32 0.0, %v4079
        %v4139 = vsub.f32 0.0, %v4081
        %v4140 = vsub.f32 0.0, %v4083
        %v4141 = vsub.f32 0.0, %v4087
        %v4142 = vsub.f32 0.0, %v4089
        %v4143 = vsub.f32 0.0, %v4091
        %v4144 = vsub.f32 0.0, %v4093
        %v4145 = vsub.f32 0.0, %v4097
        %v4146 = vsub.f32 0.0, %v4099
        %v4147 = vsub.f32 0.0, %v4101
        %v4148 = vsub.f32 0.0, %v4103
        %v4149 = vsub.f32 0.0, %v4107
        %v4150 = vsub.f32 0.0, %v4109
        %v4151 = vsub.f32 0.0, %v4111
        %v4152 = vsub.f32 0.0, %v4113
        %v4153 = vsub.f32 0.0, %v4117
        %v4154 = vsub.f32 0.0, %v4119
        %v4155 = vsub.f32 0.0, %v4121
        %v4156 = vsub.f32 0.0, %v4123
        %v4157 = vmul.f32 %v4125, 1.442695
        %v4158 = vpow.pop %v4157
        %v4159 = vmul.f32 %v4126, 1.442695
        %v4160 = vpow.pop %v4159
        %v4161 = vmul.f32 %v4127, 1.442695
        %v4162 = vpow.pop %v4161
        %v4163 = vmul.f32 %v4128, 1.442695
        %v4164 = vpow.pop %v4163
        %v4165 = vmul.f32 %v4129, 1.442695
        %v4166 = vpow.pop %v4165
        %v4167 = vmul.f32 %v4130, 1.442695
        %v4168 = vpow.pop %v4167
        %v4169 = vmul.f32 %v4131, 1.442695
        %v4170 = vpow.pop %v4169
        %v4171 = vmul.f32 %v4132, 1.442695
        %v4172 = vpow.pop %v4171
        %v4173 = vmul.f32 %v4133, 1.442695
        %v4174 = vpow.pop %v4173
        %v4175 = vmul.f32 %v4134, 1.442695
        %v4176 = vpow.pop %v4175
        %v4177 = vmul.f32 %v4135, 1.442695
        %v4178 = vpow.pop %v4177
        %v4179 = vmul.f32 %v4136, 1.442695
        %v4180 = vpow.pop %v4179
        %v4181 = vmul.f32 %v4137, 1.442695
        %v4182 = vpow.pop %v4181
        %v4183 = vmul.f32 %v4138, 1.442695
        %v4184 = vpow.pop %v4183
        %v4185 = vmul.f32 %v4139, 1.442695
        %v4186 = vpow.pop %v4185
        %v4187 = vmul.f32 %v4140, 1.442695
        %v4188 = vpow.pop %v4187
        %v4189 = vmul.f32 %v4141, 1.442695
        %v4190 = vpow.pop %v4189
        %v4191 = vmul.f32 %v4142, 1.442695
        %v4192 = vpow.pop %v4191
        %v4193 = vmul.f32 %v4143, 1.442695
        %v4194 = vpow.pop %v4193
        %v4195 = vmul.f32 %v4144, 1.442695
        %v4196 = vpow.pop %v4195
        %v4197 = vmul.f32 %v4145, 1.442695
        %v4198 = vpow.pop %v4197
        %v4199 = vmul.f32 %v4146, 1.442695
        %v4200 = vpow.pop %v4199
        %v4201 = vmul.f32 %v4147, 1.442695
        %v4202 = vpow.pop %v4201
        %v4203 = vmul.f32 %v4148, 1.442695
        %v4204 = vpow.pop %v4203
        %v4205 = vmul.f32 %v4149, 1.442695
        %v4206 = vpow.pop %v4205
        %v4207 = vmul.f32 %v4150, 1.442695
        %v4208 = vpow.pop %v4207
        %v4209 = vmul.f32 %v4151, 1.442695
        %v4210 = vpow.pop %v4209
        %v4211 = vmul.f32 %v4152, 1.442695
        %v4212 = vpow.pop %v4211
        %v4213 = vmul.f32 %v4153, 1.442695
        %v4214 = vpow.pop %v4213
        %v4215 = vmul.f32 %v4154, 1.442695
        %v4216 = vpow.pop %v4215
        %v4217 = vmul.f32 %v4155, 1.442695
        %v4218 = vpow.pop %v4217
        %v4219 = vmul.f32 %v4156, 1.442695
        %v4220 = vpow.pop %v4219
        %v4221 = vadd.f32 %v4158, 1.0
        %v4222 = vadd.f32 %v4160, 1.0
        %v4223 = vadd.f32 %v4162, 1.0
        %v4224 = vadd.f32 %v4164, 1.0
        %v4225 = vadd.f32 %v4166, 1.0
        %v4226 = vadd.f32 %v4168, 1.0
        %v4227 = vadd.f32 %v4170, 1.0
        %v4228 = vadd.f32 %v4172, 1.0
        %v4229 = vadd.f32 %v4174, 1.0
        %v4230 = vadd.f32 %v4176, 1.0
        %v4231 = vadd.f32 %v4178, 1.0
        %v4232 = vadd.f32 %v4180, 1.0
        %v4233 = vadd.f32 %v4182, 1.0
        %v4234 = vadd.f32 %v4184, 1.0
        %v4235 = vadd.f32 %v4186, 1.0
        %v4236 = vadd.f32 %v4188, 1.0
        %v4237 = vadd.f32 %v4190, 1.0
        %v4238 = vadd.f32 %v4192, 1.0
        %v4239 = vadd.f32 %v4194, 1.0
        %v4240 = vadd.f32 %v4196, 1.0
        %v4241 = vadd.f32 %v4198, 1.0
        %v4242 = vadd.f32 %v4200, 1.0
        %v4243 = vadd.f32 %v4202, 1.0
        %v4244 = vadd.f32 %v4204, 1.0
        %v4245 = vadd.f32 %v4206, 1.0
        %v4246 = vadd.f32 %v4208, 1.0
        %v4247 = vadd.f32 %v4210, 1.0
        %v4248 = vadd.f32 %v4212, 1.0
        %v4249 = vadd.f32 %v4214, 1.0
        %v4250 = vadd.f32 %v4216, 1.0
        %v4251 = vadd.f32 %v4218, 1.0
        %v4252 = vadd.f32 %v4220, 1.0
        %v4253 = vrcp.pop %v4221
        %v4254 = vrcp.pop %v4222
        %v4255 = vrcp.pop %v4223
        %v4256 = vrcp.pop %v4224
        %v4257 = vrcp.pop %v4225
        %v4258 = vrcp.pop %v4226
        %v4259 = vrcp.pop %v4227
        %v4260 = vrcp.pop %v4228
        %v4261 = vrcp.pop %v4229
        %v4262 = vrcp.pop %v4230
        %v4263 = vrcp.pop %v4231
        %v4264 = vrcp.pop %v4232
        %v4265 = vrcp.pop %v4233
        %v4266 = vrcp.pop %v4234
        %v4267 = vrcp.pop %v4235
        %v4268 = vrcp.pop %v4236
        %v4269 = vrcp.pop %v4237
        %v4270 = vrcp.pop %v4238
        %v4271 = vrcp.pop %v4239
        %v4272 = vrcp.pop %v4240
        %v4273 = vrcp.pop %v4241
        %v4274 = vrcp.pop %v4242
        %v4275 = vrcp.pop %v4243
        %v4276 = vrcp.pop %v4244
        %v4277 = vrcp.pop %v4245
        %v4278 = vrcp.pop %v4246
        %v4279 = vrcp.pop %v4247
        %v4280 = vrcp.pop %v4248
        %v4281 = vrcp.pop %v4249
        %v4282 = vrcp.pop %v4250
        %v4283 = vrcp.pop %v4251
        %v4284 = vrcp.pop %v4252
        %v4285 = vmul.f32 %v4047, %v4253
        %v4286 = vmul.f32 %v4049, %v4254
        %v4287 = vmul.f32 %v4051, %v4255
        %v4288 = vmul.f32 %v4053, %v4256
        %v4289 = vmul.f32 %v4057, %v4257
        %v4290 = vmul.f32 %v4059, %v4258
        %v4291 = vmul.f32 %v4061, %v4259
        %v4292 = vmul.f32 %v4063, %v4260
        %v4293 = vmul.f32 %v4067, %v4261
        %v4294 = vmul.f32 %v4069, %v4262
        %v4295 = vmul.f32 %v4071, %v4263
        %v4296 = vmul.f32 %v4073, %v4264
        %v4297 = vmul.f32 %v4077, %v4265
        %v4298 = vmul.f32 %v4079, %v4266
        %v4299 = vmul.f32 %v4081, %v4267
        %v4300 = vmul.f32 %v4083, %v4268
        %v4301 = vmul.f32 %v4087, %v4269
        %v4302 = vmul.f32 %v4089, %v4270
        %v4303 = vmul.f32 %v4091, %v4271
        %v4304 = vmul.f32 %v4093, %v4272
        %v4305 = vmul.f32 %v4097, %v4273
        %v4306 = vmul.f32 %v4099, %v4274
        %v4307 = vmul.f32 %v4101, %v4275
        %v4308 = vmul.f32 %v4103, %v4276
        %v4309 = vmul.f32 %v4107, %v4277
        %v4310 = vmul.f32 %v4109, %v4278
        %v4311 = vmul.f32 %v4111, %v4279
        %v4312 = vmul.f32 %v4113, %v4280
        %v4313 = vmul.f32 %v4117, %v4281
        %v4314 = vmul.f32 %v4119, %v4282
        %v4315 = vmul.f32 %v4121, %v4283
        %v4316 = vmul.f32 %v4123, %v4284
        %v4317 = vpack.c.bf16 %v4287, %v4285
        %v4318 = vpack.c.bf16 %v4288, %v4286
        %v4319 = vpack.c.bf16 %v4291, %v4289
        %v4320 = vpack.c.bf16 %v4292, %v4290
        %v4321 = vpack.c.bf16 %v4295, %v4293
        %v4322 = vpack.c.bf16 %v4296, %v4294
        %v4323 = vpack.c.bf16 %v4299, %v4297
        %v4324 = vpack.c.bf16 %v4300, %v4298
        %v4325 = vpack.c.bf16 %v4303, %v4301
        %v4326 = vpack.c.bf16 %v4304, %v4302
        %v4327 = vpack.c.bf16 %v4307, %v4305
        %v4328 = vpack.c.bf16 %v4308, %v4306
        %v4329 = vpack.c.bf16 %v4311, %v4309
        %v4330 = vpack.c.bf16 %v4312, %v4310
        %v4331 = vpack.c.bf16 %v4315, %v4313
        %v4332 = vpack.c.bf16 %v4316, %v4314
        %s4333 = scalar_lea.vmem [#allocation5], 192
        %v4334 = vld [vmem:[%s4333] sm:$0xf]
        %v4335 = vld [vmem:[%s4333 + $0x4] sm:$0xf]
        %v4336 = vld [vmem:[%s4333 + $0x8] sm:$0xf]
        %v4337 = vld [vmem:[%s4333 + $0xc] sm:$0xf]
        %v4338 = vld [vmem:[%s4333 + $0x10] sm:$0xf]
        %v4339 = vld [vmem:[%s4333 + $0x14] sm:$0xf]
        %v4340 = vld [vmem:[%s4333 + $0x18] sm:$0xf]
        %v4341 = vld [vmem:[%s4333 + $0x1c] sm:$0xf]
        %v4342 = vld [vmem:[%s4333 + $0x20] sm:$0xf]
        %v4343 = vld [vmem:[%s4333 + $0x24] sm:$0xf]
        %v4344 = vld [vmem:[%s4333 + $0x28] sm:$0xf]
        %v4345 = vld [vmem:[%s4333 + $0x2c] sm:$0xf]
        %v4346 = vld [vmem:[%s4333 + $0x30] sm:$0xf]
        %v4347 = vld [vmem:[%s4333 + $0x34] sm:$0xf]
        %v4348 = vld [vmem:[%s4333 + $0x38] sm:$0xf]
        %v4349 = vld [vmem:[%s4333 + $0x3c] sm:$0xf]
        %4350 = vset.pattern.permute.xlu0 8
        %4351 = vperm.xlu0 %4350, %v330
        %v4352 = vpop.permute.xlu0 %4351
        %4354 = vset.pattern.permute.xlu0 8
        %4355 = vperm.xlu0 %4354, %v331
        %v4356 = vpop.permute.xlu0 %4355
        %4358 = vset.pattern.permute.xlu0 8
        %4359 = vperm.xlu0 %4358, %v332
        %v4360 = vpop.permute.xlu0 %4359
        %4362 = vset.pattern.permute.xlu0 8
        %4363 = vperm.xlu0 %4362, %v333
        %v4364 = vpop.permute.xlu0 %4363
        %4366 = vset.pattern.permute.xlu0 8
        %4367 = vperm.xlu0 %4366, %v334
        %v4368 = vpop.permute.xlu0 %4367
        %4370 = vset.pattern.permute.xlu0 8
        %4371 = vperm.xlu0 %4370, %v335
        %v4372 = vpop.permute.xlu0 %4371
        %4374 = vset.pattern.permute.xlu0 8
        %4375 = vperm.xlu0 %4374, %v336
        %v4376 = vpop.permute.xlu0 %4375
        %4378 = vset.pattern.permute.xlu0 8
        %4379 = vperm.xlu0 %4378, %v337
        %v4380 = vpop.permute.xlu0 %4379
        %4382 = vset.pattern.permute.xlu0 8
        %4383 = vperm.xlu0 %4382, %v338
        %v4384 = vpop.permute.xlu0 %4383
        %4386 = vset.pattern.permute.xlu0 8
        %4387 = vperm.xlu0 %4386, %v339
        %v4388 = vpop.permute.xlu0 %4387
        %4390 = vset.pattern.permute.xlu0 8
        %4391 = vperm.xlu0 %4390, %v340
        %v4392 = vpop.permute.xlu0 %4391
        %4394 = vset.pattern.permute.xlu0 8
        %4395 = vperm.xlu0 %4394, %v341
        %v4396 = vpop.permute.xlu0 %4395
        %4398 = vset.pattern.permute.xlu0 8
        %4399 = vperm.xlu0 %4398, %v342
        %v4400 = vpop.permute.xlu0 %4399
        %4402 = vset.pattern.permute.xlu0 8
        %4403 = vperm.xlu0 %4402, %v343
        %v4404 = vpop.permute.xlu0 %4403
        %4406 = vset.pattern.permute.xlu0 8
        %4407 = vperm.xlu0 %4406, %v344
        %v4408 = vpop.permute.xlu0 %4407
        %4410 = vset.pattern.permute.xlu0 8
        %4411 = vperm.xlu0 %4410, %v345
        %v4412 = vpop.permute.xlu0 %4411
        %v4430 = vunpack.c.l.b16 %v4334
        %v4431 = vunpack.c.l.b16 %v4335
        %v4432 = vunpack.c.l.b16 %v4336
        %v4433 = vunpack.c.l.b16 %v4337
        %v4434 = vunpack.c.l.b16 %v4338
        %v4435 = vunpack.c.l.b16 %v4339
        %v4436 = vunpack.c.l.b16 %v4340
        %v4437 = vunpack.c.l.b16 %v4341
        %v4438 = vunpack.c.l.b16 %v4342
        %v4439 = vunpack.c.l.b16 %v4343
        %v4440 = vunpack.c.l.b16 %v4344
        %v4441 = vunpack.c.l.b16 %v4345
        %v4442 = vunpack.c.l.b16 %v4346
        %v4443 = vunpack.c.l.b16 %v4347
        %v4444 = vunpack.c.l.b16 %v4348
        %v4445 = vunpack.c.l.b16 %v4349
        %v4446 = vpack.c.b16 %v4431, %v4430
        %v4447 = vpack.c.b16 %v4433, %v4432
        %v4448 = vpack.c.b16 %v4435, %v4434
        %v4449 = vpack.c.b16 %v4437, %v4436
        %v4450 = vpack.c.b16 %v4439, %v4438
        %v4451 = vpack.c.b16 %v4441, %v4440
        %v4452 = vpack.c.b16 %v4443, %v4442
        %v4453 = vpack.c.b16 %v4445, %v4444
        %4462 = vmatprep.subr.bf16.mxu0 %v4318
        %4463 = vmatpush1.bf16.msra.mxu0 %v4317
        %4464 = vmatprep.subr.bf16.mxu0 %v4320
        %4465 = vmatpush1.bf16.msra.mxu0 %v4319
        %4466 = vmatprep.subr.bf16.mxu0 %v4322
        %4467 = vmatpush1.bf16.msra.mxu0 %v4321
        %4468 = vmatprep.subr.bf16.mxu0 %v4324
        %4469 = vmatpush1.bf16.msra.mxu0 %v4323
        %4470 = vmatprep.subr.bf16.mxu0 %v4326
        %4471 = vmatpush1.bf16.msra.mxu0 %v4325
        %4472 = vmatprep.subr.bf16.mxu0 %v4328
        %4473 = vmatpush1.bf16.msra.mxu0 %v4327
        %4474 = vmatprep.subr.bf16.mxu0 %v4330
        %4475 = vmatpush1.bf16.msra.mxu0 %v4329
        %4476 = vmatprep.subr.bf16.mxu0 %v4332
        %4477 = vmatpush1.bf16.msra.mxu0 %v4331
        %4478 = vmatprep.subr.bf16.mxu0 0
        %4479 = vmatpush1.bf16.msra.mxu0 0
        %4480 = vmatprep.subr.bf16.mxu0 0
        %4481 = vmatpush1.bf16.msra.mxu0 0
        %4482 = vmatprep.subr.bf16.mxu0 0
        %4483 = vmatpush1.bf16.msra.mxu0 0
        %4484 = vmatprep.subr.bf16.mxu0 0
        %4485 = vmatpush1.bf16.msra.mxu0 0
        %4486 = vmatprep.subr.bf16.mxu0 0
        %4487 = vmatpush1.bf16.msra.mxu0 0
        %4488 = vmatprep.subr.bf16.mxu0 0
        %4489 = vmatpush1.bf16.msra.mxu0 0
        %4490 = vmatprep.subr.bf16.mxu0 0
        %4491 = vmatpush1.bf16.msra.mxu0 0
        %4492 = vmatprep.subr.bf16.mxu0 0
        %4493 = vmatpush1.bf16.msra.mxu0 0
        %4494 = vmatprep.mubr.bf16.mxu0 0
        %4495 = vmatmul.mubr.bf16.gmra.mrb[0].mxu0 %v4446
        %v4496 = vpop.f32.mrb[0].mxu0
        %v4497 = vadd.f32 %v4352, %v4496
        %v4498 = vpop.f32.mrb[0].mxu0
        %v4499 = vadd.f32 %v4352, %v4498
        %v4500 = vpop.f32.mrb[0].mxu0
        %v4501 = vadd.f32 %v4356, %v4500
        %v4502 = vpop.f32.mrb[0].mxu0
        %v4503 = vadd.f32 %v4356, %v4502
        %4504 = vmatprep.mubr.bf16.mxu0 0
        %4505 = vmatmul.mubr.bf16.gmra.mrb[0].mxu0 %v4447
        %v4506 = vpop.f32.mrb[0].mxu0
        %v4507 = vadd.f32 %v4360, %v4506
        %v4508 = vpop.f32.mrb[0].mxu0
        %v4509 = vadd.f32 %v4360, %v4508
        %v4510 = vpop.f32.mrb[0].mxu0
        %v4511 = vadd.f32 %v4364, %v4510
        %v4512 = vpop.f32.mrb[0].mxu0
        %v4513 = vadd.f32 %v4364, %v4512
        %4514 = vmatprep.mubr.bf16.mxu0 0
        %4515 = vmatmul.mubr.bf16.gmra.mrb[0].mxu0 %v4448
        %v4516 = vpop.f32.mrb[0].mxu0
        %v4517 = vadd.f32 %v4368, %v4516
        %v4518 = vpop.f32.mrb[0].mxu0
        %v4519 = vadd.f32 %v4368, %v4518
        %v4520 = vpop.f32.mrb[0].mxu0
        %v4521 = vadd.f32 %v4372, %v4520
        %v4522 = vpop.f32.mrb[0].mxu0
        %v4523 = vadd.f32 %v4372, %v4522
        %4524 = vmatprep.mubr.bf16.mxu0 0
        %4525 = vmatmul.mubr.bf16.gmra.mrb[0].mxu0 %v4449
        %v4526 = vpop.f32.mrb[0].mxu0
        %v4527 = vadd.f32 %v4376, %v4526
        %v4528 = vpop.f32.mrb[0].mxu0
        %v4529 = vadd.f32 %v4376, %v4528
        %v4530 = vpop.f32.mrb[0].mxu0
        %v4531 = vadd.f32 %v4380, %v4530
        %v4532 = vpop.f32.mrb[0].mxu0
        %v4533 = vadd.f32 %v4380, %v4532
        %4534 = vmatprep.mubr.bf16.mxu0 0
        %4535 = vmatmul.mubr.bf16.gmra.mrb[0].mxu0 %v4450
        %v4536 = vpop.f32.mrb[0].mxu0
        %v4537 = vadd.f32 %v4384, %v4536
        %v4538 = vpop.f32.mrb[0].mxu0
        %v4539 = vadd.f32 %v4384, %v4538
        %v4540 = vpop.f32.mrb[0].mxu0
        %v4541 = vadd.f32 %v4388, %v4540
        %v4542 = vpop.f32.mrb[0].mxu0
        %v4543 = vadd.f32 %v4388, %v4542
        %4544 = vmatprep.mubr.bf16.mxu0 0
        %4545 = vmatmul.mubr.bf16.gmra.mrb[0].mxu0 %v4451
        %v4546 = vpop.f32.mrb[0].mxu0
        %v4547 = vadd.f32 %v4392, %v4546
        %v4548 = vpop.f32.mrb[0].mxu0
        %v4549 = vadd.f32 %v4392, %v4548
        %v4550 = vpop.f32.mrb[0].mxu0
        %v4551 = vadd.f32 %v4396, %v4550
        %v4552 = vpop.f32.mrb[0].mxu0
        %v4553 = vadd.f32 %v4396, %v4552
        %4554 = vmatprep.mubr.bf16.mxu0 0
        %4555 = vmatmul.mubr.bf16.gmra.mrb[0].mxu0 %v4452
        %v4556 = vpop.f32.mrb[0].mxu0
        %v4557 = vadd.f32 %v4400, %v4556
        %v4558 = vpop.f32.mrb[0].mxu0
        %v4559 = vadd.f32 %v4400, %v4558
        %v4560 = vpop.f32.mrb[0].mxu0
        %v4561 = vadd.f32 %v4404, %v4560
        %v4562 = vpop.f32.mrb[0].mxu0
        %v4563 = vadd.f32 %v4404, %v4562
        %4564 = vmatprep.mubr.bf16.mxu0 0
        %4565 = vmatmul.mubr.bf16.gmra.mrb[0].mxu0 %v4453
        %v4566 = vpop.f32.mrb[0].mxu0
        %v4567 = vadd.f32 %v4408, %v4566
        %v4568 = vpop.f32.mrb[0].mxu0
        %v4569 = vadd.f32 %v4408, %v4568
        %v4570 = vpop.f32.mrb[0].mxu0
        %v4571 = vadd.f32 %v4412, %v4570
        %v4572 = vpop.f32.mrb[0].mxu0
        %v4573 = vadd.f32 %v4412, %v4572
        %4574 = vdwg.mxu0
        %v4575 = vadd.f32 %v3835, %v4497
        %v4576 = vadd.f32 %v3836, %v4499
        %v4577 = vadd.f32 %v3837, %v4501
        %v4578 = vadd.f32 %v3838, %v4503
        %v4579 = vadd.f32 %v3839, %v4507
        %v4580 = vadd.f32 %v3840, %v4509
        %v4581 = vadd.f32 %v3841, %v4511
        %v4582 = vadd.f32 %v3842, %v4513
        %v4583 = vadd.f32 %v3843, %v4517
        %v4584 = vadd.f32 %v3844, %v4519
        %v4585 = vadd.f32 %v3845, %v4521
        %v4586 = vadd.f32 %v3846, %v4523
        %v4587 = vadd.f32 %v3847, %v4527
        %v4588 = vadd.f32 %v3848, %v4529
        %v4589 = vadd.f32 %v3849, %v4531
        %v4590 = vadd.f32 %v3850, %v4533
        %v4591 = vadd.f32 %v3851, %v4537
        %v4592 = vadd.f32 %v3852, %v4539
        %v4593 = vadd.f32 %v3853, %v4541
        %v4594 = vadd.f32 %v3854, %v4543
        %v4595 = vadd.f32 %v3855, %v4547
        %v4596 = vadd.f32 %v3856, %v4549
        %v4597 = vadd.f32 %v3857, %v4551
        %v4598 = vadd.f32 %v3858, %v4553
        %v4599 = vadd.f32 %v3859, %v4557
        %v4600 = vadd.f32 %v3860, %v4559
        %v4601 = vadd.f32 %v3861, %v4561
        %v4602 = vadd.f32 %v3862, %v4563
        %v4603 = vadd.f32 %v3863, %v4567
        %v4604 = vadd.f32 %v3864, %v4569
        %v4605 = vadd.f32 %v3865, %v4571
        %v4606 = vadd.f32 %v3866, %v4573
        %v4607 = vsub.f32 0.0, %v4575
        %v4608 = vsub.f32 0.0, %v4576
        %v4609 = vsub.f32 0.0, %v4577
        %v4610 = vsub.f32 0.0, %v4578
        %v4611 = vsub.f32 0.0, %v4579
        %v4612 = vsub.f32 0.0, %v4580
        %v4613 = vsub.f32 0.0, %v4581
        %v4614 = vsub.f32 0.0, %v4582
        %v4615 = vsub.f32 0.0, %v4583
        %v4616 = vsub.f32 0.0, %v4584
        %v4617 = vsub.f32 0.0, %v4585
        %v4618 = vsub.f32 0.0, %v4586
        %v4619 = vsub.f32 0.0, %v4587
        %v4620 = vsub.f32 0.0, %v4588
        %v4621 = vsub.f32 0.0, %v4589
        %v4622 = vsub.f32 0.0, %v4590
        %v4623 = vsub.f32 0.0, %v4591
        %v4624 = vsub.f32 0.0, %v4592
        %v4625 = vsub.f32 0.0, %v4593
        %v4626 = vsub.f32 0.0, %v4594
        %v4627 = vsub.f32 0.0, %v4595
        %v4628 = vsub.f32 0.0, %v4596
        %v4629 = vsub.f32 0.0, %v4597
        %v4630 = vsub.f32 0.0, %v4598
        %v4631 = vsub.f32 0.0, %v4599
        %v4632 = vsub.f32 0.0, %v4600
        %v4633 = vsub.f32 0.0, %v4601
        %v4634 = vsub.f32 0.0, %v4602
        %v4635 = vsub.f32 0.0, %v4603
        %v4636 = vsub.f32 0.0, %v4604
        %v4637 = vsub.f32 0.0, %v4605
        %v4638 = vsub.f32 0.0, %v4606
        %v4639 = vmul.f32 %v4607, 1.442695
        %v4640 = vpow.pop %v4639
        %v4641 = vmul.f32 %v4608, 1.442695
        %v4642 = vpow.pop %v4641
        %v4643 = vmul.f32 %v4609, 1.442695
        %v4644 = vpow.pop %v4643
        %v4645 = vmul.f32 %v4610, 1.442695
        %v4646 = vpow.pop %v4645
        %v4647 = vmul.f32 %v4611, 1.442695
        %v4648 = vpow.pop %v4647
        %v4649 = vmul.f32 %v4612, 1.442695
        %v4650 = vpow.pop %v4649
        %v4651 = vmul.f32 %v4613, 1.442695
        %v4652 = vpow.pop %v4651
        %v4653 = vmul.f32 %v4614, 1.442695
        %v4654 = vpow.pop %v4653
        %v4655 = vmul.f32 %v4615, 1.442695
        %v4656 = vpow.pop %v4655
        %v4657 = vmul.f32 %v4616, 1.442695
        %v4658 = vpow.pop %v4657
        %v4659 = vmul.f32 %v4617, 1.442695
        %v4660 = vpow.pop %v4659
        %v4661 = vmul.f32 %v4618, 1.442695
        %v4662 = vpow.pop %v4661
        %v4663 = vmul.f32 %v4619, 1.442695
        %v4664 = vpow.pop %v4663
        %v4665 = vmul.f32 %v4620, 1.442695
        %v4666 = vpow.pop %v4665
        %v4667 = vmul.f32 %v4621, 1.442695
        %v4668 = vpow.pop %v4667
        %v4669 = vmul.f32 %v4622, 1.442695
        %v4670 = vpow.pop %v4669
        %v4671 = vmul.f32 %v4623, 1.442695
        %v4672 = vpow.pop %v4671
        %v4673 = vmul.f32 %v4624, 1.442695
        %v4674 = vpow.pop %v4673
        %v4675 = vmul.f32 %v4625, 1.442695
        %v4676 = vpow.pop %v4675
        %v4677 = vmul.f32 %v4626, 1.442695
        %v4678 = vpow.pop %v4677
        %v4679 = vmul.f32 %v4627, 1.442695
        %v4680 = vpow.pop %v4679
        %v4681 = vmul.f32 %v4628, 1.442695
        %v4682 = vpow.pop %v4681
        %v4683 = vmul.f32 %v4629, 1.442695
        %v4684 = vpow.pop %v4683
        %v4685 = vmul.f32 %v4630, 1.442695
        %v4686 = vpow.pop %v4685
        %v4687 = vmul.f32 %v4631, 1.442695
        %v4688 = vpow.pop %v4687
        %v4689 = vmul.f32 %v4632, 1.442695
        %v4690 = vpow.pop %v4689
        %v4691 = vmul.f32 %v4633, 1.442695
        %v4692 = vpow.pop %v4691
        %v4693 = vmul.f32 %v4634, 1.442695
        %v4694 = vpow.pop %v4693
        %v4695 = vmul.f32 %v4635, 1.442695
        %v4696 = vpow.pop %v4695
        %v4697 = vmul.f32 %v4636, 1.442695
        %v4698 = vpow.pop %v4697
        %v4699 = vmul.f32 %v4637, 1.442695
        %v4700 = vpow.pop %v4699
        %v4701 = vmul.f32 %v4638, 1.442695
        %v4702 = vpow.pop %v4701
        %v4703 = vadd.f32 %v4640, 1.0
        %v4704 = vadd.f32 %v4642, 1.0
        %v4705 = vadd.f32 %v4644, 1.0
        %v4706 = vadd.f32 %v4646, 1.0
        %v4707 = vadd.f32 %v4648, 1.0
        %v4708 = vadd.f32 %v4650, 1.0
        %v4709 = vadd.f32 %v4652, 1.0
        %v4710 = vadd.f32 %v4654, 1.0
        %v4711 = vadd.f32 %v4656, 1.0
        %v4712 = vadd.f32 %v4658, 1.0
        %v4713 = vadd.f32 %v4660, 1.0
        %v4714 = vadd.f32 %v4662, 1.0
        %v4715 = vadd.f32 %v4664, 1.0
        %v4716 = vadd.f32 %v4666, 1.0
        %v4717 = vadd.f32 %v4668, 1.0
        %v4718 = vadd.f32 %v4670, 1.0
        %v4719 = vadd.f32 %v4672, 1.0
        %v4720 = vadd.f32 %v4674, 1.0
        %v4721 = vadd.f32 %v4676, 1.0
        %v4722 = vadd.f32 %v4678, 1.0
        %v4723 = vadd.f32 %v4680, 1.0
        %v4724 = vadd.f32 %v4682, 1.0
        %v4725 = vadd.f32 %v4684, 1.0
        %v4726 = vadd.f32 %v4686, 1.0
        %v4727 = vadd.f32 %v4688, 1.0
        %v4728 = vadd.f32 %v4690, 1.0
        %v4729 = vadd.f32 %v4692, 1.0
        %v4730 = vadd.f32 %v4694, 1.0
        %v4731 = vadd.f32 %v4696, 1.0
        %v4732 = vadd.f32 %v4698, 1.0
        %v4733 = vadd.f32 %v4700, 1.0
        %v4734 = vadd.f32 %v4702, 1.0
        %v4735 = vrcp.pop %v4703
        %v4736 = vrcp.pop %v4704
        %v4737 = vrcp.pop %v4705
        %v4738 = vrcp.pop %v4706
        %v4739 = vrcp.pop %v4707
        %v4740 = vrcp.pop %v4708
        %v4741 = vrcp.pop %v4709
        %v4742 = vrcp.pop %v4710
        %v4743 = vrcp.pop %v4711
        %v4744 = vrcp.pop %v4712
        %v4745 = vrcp.pop %v4713
        %v4746 = vrcp.pop %v4714
        %v4747 = vrcp.pop %v4715
        %v4748 = vrcp.pop %v4716
        %v4749 = vrcp.pop %v4717
        %v4750 = vrcp.pop %v4718
        %v4751 = vrcp.pop %v4719
        %v4752 = vrcp.pop %v4720
        %v4753 = vrcp.pop %v4721
        %v4754 = vrcp.pop %v4722
        %v4755 = vrcp.pop %v4723
        %v4756 = vrcp.pop %v4724
        %v4757 = vrcp.pop %v4725
        %v4758 = vrcp.pop %v4726
        %v4759 = vrcp.pop %v4727
        %v4760 = vrcp.pop %v4728
        %v4761 = vrcp.pop %v4729
        %v4762 = vrcp.pop %v4730
        %v4763 = vrcp.pop %v4731
        %v4764 = vrcp.pop %v4732
        %v4765 = vrcp.pop %v4733
        %v4766 = vrcp.pop %v4734
        %v4767 = vmul.f32 %v4575, %v4735
        %v4768 = vmul.f32 %v4576, %v4736
        %v4769 = vmul.f32 %v4577, %v4737
        %v4770 = vmul.f32 %v4578, %v4738
        %v4771 = vmul.f32 %v4579, %v4739
        %v4772 = vmul.f32 %v4580, %v4740
        %v4773 = vmul.f32 %v4581, %v4741
        %v4774 = vmul.f32 %v4582, %v4742
        %v4775 = vmul.f32 %v4583, %v4743
        %v4776 = vmul.f32 %v4584, %v4744
        %v4777 = vmul.f32 %v4585, %v4745
        %v4778 = vmul.f32 %v4586, %v4746
        %v4779 = vmul.f32 %v4587, %v4747
        %v4780 = vmul.f32 %v4588, %v4748
        %v4781 = vmul.f32 %v4589, %v4749
        %v4782 = vmul.f32 %v4590, %v4750
        %v4783 = vmul.f32 %v4591, %v4751
        %v4784 = vmul.f32 %v4592, %v4752
        %v4785 = vmul.f32 %v4593, %v4753
        %v4786 = vmul.f32 %v4594, %v4754
        %v4787 = vmul.f32 %v4595, %v4755
        %v4788 = vmul.f32 %v4596, %v4756
        %v4789 = vmul.f32 %v4597, %v4757
        %v4790 = vmul.f32 %v4598, %v4758
        %v4791 = vmul.f32 %v4599, %v4759
        %v4792 = vmul.f32 %v4600, %v4760
        %v4793 = vmul.f32 %v4601, %v4761
        %v4794 = vmul.f32 %v4602, %v4762
        %v4795 = vmul.f32 %v4603, %v4763
        %v4796 = vmul.f32 %v4604, %v4764
        %v4797 = vmul.f32 %v4605, %v4765
        %v4798 = vmul.f32 %v4606, %v4766
        %v4799 = vld [vmem:[%s5] sm:$0x1]
        %v4800 = vpack.c.bf16 %v4769, %v4767
        %v4801 = vpack.c.bf16 %v4770, %v4768
        %v4802 = vpack.c.bf16 %v4773, %v4771
        %v4803 = vpack.c.bf16 %v4774, %v4772
        %v4804 = vpack.c.bf16 %v4777, %v4775
        %v4805 = vpack.c.bf16 %v4778, %v4776
        %v4806 = vpack.c.bf16 %v4781, %v4779
        %v4807 = vpack.c.bf16 %v4782, %v4780
        %v4808 = vpack.c.bf16 %v4785, %v4783
        %v4809 = vpack.c.bf16 %v4786, %v4784
        %v4810 = vpack.c.bf16 %v4789, %v4787
        %v4811 = vpack.c.bf16 %v4790, %v4788
        %v4812 = vpack.c.bf16 %v4793, %v4791
        %v4813 = vpack.c.bf16 %v4794, %v4792
        %v4814 = vpack.c.bf16 %v4797, %v4795
        %v4815 = vpack.c.bf16 %v4798, %v4796
        %v4816 = vld [vmem:[%s6] sm:$0x3]
        %4818 = vset.pattern.permute.xlu0 0
        %4819 = vperm.xlu0 %4818, %v4816
        %v4820 = vpop.permute.xlu0 %4819
        %4822 = vmatprep.subr.bf16.mxu0 %v4801
        %4823 = vmatpush1.bf16.msra.mxu0 %v4800
        %4824 = vmatprep.subr.bf16.mxu0 %v4803
        %4825 = vmatpush1.bf16.msra.mxu0 %v4802
        %4826 = vmatprep.subr.bf16.mxu0 %v4805
        %4827 = vmatpush1.bf16.msra.mxu0 %v4804
        %4828 = vmatprep.subr.bf16.mxu0 %v4807
        %4829 = vmatpush1.bf16.msra.mxu0 %v4806
        %4830 = vmatprep.subr.bf16.mxu0 %v4809
        %4831 = vmatpush1.bf16.msra.mxu0 %v4808
        %4832 = vmatprep.subr.bf16.mxu0 %v4811
        %4833 = vmatpush1.bf16.msra.mxu0 %v4810
        %4834 = vmatprep.subr.bf16.mxu0 %v4813
        %4835 = vmatpush1.bf16.msra.mxu0 %v4812
        %4836 = vmatprep.subr.bf16.mxu0 %v4815
        %4837 = vmatpush1.bf16.msra.mxu0 %v4814
        %4838 = vmatprep.subr.bf16.mxu0 0
        %4839 = vmatpush1.bf16.msra.mxu0 0
        %4840 = vmatprep.subr.bf16.mxu0 0
        %4841 = vmatpush1.bf16.msra.mxu0 0
        %4842 = vmatprep.subr.bf16.mxu0 0
        %4843 = vmatpush1.bf16.msra.mxu0 0
        %4844 = vmatprep.subr.bf16.mxu0 0
        %4845 = vmatpush1.bf16.msra.mxu0 0
        %4846 = vmatprep.subr.bf16.mxu0 0
        %4847 = vmatpush1.bf16.msra.mxu0 0
        %4848 = vmatprep.subr.bf16.mxu0 0
        %4849 = vmatpush1.bf16.msra.mxu0 0
        %4850 = vmatprep.subr.bf16.mxu0 0
        %4851 = vmatpush1.bf16.msra.mxu0 0
        %4852 = vmatprep.subr.bf16.mxu0 0
        %4853 = vmatpush1.bf16.msra.mxu0 0
        %4854 = vmatprep.mubr.bf16.mxu0 0
        %4855 = vmatmul.mubr.bf16.gmra.mrb[0].mxu0 %v4799
        %v4856 = vpop.f32.mrb[0].mxu0
        %v4857 = vadd.f32 %v4820, %v4856
        %v4858 = vpop.f32.mrb[0].mxu0
        %v4859 = vadd.f32 %v4820, %v4858
        %v4860 = vpop.f32.mrb[0].mxu0
        %v4861 = vpop.f32.mrb[0].mxu0
        %4862 = vdwg.mxu0
        %v4865 = vcombine.low %v4857, %v4859
        %v4867 = vunpack.c.l.s4 1983009808
        %v4868 = vunpack.c.0.s8 %v4867
        %v4869 = vlaneseq
        %v4870 = vshrl.u32 %v4869, 7
        %v4871 = vsub.s32 %v4868, %v4870
        %v4872 = vrot.slane %v4865, %v4871
        %4874 = vst [vmem:[%s309] sm:$0xf] %v4872
        %s4875 = sand.u32 %s185, 1
        %s4876 = scalar_lea.sflag [#allocation4], %s4875
        %s4877 = sand.u32 %s185, 1
        %s4878 = smul.addr %s4877, 4
        %s4879 = scalar_lea.vmem [#allocation7], %s4878
        // Predicated region
        $region57: #{tpu_custom_call.1} parent=47 // pred_check
          %p4880 = pneg %p195
        $region58: #{tpu_custom_call.1} parent=47 // pred_check_branch
          %4882 = sbr.rel (%p4880) target = $region60
        $region59: #{tpu_custom_call.1} parent=47 // pred_region
          %s4883 = smul.u32 2, %s25
          %s4885 = ssub.s32 64, 64
          %4886 = vsyncadd %s4876, %s4885
          %s4887 = smul.addr %s4883, 32
          %s4888 = scalar_lea.hbm %s7, %s4887
          %s4890 = sshll.u32 %s4879, 4
          %s4891 = int_to_ptr.vmem [resolvable:$true] %s4890
          %4893 = dma.vmem_to_hbm [thread:$0]  %s4891, 64, %s4888, %s4876
        $region60: #{tpu_custom_call.1} parent=47 // pred_fallthru
          _
      $region48: #{tpu_custom_call.1} parent=5 // pred_fallthru
        _
      %p4894 = scmp.le.s32.totalorder 2, %s20
      // Predicated region
      $region61: #{tpu_custom_call.1} parent=5 // pred_check
        %p4895 = pneg %p4894
      $region62: #{tpu_custom_call.1} parent=5 // pred_check_branch
        %4897 = sbr.rel (%p4895) target = $region64
      $region63: #{tpu_custom_call.1} parent=5 // pred_region
        %s4898 = ssub.s32 %s20, 2
        // Predicated region
        $region65: #{tpu_custom_call.1} parent=63 // pred_check
          %p4899 = pneg %p201
        $region66: #{tpu_custom_call.1} parent=63 // pred_check_branch
          %4901 = sbr.rel (%p4899) target = $region68
        $region67: #{tpu_custom_call.1} parent=63 // pred_region
          %s4902 = sand.u32 %s186, 1
          %s4903 = scalar_lea.sflag [#allocation4], %s4902
          %s4904 = sand.u32 %s186, 1
          %s4905 = smul.addr %s4904, 4
          %s4906 = scalar_lea.vmem [#allocation7], %s4905
          %4907 = dma.done %s4903, 64
        $region68: #{tpu_custom_call.1} parent=63 // pred_fallthru
          _
      $region64: #{tpu_custom_call.1} parent=5 // pred_fallthru
        _
    $region6: #{tpu_custom_call.1} parent=1 // loop_footer
      %s24 = sadd.s32 1, %s20
    $region7: #{tpu_custom_call.1} parent=1 // loop_footer_branch
      %19 = sbr.rel target = $region3
    $region8: #{tpu_custom_call.1} parent=1 // loop_exit
      _
    %4908 = vsyncpa [#allocation3], 1
    %s4909 = scalar_lea.sflag [#allocation3], 1
    %4910 = vsyncpa %s4909, 1
    %4911 = vsyncpa [#allocation6], 1
    %4912 = vsyncpa [#allocation4], 1
    %s4913 = scalar_lea.sflag [#allocation4], 1
    %4914 = vsyncpa %s4913, 1

</llo_original>
